<compile_context>
chip_gen: v7x
topology: tpu7x:2x2x1
jax: 0.10.0
libtpu: 0.0.40
codegen_flags: <defaults>
</compile_context>

<pallas_src>
import functools

import jax
import jax.numpy as jnp
from jax import lax
from jax.experimental import pallas as pl
from jax.experimental.pallas import tpu as pltpu

LN_EPS = 0.1          # nn.LayerNorm(hidden_dim, eps=0.1)
L2_EPS = 1e-12        # F.normalize default eps

# aux row layout (packed small params, shape [16, H], row 15 = zero pad):
#   row 0      : b1
#   rows 1..4  : b_hid (fc2..fc5)
#   rows 5..9  : gamma (ln1..ln5)
#   rows 10..14: beta  (ln1..ln5)


def _round_up(a, m):
    return ((a + m - 1) // m) * m


def _swish(v):
    # x * sigmoid(x), with sigmoid(v) = 0.5*(1 + tanh(v/2)) exactly
    # (one EUP transcendental instead of exp + reciprocal).
    return v * (0.5 * (jnp.tanh(0.5 * v) + 1.0))


def _layernorm(h, gamma, beta, eps):
    # One-pass stats: E[h], E[h^2]; fold gamma into the rsqrt scale.
    n = h.shape[-1]
    s1 = jnp.sum(h, axis=-1, keepdims=True)
    s2 = jnp.sum(h * h, axis=-1, keepdims=True)
    mean = s1 * (1.0 / n)
    var = s2 * (1.0 / n) - mean * mean          # biased, like torch
    scale = gamma * lax.rsqrt(var + eps)
    return (h - mean) * scale + beta


# ----------------------------------------------------------------------------
# Kernel
# ----------------------------------------------------------------------------
def encoder_kernel(
    x_ref,        # [TB, TK]     f32   (current batch/K tile of x)
    w1_ref,       # [TK, H]      bf16  (current K tile of fc1 weight)
    whid_ref,     # [4, H, H]    bf16  (fc2..fc5)
    aux_ref,      # [16, H]      f32   (packed b1/b_hid/gamma/beta)
    whead_ref,    # [H, L2p]     bf16  (fc_mu || fc_logvar, zero-padded cols)
    bhead_ref,    # [1, L2p]     f32
    out_ref,      # [TB, L2p]    f32   (mu || logvar, lane-dense)
    acc_ref,      # [TB, H]      f32   scratch: fc1 partial accumulator
    sq_ref,       # [TB, 128]    f32   scratch: lane-folded sum(x^2) accum
):
    k = pl.program_id(1)
    nk = pl.num_programs(1)

    @pl.when(k == 0)
    def _():
        acc_ref[...] = jnp.zeros_like(acc_ref)
        sq_ref[...] = jnp.zeros_like(sq_ref)

    xk = x_ref[...]

    # Fold the elementwise square into 128 lanes with pure VALU adds; the one
    # cross-lane (XLU) reduce happens once in the epilogue, keeping the hot
    # HBM-streaming loop free of XLU work.
    xk2 = xk * xk
    sq = sq_ref[...]
    tk_cols = xk.shape[1]
    for c in range(tk_cols // 128):
        sq = sq + xk2[:, c * 128:(c + 1) * 128]
    sq_ref[...] = sq

    acc_ref[...] += jnp.dot(xk.astype(jnp.bfloat16), w1_ref[...],
                            preferred_element_type=jnp.float32)

    @pl.when(k == nk - 1)
    def _():
        # F.normalize commutes with the matmul: (x/||x||) @ W == (x @ W)/||x||.
        sumsq = jnp.sum(sq_ref[...], axis=-1, keepdims=True)
        inv = jnp.where(sumsq > L2_EPS * L2_EPS, lax.rsqrt(sumsq), 1.0 / L2_EPS)

        # TODO(synk): training-mode dropout (Bernoulli mask via pltpu.prng_*)
        # not implemented; eval semantics (identity) only.

        b1 = aux_ref[0:1, :]
        pre = acc_ref[...] * inv + b1
        h = _layernorm(_swish(pre), aux_ref[5:6, :], aux_ref[10:11, :], LN_EPS)

        # Residual dense stack: each block adds the sum of all previous h's.
        res = h
        for i in range(4):  # fc2..fc5 / ln2..ln5 (unrolled)
            pre = (
                jnp.dot(h.astype(jnp.bfloat16), whid_ref[i, :, :],
                        preferred_element_type=jnp.float32)
                + aux_ref[i + 1:i + 2, :]
                + res
            )
            h = _layernorm(_swish(pre),
                           aux_ref[6 + i:7 + i, :],
                           aux_ref[11 + i:12 + i, :],
                           LN_EPS)
            res = res + h

        # Fused mu/logvar head: one lane-dense [TB, L2p] store.
        head = jnp.dot(h.astype(jnp.bfloat16), whead_ref[...],
                       preferred_element_type=jnp.float32) + bhead_ref[...]
        out_ref[...] = head.astype(out_ref.dtype)


# ----------------------------------------------------------------------------
# Tile / VMEM heuristics
# ----------------------------------------------------------------------------
def _vmem_budget_bytes():
    cap = 64 * 1024 * 1024            # conservative fallback (v7x physical)
    try:
        info = pltpu.get_tpu_info()
        cap = int(getattr(info, "vmem_capacity_bytes", cap) or cap)
    except Exception:
        pass
    # ~25% headroom for compiler scratch / double buffers; cap at 100 MiB.
    return min(int(0.75 * cap), 100 * 1024 * 1024)


def _num_tensorcores_per_chip():
    try:
        kind = jax.devices()[0].device_kind.lower()
        if "v7" in kind:
            return 2
    except Exception:
        pass
    return 1


def _pick_tk(D, limit):
    """Largest multiple of 128 that divides D and is <= limit (D % 128 == 0)."""
    limit = max(128, min(limit, D))
    best, t = 128, 128
    while t <= limit:
        if D % t == 0:
            best = t
        t += 128
    return best


def _vmem_usage_bytes(tb, tk, H, L2p):
    use = 2 * tb * tk * 4              # x tile (f32), double-buffered
    use += 2 * tk * H * 2              # w1 tile (bf16), double-buffered
    use += 4 * H * H * 2               # w_hid (bf16), single-buffered
    use += 16 * H * 4                  # aux
    use += H * L2p * 2                 # w_head
    use += 8 * L2p * 4                 # b_head (sublane padded)
    use += 2 * tb * L2p * 4            # out tile, double-buffered
    use += tb * H * 4 + tb * 128 * 4   # acc + sq scratch
    return use


def _invariant_spec(shape):
    """BlockSpec for a grid-invariant input; single-buffered where supported."""
    idx = lambda b, k: (0,) * len(shape)
    try:
        return pl.BlockSpec(shape, idx, pipeline_mode=pl.Buffered(1))
    except Exception:                  # older jax without pipeline_mode
        return pl.BlockSpec(shape, idx)


# ----------------------------------------------------------------------------
# Parameter preparation (run ONCE, outside the per-call path)
# ----------------------------------------------------------------------------
def prepare_params(params, *, k_multiple=128):
    """One-time conversion to the kernel layout: bf16 matmul weights, fc1
    weight zero-padded along K to a multiple of `k_multiple`, fused and
    lane-dense-padded mu/logvar head, packed small params.  Doing this outside
    the per-step loop removes the per-call HBM cast/pad of the largest tensor.
    (Pick k_multiple=tk, e.g. 2048, to allow large K tiles when input_dim is
    not a nice multiple of 128 -- at the cost of a per-call pad of x.)"""
    d_in, H = params["w1"].shape
    D = _round_up(d_in, k_multiple)
    w1 = params["w1"].astype(jnp.bfloat16)
    if D != d_in:
        w1 = jnp.pad(w1, ((0, D - d_in), (0, 0)))

    L = params["w_mu"].shape[1]
    L2 = 2 * L
    L2p = _round_up(L2, 128)
    w_head = jnp.concatenate([params["w_mu"], params["w_lv"]], axis=1)
    b_head = jnp.concatenate([params["b_mu"], params["b_lv"]], axis=1)
    if L2p != L2:
        w_head = jnp.pad(w_head, ((0, 0), (0, L2p - L2)))
        b_head = jnp.pad(b_head, ((0, 0), (0, L2p - L2)))

    aux = jnp.concatenate([params["b1"], params["b_hid"],
                           params["gamma"], params["beta"]], axis=0)
    aux = jnp.pad(aux, ((0, 16 - aux.shape[0]), (0, 0)))

    return {
        "w1": w1,                                        # [D, H]   bf16
        "w_hid": params["w_hid"].astype(jnp.bfloat16),   # [4, H, H] bf16
        "w_head": w_head.astype(jnp.bfloat16),           # [H, L2p] bf16
        "b_head": b_head.astype(jnp.float32),            # [1, L2p] f32
        "aux": aux.astype(jnp.float32),                  # [16, H]  f32
    }


# ----------------------------------------------------------------------------
# Forward wrapper
# ----------------------------------------------------------------------------
@functools.partial(jax.jit, static_argnames=("latent_dim", "tb", "tk"))
def encoder_forward(x, prepared, latent_dim, dropout_prob=0.0, *, tb=256, tk=2048):
    """Returns (mu, logvar), each [B, latent_dim] float32.

    `prepared` must come from `prepare_params`.  `dropout_prob` is accepted
    for API parity with the torch module but only eval-mode (identity) dropout
    is implemented."""
    del dropout_prob
    B, d_x = x.shape
    D, H = prepared["w1"].shape
    L2p = prepared["w_head"].shape[1]
    L = latent_dim
    assert D >= d_x and 2 * L <= L2p

    # --- choose tiles against the per-generation VMEM budget ---------------
    budget = _vmem_budget_bytes()
    tk_eff = _pick_tk(D, tk)
    while tk_eff > 128 and _vmem_usage_bytes(tb, tk_eff, H, L2p) > 0.85 * budget:
        tk_eff = _pick_tk(D, max(128, tk_eff // 2))
    tb_req = max(64, (tb // 8) * 8)
    while tb_req > 64 and _vmem_usage_bytes(tb_req, tk_eff, H, L2p) > 0.85 * budget:
        tb_req = max(64, ((tb_req // 2) // 8) * 8)

    # Balance the batch tiles (same nb => same w1 traffic, less padded work);
    # on v7x make the batch grid even so both TensorCores get real rows.
    nb = -(-B // tb_req)
    if nb > 1 and nb % 2 == 1 and _num_tensorcores_per_chip() >= 2:
        nb += 1
    tb_eff = _round_up(-(-B // nb), 8)
    B_pad = nb * tb_eff

    # Pad x only when needed (no-op / no HBM copy when shapes already align).
    if B_pad != B or D != d_x:
        x = jnp.pad(x, ((0, B_pad - B), (0, D - d_x)))

    out = pl.pallas_call(
        encoder_kernel,
        out_shape=jax.ShapeDtypeStruct((B_pad, L2p), jnp.float32),
        grid_spec=pltpu.PrefetchScalarGridSpec(
            num_scalar_prefetch=0,
            grid=(nb, D // tk_eff),                       # reduction (K) last
            in_specs=[
                pl.BlockSpec((tb_eff, tk_eff), lambda b, k: (b, k)),  # x
                pl.BlockSpec((tk_eff, H), lambda b, k: (k, 0)),       # w1
                _invariant_spec((4, H, H)),                           # w_hid
                _invariant_spec((16, H)),                             # aux
                _invariant_spec((H, L2p)),                            # w_head
                _invariant_spec((1, L2p)),                            # b_head
            ],
            out_specs=pl.BlockSpec((tb_eff, L2p), lambda b, k: (b, 0)),
            scratch_shapes=[
                pltpu.VMEM((tb_eff, H), jnp.float32),    # fc1 accumulator
                pltpu.VMEM((tb_eff, 128), jnp.float32),  # sum(x^2) accumulator
            ],
        ),
        compiler_params=pltpu.CompilerParams(
            dimension_semantics=("parallel", "arbitrary"),
            vmem_limit_bytes=int(budget),
        ),
    )(x, prepared["w1"], prepared["w_hid"], prepared["aux"],
      prepared["w_head"], prepared["b_head"])

    return out[:B, :L], out[:B, L:2 * L]


# ----------------------------------------------------------------------------
# Params init + pure-JAX reference
# ----------------------------------------------------------------------------
def init_params(key, input_dim, hidden_dim, latent_dim):
    ks = jax.random.split(key, 10)
    scale = 0.05
    return {
        "w1": scale * jax.random.normal(ks[0], (input_dim, hidden_dim), jnp.float32),
        "b1": scale * jax.random.normal(ks[1], (1, hidden_dim), jnp.float32),
        "w_hid": scale * jax.random.normal(ks[2], (4, hidden_dim, hidden_dim), jnp.float32),
        "b_hid": scale * jax.random.normal(ks[3], (4, hidden_dim), jnp.float32),
        # LayerNorm affine (torch init: weight=1, bias=0) — perturbed so they matter.
        "gamma": 1.0 + 0.1 * jax.random.normal(ks[4], (5, hidden_dim), jnp.float32),
        "beta": 0.1 * jax.random.normal(ks[5], (5, hidden_dim), jnp.float32),
        "w_mu": scale * jax.random.normal(ks[6], (hidden_dim, latent_dim), jnp.float32),
        "b_mu": scale * jax.random.normal(ks[7], (1, latent_dim), jnp.float32),
        "w_lv": scale * jax.random.normal(ks[8], (hidden_dim, latent_dim), jnp.float32),
        "b_lv": scale * jax.random.normal(ks[9], (1, latent_dim), jnp.float32),
    }


def reference_forward(x, params, matmul_dtype=jnp.float32):
    """Pure-JAX reference of the PyTorch forward (eval-mode dropout).

    matmul_dtype=jnp.bfloat16 mirrors the kernel's numeric pipeline (bf16
    matmul operands, f32 accumulation, f32 elementwise)."""

    def dot(a, w):
        return jnp.dot(a.astype(matmul_dtype), w.astype(matmul_dtype),
                       preferred_element_type=jnp.float32)

    def ln(h, g, b):
        m = jnp.mean(h, axis=-1, keepdims=True)
        v = jnp.mean((h - m) ** 2, axis=-1, keepdims=True)
        return (h - m) / jnp.sqrt(v + LN_EPS) * g + b

    sumsq = jnp.sum(x * x, axis=-1, keepdims=True)
    inv = jnp.where(sumsq > L2_EPS * L2_EPS, lax.rsqrt(sumsq), 1.0 / L2_EPS)

    h = ln(_swish(dot(x, params["w1"]) * inv + params["b1"]),
           params["gamma"][0], params["beta"][0])
    res = h
    for i in range(4):
        pre = dot(h, params["w_hid"][i]) + params["b_hid"][i] + res
        h = ln(_swish(pre), params["gamma"][i + 1], params["beta"][i + 1])
        res = res + h
    mu = dot(h, params["w_mu"]) + params["b_mu"]
    lv = dot(h, params["w_lv"]) + params["b_lv"]
    return mu, lv


if __name__ == "__main__":
    # Small but non-trivial: 2 batch tiles x 2 K tiles on the explicit-tile
    # call, lane-dense head padding (2L = 96 -> 128), no per-call x pads.
    B, INPUT_DIM, HIDDEN_DIM, LATENT_DIM = 256, 1024, 128, 48

    key = jax.random.PRNGKey(0)
    kx, kp = jax.random.split(key)
    x = jax.random.normal(kx, (B, INPUT_DIM), jnp.float32)
    params = init_params(kp, INPUT_DIM, HIDDEN_DIM, LATENT_DIM)
    prepared = prepare_params(params)          # one-time bf16 cast / pack / pad

    # Explicit small tiles: exercises both grid axes (batch + K reduction).
    mu, logvar = encoder_forward(x, prepared, latent_dim=LATENT_DIM, tb=128, tk=512)
    jax.block_until_ready((mu, logvar))
    assert mu.shape == (B, LATENT_DIM) and logvar.shape == (B, LATENT_DIM)

    # Tight check against a reference using the same bf16-matmul numerics.
    mu_bf, lv_bf = reference_forward(x, params, matmul_dtype=jnp.bfloat16)
    assert jnp.allclose(mu, mu_bf, atol=3e-3, rtol=3e-3), \
        float(jnp.max(jnp.abs(mu - mu_bf)))
    assert jnp.allclose(logvar, lv_bf, atol=3e-3, rtol=3e-3), \
        float(jnp.max(jnp.abs(logvar - lv_bf)))

    # Loose semantic check against the full-f32 (torch-equivalent) reference.
    mu_f, lv_f = reference_forward(x, params, matmul_dtype=jnp.float32)
    assert jnp.allclose(mu, mu_f, atol=2e-1, rtol=1e-1), \
        float(jnp.max(jnp.abs(mu - mu_f)))
    assert jnp.allclose(logvar, lv_f, atol=2e-1, rtol=1e-1), \
        float(jnp.max(jnp.abs(logvar - lv_f)))

    # Default (auto-sized) tile path: single-tile grid, no padding at all.
    mu2, lv2 = encoder_forward(x, prepared, latent_dim=LATENT_DIM)
    jax.block_until_ready((mu2, lv2))
    assert jnp.allclose(mu2, mu_bf, atol=3e-3, rtol=3e-3)
    assert jnp.allclose(lv2, lv_bf, atol=3e-3, rtol=3e-3)

    print("KERNEL_OK")
</pallas_src>

<mosaic_0001>
module attributes {stable_mosaic.version = 11 : i64} {
  func.func @encoder_kernel(%arg0: i32, %arg1: i32, %arg2: memref<128x512xf32, #tpu.memory_space<vmem>>, %arg3: memref<512x128xbf16, #tpu.memory_space<vmem>>, %arg4: memref<4x128x128xbf16, #tpu.memory_space<vmem>>, %arg5: memref<16x128xf32, #tpu.memory_space<vmem>>, %arg6: memref<128x128xbf16, #tpu.memory_space<vmem>>, %arg7: memref<1x128xf32, #tpu.memory_space<vmem>>, %arg8: memref<128x128xf32, #tpu.memory_space<vmem>>, %arg9: memref<128x128xf32, #tpu.memory_space<vmem>>, %arg10: memref<128x128xf32, #tpu.memory_space<vmem>>) attributes {dimension_semantics = [#tpu.dimension_semantics<parallel>, #tpu.dimension_semantics<arbitrary>], iteration_bounds = array<i64: 2, 2>, scalar_prefetch = 0 : i64, scratch_operands = 2 : i64, tpu.core_type = #tpu.core_type<tc>, window_params = [{transform_indices = @transform_0, window_bounds = array<i64: 128, 512>}, {transform_indices = @transform_1, window_bounds = array<i64: 512, 128>}, {pipeline_mode = #tpu.pipeline_mode<synchronous>, transform_indices = @transform_2, window_bounds = array<i64: 4, 128, 128>}, {pipeline_mode = #tpu.pipeline_mode<synchronous>, transform_indices = @transform_3, window_bounds = array<i64: 16, 128>}, {pipeline_mode = #tpu.pipeline_mode<synchronous>, transform_indices = @transform_4, window_bounds = array<i64: 128, 128>}, {pipeline_mode = #tpu.pipeline_mode<synchronous>, transform_indices = @transform_5, window_bounds = array<i64: 1, 128>}, {transform_indices = @transform_6, window_bounds = array<i64: 128, 128>}]} {
    %c0_i32 = arith.constant 0 : i32
    %0 = arith.cmpi eq, %arg1, %c0_i32 : i32
    %1 = arith.extui %0 : i1 to i32
    %c0_i32_0 = arith.constant 0 : i32
    %2 = arith.cmpi ne, %1, %c0_i32_0 : i32
    scf.if %2 {
      %cst_13 = arith.constant 0.000000e+00 : f32
      %24 = vector.broadcast %cst_13 : f32 to vector<128x128xf32>
      %c0_14 = arith.constant 0 : index
      %c0_15 = arith.constant 0 : index
      %25 = vector.load %arg9[%c0_14, %c0_15] : memref<128x128xf32, #tpu.memory_space<vmem>>, vector<128x128xf32>
      tpu.vector_store %arg9[%c0_14, %c0_15], %24 {strides = array<i32>} : memref<128x128xf32, #tpu.memory_space<vmem>>, vector<128x128xf32>,
      %cst_16 = arith.constant 0.000000e+00 : f32
      %26 = vector.broadcast %cst_16 : f32 to vector<128x128xf32>
      %c0_17 = arith.constant 0 : index
      %c0_18 = arith.constant 0 : index
      %27 = vector.load %arg10[%c0_17, %c0_18] : memref<128x128xf32, #tpu.memory_space<vmem>>, vector<128x128xf32>
      tpu.vector_store %arg10[%c0_17, %c0_18], %26 {strides = array<i32>} : memref<128x128xf32, #tpu.memory_space<vmem>>, vector<128x128xf32>,
    } else {
    }
    %c0 = arith.constant 0 : index
    %c0_1 = arith.constant 0 : index
    %3 = vector.load %arg2[%c0, %c0_1] : memref<128x512xf32, #tpu.memory_space<vmem>>, vector<128x512xf32>
    %4 = arith.mulf %3, %3 : vector<128x512xf32>
    %c0_2 = arith.constant 0 : index
    %c0_3 = arith.constant 0 : index
    %5 = vector.load %arg10[%c0_2, %c0_3] : memref<128x128xf32, #tpu.memory_space<vmem>>, vector<128x128xf32>
    %6 = vector.extract_strided_slice %4 {offsets = [0, 0], sizes = [128, 128], strides = [1, 1]} : vector<128x512xf32> to vector<128x128xf32>
    %7 = arith.addf %5, %6 : vector<128x128xf32>
    %8 = vector.extract_strided_slice %4 {offsets = [0, 128], sizes = [128, 128], strides = [1, 1]} : vector<128x512xf32> to vector<128x128xf32>
    %9 = arith.addf %7, %8 : vector<128x128xf32>
    %10 = vector.extract_strided_slice %4 {offsets = [0, 256], sizes = [128, 128], strides = [1, 1]} : vector<128x512xf32> to vector<128x128xf32>
    %11 = arith.addf %9, %10 : vector<128x128xf32>
    %12 = vector.extract_strided_slice %4 {offsets = [0, 384], sizes = [128, 128], strides = [1, 1]} : vector<128x512xf32> to vector<128x128xf32>
    %13 = arith.addf %11, %12 : vector<128x128xf32>
    %c0_4 = arith.constant 0 : index
    %c0_5 = arith.constant 0 : index
    %14 = vector.load %arg10[%c0_4, %c0_5] : memref<128x128xf32, #tpu.memory_space<vmem>>, vector<128x128xf32>
    tpu.vector_store %arg10[%c0_4, %c0_5], %13 {strides = array<i32>} : memref<128x128xf32, #tpu.memory_space<vmem>>, vector<128x128xf32>,
    %c0_6 = arith.constant 0 : index
    %c0_7 = arith.constant 0 : index
    %15 = vector.load %arg9[%c0_6, %c0_7] : memref<128x128xf32, #tpu.memory_space<vmem>>, vector<128x128xf32>
    %16 = arith.truncf %3 : vector<128x512xf32> to vector<128x512xbf16>
    %c0_8 = arith.constant 0 : index
    %c0_9 = arith.constant 0 : index
    %17 = vector.load %arg3[%c0_8, %c0_9] : memref<512x128xbf16, #tpu.memory_space<vmem>>, vector<512x128xbf16>
    %cst = arith.constant dense<0.000000e+00> : vector<128x128xf32>
    %18 = tpu.matmul %16, %17, %cst {dimension_numbers = #tpu.dot_dimension_numbers<[1], [0], [0], [1], [0, 0, 1, 1], [], []>} : vector<128x512xbf16>, vector<512x128xbf16>, vector<128x128xf32> -> vector<128x128xf32>
    %19 = arith.addf %15, %18 : vector<128x128xf32>
    %c0_10 = arith.constant 0 : index
    %c0_11 = arith.constant 0 : index
    %20 = vector.load %arg9[%c0_10, %c0_11] : memref<128x128xf32, #tpu.memory_space<vmem>>, vector<128x128xf32>
    tpu.vector_store %arg9[%c0_10, %c0_11], %19 {strides = array<i32>} : memref<128x128xf32, #tpu.memory_space<vmem>>, vector<128x128xf32>,
    %c1_i32 = arith.constant 1 : i32
    %21 = arith.cmpi eq, %arg1, %c1_i32 : i32
    %22 = arith.extui %21 : i1 to i32
    %c0_i32_12 = arith.constant 0 : i32
    %23 = arith.cmpi ne, %22, %c0_i32_12 : i32
    scf.if %23 {
      %c0_13 = arith.constant 0 : index
      %c0_14 = arith.constant 0 : index
      %24 = vector.load %arg10[%c0_13, %c0_14] : memref<128x128xf32, #tpu.memory_space<vmem>>, vector<128x128xf32>
      %cst_15 = arith.constant dense<0.000000e+00> : vector<128xf32>
      %25 = vector.multi_reduction <add>, %24, %cst_15 [1] : vector<128x128xf32> to vector<128xf32>
      %26 = vector.shape_cast %25 : vector<128xf32> to vector<128x1xf32>
      %cst_16 = arith.constant 1.000000e-24 : f32
      %27 = vector.broadcast %cst_16 : f32 to vector<128x1xf32>
      %28 = arith.cmpf ogt, %26, %27 : vector<128x1xf32>
      %29 = math.rsqrt %26 : vector<128x1xf32>
      %cst_17 = arith.constant 9.99999995E+11 : f32
      %30 = vector.broadcast %cst_17 : f32 to vector<128x1xf32>
      %31 = arith.select %28, %29, %30 : vector<128x1xi1>, vector<128x1xf32>
      %c0_18 = arith.constant 0 : index
      %c0_19 = arith.constant 0 : index
      %32 = vector.load %arg5[%c0_18, %c0_19] : memref<16x128xf32, #tpu.memory_space<vmem>>, vector<1x128xf32>
      %c0_20 = arith.constant 0 : index
      %c0_21 = arith.constant 0 : index
      %33 = vector.load %arg9[%c0_20, %c0_21] : memref<128x128xf32, #tpu.memory_space<vmem>>, vector<128x128xf32>
      %34 = vector.broadcast %31 : vector<128x1xf32> to vector<128x128xf32>
      %35 = arith.mulf %33, %34 : vector<128x128xf32>
      %36 = vector.broadcast %32 : vector<1x128xf32> to vector<128x128xf32>
      %37 = arith.addf %35, %36 : vector<128x128xf32>
      %cst_22 = arith.constant 5.000000e-01 : f32
      %38 = vector.broadcast %cst_22 : f32 to vector<128x128xf32>
      %39 = arith.mulf %38, %37 : vector<128x128xf32>
      %40 = math.tanh %39 : vector<128x128xf32>
      %cst_23 = arith.constant 1.000000e+00 : f32
      %41 = vector.broadcast %cst_23 : f32 to vector<128x128xf32>
      %42 = arith.addf %40, %41 : vector<128x128xf32>
      %cst_24 = arith.constant 5.000000e-01 : f32
      %43 = vector.broadcast %cst_24 : f32 to vector<128x128xf32>
      %44 = arith.mulf %43, %42 : vector<128x128xf32>
      %45 = arith.mulf %37, %44 : vector<128x128xf32>
      %c5 = arith.constant 5 : index
      %c0_25 = arith.constant 0 : index
      %46 = vector.load %arg5[%c5, %c0_25] : memref<16x128xf32, #tpu.memory_space<vmem>>, vector<1x128xf32>
      %c10 = arith.constant 10 : index
      %c0_26 = arith.constant 0 : index
      %47 = vector.load %arg5[%c10, %c0_26] : memref<16x128xf32, #tpu.memory_space<vmem>>, vector<1x128xf32>
      %cst_27 = arith.constant dense<0.000000e+00> : vector<128xf32>
      %48 = vector.multi_reduction <add>, %45, %cst_27 [1] : vector<128x128xf32> to vector<128xf32>
      %49 = vector.shape_cast %48 : vector<128xf32> to vector<128x1xf32>
      %50 = arith.mulf %45, %45 : vector<128x128xf32>
      %cst_28 = arith.constant dense<0.000000e+00> : vector<128xf32>
      %51 = vector.multi_reduction <add>, %50, %cst_28 [1] : vector<128x128xf32> to vector<128xf32>
      %52 = vector.shape_cast %51 : vector<128xf32> to vector<128x1xf32>
      %cst_29 = arith.constant 7.812500e-03 : f32
      %53 = vector.broadcast %cst_29 : f32 to vector<128x1xf32>
      %54 = arith.mulf %49, %53 : vector<128x1xf32>
      %cst_30 = arith.constant 7.812500e-03 : f32
      %55 = vector.broadcast %cst_30 : f32 to vector<128x1xf32>
      %56 = arith.mulf %52, %55 : vector<128x1xf32>
      %57 = arith.mulf %54, %54 : vector<128x1xf32>
      %58 = arith.subf %56, %57 : vector<128x1xf32>
      %cst_31 = arith.constant 1.000000e-01 : f32
      %59 = vector.broadcast %cst_31 : f32 to vector<128x1xf32>
      %60 = arith.addf %58, %59 : vector<128x1xf32>
      %61 = math.rsqrt %60 : vector<128x1xf32>
      %62 = vector.broadcast %46 : vector<1x128xf32> to vector<128x128xf32>
      %63 = vector.broadcast %61 : vector<128x1xf32> to vector<128x128xf32>
      %64 = arith.mulf %62, %63 : vector<128x128xf32>
      %65 = vector.broadcast %54 : vector<128x1xf32> to vector<128x128xf32>
      %66 = arith.subf %45, %65 : vector<128x128xf32>
      %67 = arith.mulf %66, %64 : vector<128x128xf32>
      %68 = vector.broadcast %47 : vector<1x128xf32> to vector<128x128xf32>
      %69 = arith.addf %67, %68 : vector<128x128xf32>
      %70 = arith.truncf %69 : vector<128x128xf32> to vector<128x128xbf16>
      %c0_32 = arith.constant 0 : index
      %c0_33 = arith.constant 0 : index
      %c0_34 = arith.constant 0 : index
      %71 = vector.load %arg4[%c0_32, %c0_33, %c0_34] : memref<4x128x128xbf16, #tpu.memory_space<vmem>>, vector<1x128x128xbf16>
      %72 = vector.shape_cast %71 : vector<1x128x128xbf16> to vector<128x128xbf16>
      %cst_35 = arith.constant dense<0.000000e+00> : vector<128x128xf32>
      %73 = tpu.matmul %70, %72, %cst_35 {dimension_numbers = #tpu.dot_dimension_numbers<[1], [0], [0], [1], [0, 0, 1, 1], [], []>} : vector<128x128xbf16>, vector<128x128xbf16>, vector<128x128xf32> -> vector<128x128xf32>
      %c1 = arith.constant 1 : index
      %c0_36 = arith.constant 0 : index
      %74 = vector.load %arg5[%c1, %c0_36] : memref<16x128xf32, #tpu.memory_space<vmem>>, vector<1x128xf32>
      %75 = vector.broadcast %74 : vector<1x128xf32> to vector<128x128xf32>
      %76 = arith.addf %73, %75 : vector<128x128xf32>
      %77 = arith.addf %76, %69 : vector<128x128xf32>
      %cst_37 = arith.constant 5.000000e-01 : f32
      %78 = vector.broadcast %cst_37 : f32 to vector<128x128xf32>
      %79 = arith.mulf %78, %77 : vector<128x128xf32>
      %80 = math.tanh %79 : vector<128x128xf32>
      %cst_38 = arith.constant 1.000000e+00 : f32
      %81 = vector.broadcast %cst_38 : f32 to vector<128x128xf32>
      %82 = arith.addf %80, %81 : vector<128x128xf32>
      %cst_39 = arith.constant 5.000000e-01 : f32
      %83 = vector.broadcast %cst_39 : f32 to vector<128x128xf32>
      %84 = arith.mulf %83, %82 : vector<128x128xf32>
      %85 = arith.mulf %77, %84 : vector<128x128xf32>
      %c6 = arith.constant 6 : index
      %c0_40 = arith.constant 0 : index
      %86 = vector.load %arg5[%c6, %c0_40] : memref<16x128xf32, #tpu.memory_space<vmem>>, vector<1x128xf32>
      %c11 = arith.constant 11 : index
      %c0_41 = arith.constant 0 : index
      %87 = vector.load %arg5[%c11, %c0_41] : memref<16x128xf32, #tpu.memory_space<vmem>>, vector<1x128xf32>
      %cst_42 = arith.constant dense<0.000000e+00> : vector<128xf32>
      %88 = vector.multi_reduction <add>, %85, %cst_42 [1] : vector<128x128xf32> to vector<128xf32>
      %89 = vector.shape_cast %88 : vector<128xf32> to vector<128x1xf32>
      %90 = arith.mulf %85, %85 : vector<128x128xf32>
      %cst_43 = arith.constant dense<0.000000e+00> : vector<128xf32>
      %91 = vector.multi_reduction <add>, %90, %cst_43 [1] : vector<128x128xf32> to vector<128xf32>
      %92 = vector.shape_cast %91 : vector<128xf32> to vector<128x1xf32>
      %cst_44 = arith.constant 7.812500e-03 : f32
      %93 = vector.broadcast %cst_44 : f32 to vector<128x1xf32>
      %94 = arith.mulf %89, %93 : vector<128x1xf32>
      %cst_45 = arith.constant 7.812500e-03 : f32
      %95 = vector.broadcast %cst_45 : f32 to vector<128x1xf32>
      %96 = arith.mulf %92, %95 : vector<128x1xf32>
      %97 = arith.mulf %94, %94 : vector<128x1xf32>
      %98 = arith.subf %96, %97 : vector<128x1xf32>
      %cst_46 = arith.constant 1.000000e-01 : f32
      %99 = vector.broadcast %cst_46 : f32 to vector<128x1xf32>
      %100 = arith.addf %98, %99 : vector<128x1xf32>
      %101 = math.rsqrt %100 : vector<128x1xf32>
      %102 = vector.broadcast %86 : vector<1x128xf32> to vector<128x128xf32>
      %103 = vector.broadcast %101 : vector<128x1xf32> to vector<128x128xf32>
      %104 = arith.mulf %102, %103 : vector<128x128xf32>
      %105 = vector.broadcast %94 : vector<128x1xf32> to vector<128x128xf32>
      %106 = arith.subf %85, %105 : vector<128x128xf32>
      %107 = arith.mulf %106, %104 : vector<128x128xf32>
      %108 = vector.broadcast %87 : vector<1x128xf32> to vector<128x128xf32>
      %109 = arith.addf %107, %108 : vector<128x128xf32>
      %110 = arith.addf %69, %109 : vector<128x128xf32>
      %111 = arith.truncf %109 : vector<128x128xf32> to vector<128x128xbf16>
      %c1_47 = arith.constant 1 : index
      %c0_48 = arith.constant 0 : index
      %c0_49 = arith.constant 0 : index
      %112 = vector.load %arg4[%c1_47, %c0_48, %c0_49] : memref<4x128x128xbf16, #tpu.memory_space<vmem>>, vector<1x128x128xbf16>
      %113 = vector.shape_cast %112 : vector<1x128x128xbf16> to vector<128x128xbf16>
      %cst_50 = arith.constant dense<0.000000e+00> : vector<128x128xf32>
      %114 = tpu.matmul %111, %113, %cst_50 {dimension_numbers = #tpu.dot_dimension_numbers<[1], [0], [0], [1], [0, 0, 1, 1], [], []>} : vector<128x128xbf16>, vector<128x128xbf16>, vector<128x128xf32> -> vector<128x128xf32>
      %c2 = arith.constant 2 : index
      %c0_51 = arith.constant 0 : index
      %115 = vector.load %arg5[%c2, %c0_51] : memref<16x128xf32, #tpu.memory_space<vmem>>, vector<1x128xf32>
      %116 = vector.broadcast %115 : vector<1x128xf32> to vector<128x128xf32>
      %117 = arith.addf %114, %116 : vector<128x128xf32>
      %118 = arith.addf %117, %110 : vector<128x128xf32>
      %cst_52 = arith.constant 5.000000e-01 : f32
      %119 = vector.broadcast %cst_52 : f32 to vector<128x128xf32>
      %120 = arith.mulf %119, %118 : vector<128x128xf32>
      %121 = math.tanh %120 : vector<128x128xf32>
      %cst_53 = arith.constant 1.000000e+00 : f32
      %122 = vector.broadcast %cst_53 : f32 to vector<128x128xf32>
      %123 = arith.addf %121, %122 : vector<128x128xf32>
      %cst_54 = arith.constant 5.000000e-01 : f32
      %124 = vector.broadcast %cst_54 : f32 to vector<128x128xf32>
      %125 = arith.mulf %124, %123 : vector<128x128xf32>
      %126 = arith.mulf %118, %125 : vector<128x128xf32>
      %c7 = arith.constant 7 : index
      %c0_55 = arith.constant 0 : index
      %127 = vector.load %arg5[%c7, %c0_55] : memref<16x128xf32, #tpu.memory_space<vmem>>, vector<1x128xf32>
      %c12 = arith.constant 12 : index
      %c0_56 = arith.constant 0 : index
      %128 = vector.load %arg5[%c12, %c0_56] : memref<16x128xf32, #tpu.memory_space<vmem>>, vector<1x128xf32>
      %cst_57 = arith.constant dense<0.000000e+00> : vector<128xf32>
      %129 = vector.multi_reduction <add>, %126, %cst_57 [1] : vector<128x128xf32> to vector<128xf32>
      %130 = vector.shape_cast %129 : vector<128xf32> to vector<128x1xf32>
      %131 = arith.mulf %126, %126 : vector<128x128xf32>
      %cst_58 = arith.constant dense<0.000000e+00> : vector<128xf32>
      %132 = vector.multi_reduction <add>, %131, %cst_58 [1] : vector<128x128xf32> to vector<128xf32>
      %133 = vector.shape_cast %132 : vector<128xf32> to vector<128x1xf32>
      %cst_59 = arith.constant 7.812500e-03 : f32
      %134 = vector.broadcast %cst_59 : f32 to vector<128x1xf32>
      %135 = arith.mulf %130, %134 : vector<128x1xf32>
      %cst_60 = arith.constant 7.812500e-03 : f32
      %136 = vector.broadcast %cst_60 : f32 to vector<128x1xf32>
      %137 = arith.mulf %133, %136 : vector<128x1xf32>
      %138 = arith.mulf %135, %135 : vector<128x1xf32>
      %139 = arith.subf %137, %138 : vector<128x1xf32>
      %cst_61 = arith.constant 1.000000e-01 : f32
      %140 = vector.broadcast %cst_61 : f32 to vector<128x1xf32>
      %141 = arith.addf %139, %140 : vector<128x1xf32>
      %142 = math.rsqrt %141 : vector<128x1xf32>
      %143 = vector.broadcast %127 : vector<1x128xf32> to vector<128x128xf32>
      %144 = vector.broadcast %142 : vector<128x1xf32> to vector<128x128xf32>
      %145 = arith.mulf %143, %144 : vector<128x128xf32>
      %146 = vector.broadcast %135 : vector<128x1xf32> to vector<128x128xf32>
      %147 = arith.subf %126, %146 : vector<128x128xf32>
      %148 = arith.mulf %147, %145 : vector<128x128xf32>
      %149 = vector.broadcast %128 : vector<1x128xf32> to vector<128x128xf32>
      %150 = arith.addf %148, %149 : vector<128x128xf32>
      %151 = arith.addf %110, %150 : vector<128x128xf32>
      %152 = arith.truncf %150 : vector<128x128xf32> to vector<128x128xbf16>
      %c2_62 = arith.constant 2 : index
      %c0_63 = arith.constant 0 : index
      %c0_64 = arith.constant 0 : index
      %153 = vector.load %arg4[%c2_62, %c0_63, %c0_64] : memref<4x128x128xbf16, #tpu.memory_space<vmem>>, vector<1x128x128xbf16>
      %154 = vector.shape_cast %153 : vector<1x128x128xbf16> to vector<128x128xbf16>
      %cst_65 = arith.constant dense<0.000000e+00> : vector<128x128xf32>
      %155 = tpu.matmul %152, %154, %cst_65 {dimension_numbers = #tpu.dot_dimension_numbers<[1], [0], [0], [1], [0, 0, 1, 1], [], []>} : vector<128x128xbf16>, vector<128x128xbf16>, vector<128x128xf32> -> vector<128x128xf32>
      %c3 = arith.constant 3 : index
      %c0_66 = arith.constant 0 : index
      %156 = vector.load %arg5[%c3, %c0_66] : memref<16x128xf32, #tpu.memory_space<vmem>>, vector<1x128xf32>
      %157 = vector.broadcast %156 : vector<1x128xf32> to vector<128x128xf32>
      %158 = arith.addf %155, %157 : vector<128x128xf32>
      %159 = arith.addf %158, %151 : vector<128x128xf32>
      %cst_67 = arith.constant 5.000000e-01 : f32
      %160 = vector.broadcast %cst_67 : f32 to vector<128x128xf32>
      %161 = arith.mulf %160, %159 : vector<128x128xf32>
      %162 = math.tanh %161 : vector<128x128xf32>
      %cst_68 = arith.constant 1.000000e+00 : f32
      %163 = vector.broadcast %cst_68 : f32 to vector<128x128xf32>
      %164 = arith.addf %162, %163 : vector<128x128xf32>
      %cst_69 = arith.constant 5.000000e-01 : f32
      %165 = vector.broadcast %cst_69 : f32 to vector<128x128xf32>
      %166 = arith.mulf %165, %164 : vector<128x128xf32>
      %167 = arith.mulf %159, %166 : vector<128x128xf32>
      %c8 = arith.constant 8 : index
      %c0_70 = arith.constant 0 : index
      %168 = vector.load %arg5[%c8, %c0_70] : memref<16x128xf32, #tpu.memory_space<vmem>>, vector<1x128xf32>
      %c13 = arith.constant 13 : index
      %c0_71 = arith.constant 0 : index
      %169 = vector.load %arg5[%c13, %c0_71] : memref<16x128xf32, #tpu.memory_space<vmem>>, vector<1x128xf32>
      %cst_72 = arith.constant dense<0.000000e+00> : vector<128xf32>
      %170 = vector.multi_reduction <add>, %167, %cst_72 [1] : vector<128x128xf32> to vector<128xf32>
      %171 = vector.shape_cast %170 : vector<128xf32> to vector<128x1xf32>
      %172 = arith.mulf %167, %167 : vector<128x128xf32>
      %cst_73 = arith.constant dense<0.000000e+00> : vector<128xf32>
      %173 = vector.multi_reduction <add>, %172, %cst_73 [1] : vector<128x128xf32> to vector<128xf32>
      %174 = vector.shape_cast %173 : vector<128xf32> to vector<128x1xf32>
      %cst_74 = arith.constant 7.812500e-03 : f32
      %175 = vector.broadcast %cst_74 : f32 to vector<128x1xf32>
      %176 = arith.mulf %171, %175 : vector<128x1xf32>
      %cst_75 = arith.constant 7.812500e-03 : f32
      %177 = vector.broadcast %cst_75 : f32 to vector<128x1xf32>
      %178 = arith.mulf %174, %177 : vector<128x1xf32>
      %179 = arith.mulf %176, %176 : vector<128x1xf32>
      %180 = arith.subf %178, %179 : vector<128x1xf32>
      %cst_76 = arith.constant 1.000000e-01 : f32
      %181 = vector.broadcast %cst_76 : f32 to vector<128x1xf32>
      %182 = arith.addf %180, %181 : vector<128x1xf32>
      %183 = math.rsqrt %182 : vector<128x1xf32>
      %184 = vector.broadcast %168 : vector<1x128xf32> to vector<128x128xf32>
      %185 = vector.broadcast %183 : vector<128x1xf32> to vector<128x128xf32>
      %186 = arith.mulf %184, %185 : vector<128x128xf32>
      %187 = vector.broadcast %176 : vector<128x1xf32> to vector<128x128xf32>
      %188 = arith.subf %167, %187 : vector<128x128xf32>
      %189 = arith.mulf %188, %186 : vector<128x128xf32>
      %190 = vector.broadcast %169 : vector<1x128xf32> to vector<128x128xf32>
      %191 = arith.addf %189, %190 : vector<128x128xf32>
      %192 = arith.addf %151, %191 : vector<128x128xf32>
      %193 = arith.truncf %191 : vector<128x128xf32> to vector<128x128xbf16>
      %c3_77 = arith.constant 3 : index
      %c0_78 = arith.constant 0 : index
      %c0_79 = arith.constant 0 : index
      %194 = vector.load %arg4[%c3_77, %c0_78, %c0_79] : memref<4x128x128xbf16, #tpu.memory_space<vmem>>, vector<1x128x128xbf16>
      %195 = vector.shape_cast %194 : vector<1x128x128xbf16> to vector<128x128xbf16>
      %cst_80 = arith.constant dense<0.000000e+00> : vector<128x128xf32>
      %196 = tpu.matmul %193, %195, %cst_80 {dimension_numbers = #tpu.dot_dimension_numbers<[1], [0], [0], [1], [0, 0, 1, 1], [], []>} : vector<128x128xbf16>, vector<128x128xbf16>, vector<128x128xf32> -> vector<128x128xf32>
      %c4 = arith.constant 4 : index
      %c0_81 = arith.constant 0 : index
      %197 = vector.load %arg5[%c4, %c0_81] : memref<16x128xf32, #tpu.memory_space<vmem>>, vector<1x128xf32>
      %198 = vector.broadcast %197 : vector<1x128xf32> to vector<128x128xf32>
      %199 = arith.addf %196, %198 : vector<128x128xf32>
      %200 = arith.addf %199, %192 : vector<128x128xf32>
      %cst_82 = arith.constant 5.000000e-01 : f32
      %201 = vector.broadcast %cst_82 : f32 to vector<128x128xf32>
      %202 = arith.mulf %201, %200 : vector<128x128xf32>
      %203 = math.tanh %202 : vector<128x128xf32>
      %cst_83 = arith.constant 1.000000e+00 : f32
      %204 = vector.broadcast %cst_83 : f32 to vector<128x128xf32>
      %205 = arith.addf %203, %204 : vector<128x128xf32>
      %cst_84 = arith.constant 5.000000e-01 : f32
      %206 = vector.broadcast %cst_84 : f32 to vector<128x128xf32>
      %207 = arith.mulf %206, %205 : vector<128x128xf32>
      %208 = arith.mulf %200, %207 : vector<128x128xf32>
      %c9 = arith.constant 9 : index
      %c0_85 = arith.constant 0 : index
      %209 = vector.load %arg5[%c9, %c0_85] : memref<16x128xf32, #tpu.memory_space<vmem>>, vector<1x128xf32>
      %c14 = arith.constant 14 : index
      %c0_86 = arith.constant 0 : index
      %210 = vector.load %arg5[%c14, %c0_86] : memref<16x128xf32, #tpu.memory_space<vmem>>, vector<1x128xf32>
      %cst_87 = arith.constant dense<0.000000e+00> : vector<128xf32>
      %211 = vector.multi_reduction <add>, %208, %cst_87 [1] : vector<128x128xf32> to vector<128xf32>
      %212 = vector.shape_cast %211 : vector<128xf32> to vector<128x1xf32>
      %213 = arith.mulf %208, %208 : vector<128x128xf32>
      %cst_88 = arith.constant dense<0.000000e+00> : vector<128xf32>
      %214 = vector.multi_reduction <add>, %213, %cst_88 [1] : vector<128x128xf32> to vector<128xf32>
      %215 = vector.shape_cast %214 : vector<128xf32> to vector<128x1xf32>
      %cst_89 = arith.constant 7.812500e-03 : f32
      %216 = vector.broadcast %cst_89 : f32 to vector<128x1xf32>
      %217 = arith.mulf %212, %216 : vector<128x1xf32>
      %cst_90 = arith.constant 7.812500e-03 : f32
      %218 = vector.broadcast %cst_90 : f32 to vector<128x1xf32>
      %219 = arith.mulf %215, %218 : vector<128x1xf32>
      %220 = arith.mulf %217, %217 : vector<128x1xf32>
      %221 = arith.subf %219, %220 : vector<128x1xf32>
      %cst_91 = arith.constant 1.000000e-01 : f32
      %222 = vector.broadcast %cst_91 : f32 to vector<128x1xf32>
      %223 = arith.addf %221, %222 : vector<128x1xf32>
      %224 = math.rsqrt %223 : vector<128x1xf32>
      %225 = vector.broadcast %209 : vector<1x128xf32> to vector<128x128xf32>
      %226 = vector.broadcast %224 : vector<128x1xf32> to vector<128x128xf32>
      %227 = arith.mulf %225, %226 : vector<128x128xf32>
      %228 = vector.broadcast %217 : vector<128x1xf32> to vector<128x128xf32>
      %229 = arith.subf %208, %228 : vector<128x128xf32>
      %230 = arith.mulf %229, %227 : vector<128x128xf32>
      %231 = vector.broadcast %210 : vector<1x128xf32> to vector<128x128xf32>
      %232 = arith.addf %230, %231 : vector<128x128xf32>
      %233 = arith.truncf %232 : vector<128x128xf32> to vector<128x128xbf16>
      %c0_92 = arith.constant 0 : index
      %c0_93 = arith.constant 0 : index
      %234 = vector.load %arg6[%c0_92, %c0_93] : memref<128x128xbf16, #tpu.memory_space<vmem>>, vector<128x128xbf16>
      %cst_94 = arith.constant dense<0.000000e+00> : vector<128x128xf32>
      %235 = tpu.matmul %233, %234, %cst_94 {dimension_numbers = #tpu.dot_dimension_numbers<[1], [0], [0], [1], [0, 0, 1, 1], [], []>} : vector<128x128xbf16>, vector<128x128xbf16>, vector<128x128xf32> -> vector<128x128xf32>
      %c0_95 = arith.constant 0 : index
      %c0_96 = arith.constant 0 : index
      %236 = vector.load %arg7[%c0_95, %c0_96] : memref<1x128xf32, #tpu.memory_space<vmem>>, vector<1x128xf32>
      %237 = vector.broadcast %236 : vector<1x128xf32> to vector<128x128xf32>
      %238 = arith.addf %235, %237 : vector<128x128xf32>
      %c0_97 = arith.constant 0 : index
      %c0_98 = arith.constant 0 : index
      %239 = vector.load %arg8[%c0_97, %c0_98] : memref<128x128xf32, #tpu.memory_space<vmem>>, vector<128x128xf32>
      tpu.vector_store %arg8[%c0_97, %c0_98], %238 {strides = array<i32>} : memref<128x128xf32, #tpu.memory_space<vmem>>, vector<128x128xf32>,
    } else {
    }
    return
  }
  func.func @transform_0(%arg0: i32, %arg1: i32) -> (i32, i32) {
    %c0_i32 = arith.constant 0 : i32
    return %arg0, %arg1 : i32, i32
  }
  func.func @transform_1(%arg0: i32, %arg1: i32) -> (i32, i32) {
    %c0_i32 = arith.constant 0 : i32
    %c0_i32_0 = arith.constant 0 : i32
    return %arg1, %c0_i32 : i32, i32
  }
  func.func @transform_2(%arg0: i32, %arg1: i32) -> (i32, i32, i32) {
    %c0_i32 = arith.constant 0 : i32
    %c0_i32_0 = arith.constant 0 : i32
    %c0_i32_1 = arith.constant 0 : i32
    %c0_i32_2 = arith.constant 0 : i32
    return %c0_i32, %c0_i32_0, %c0_i32_1 : i32, i32, i32
  }
  func.func @transform_3(%arg0: i32, %arg1: i32) -> (i32, i32) {
    %c0_i32 = arith.constant 0 : i32
    %c0_i32_0 = arith.constant 0 : i32
    %c0_i32_1 = arith.constant 0 : i32
    return %c0_i32, %c0_i32_0 : i32, i32
  }
  func.func @transform_4(%arg0: i32, %arg1: i32) -> (i32, i32) {
    %c0_i32 = arith.constant 0 : i32
    %c0_i32_0 = arith.constant 0 : i32
    %c0_i32_1 = arith.constant 0 : i32
    return %c0_i32, %c0_i32_0 : i32, i32
  }
  func.func @transform_5(%arg0: i32, %arg1: i32) -> (i32, i32) {
    %c0_i32 = arith.constant 0 : i32
    %c0_i32_0 = arith.constant 0 : i32
    %c0_i32_1 = arith.constant 0 : i32
    return %c0_i32, %c0_i32_0 : i32, i32
  }
  func.func @transform_6(%arg0: i32, %arg1: i32) -> (i32, i32) {
    %c0_i32 = arith.constant 0 : i32
    %c0_i32_0 = arith.constant 0 : i32
    return %arg0, %c0_i32 : i32, i32
  }
}

</mosaic_0001>

<llo_original>
// kernel: encoder_forward.1
$region0: #{encoder_forward.1}
  #allocation0 [shape = 'u32[]', space=smem, size = 0x4, offset = 0x4, fixed_abs, tag = 'smem constant byte address 0x4 - core index']
  #allocation1 [shape = 'u32[144,128]{1,0:T(1,128)}', space=vmem, size = 0x12000, scoped, tag = 'internal scratch']
  #allocation2 [shape = 'f32[128,128]{1,0:T(8,128)}', space=vmem, size = 0x10000, scoped, tag = 'scratch operand']
  #allocation3 [shape = 'f32[128,128]{1,0:T(8,128)}', space=vmem, size = 0x10000, scoped, tag = 'scratch operand']
  %s0 = inlined_call_operand.hbm [shape: f32[256,1024], index: 0, kind: input, shape index: {}]
  %s1 = inlined_call_operand.hbm [shape: bf16[1024,128], index: 1, kind: input, shape index: {}]
  %s2 = inlined_call_operand.hbm [shape: bf16[4,128,128], index: 2, kind: input, shape index: {}]
  %s3 = inlined_call_operand.hbm [shape: f32[16,128], index: 3, kind: input, shape index: {}]
  %s4 = inlined_call_operand.hbm [shape: bf16[128,128], index: 4, kind: input, shape index: {}]
  %s5 = inlined_call_operand.vmem [shape: f32[1,128], index: 5, kind: input, shape index: {}]
  %s6 = inlined_call_operand.vmem [shape: f32[256,128], index: 6, kind: output, shape index: {}]
  %s7 = sld [smem:[#allocation0]]
  $region85: #{encoder_forward.1} parent=0
    _
  %s9 = ssub.s32 1, %s7
  %s10 = scalar_select 0, %s9, %s7
  $region1: #{encoder_forward.1} parent=0
    #allocation4 [shape = 'u8[524288]{0}', space=vmem, size = 0x80000, scoped, tag = 'input window, operand 0']
    #allocation5 [shape = 's32[2]{0}', space=sflag, size = 0x8, scoped, tag = 'scoped memory for encoder_forward.1']
    #allocation6 [shape = 'u8[262144]{0}', space=vmem, size = 0x40000, scoped, tag = 'input window, operand 1']
    #allocation7 [shape = 's32[2]{0}', space=sflag, size = 0x8, scoped, tag = 'scoped memory for encoder_forward.1']
    #allocation8 [shape = 'u8[131072]{0}', space=vmem, size = 0x20000, scoped, tag = 'input window, operand 2, single buffered']
    #allocation9 [shape = 'u8[8192]{0}', space=vmem, size = 0x2000, scoped, tag = 'input window, operand 3, single buffered']
    #allocation10 [shape = 's32[1]{0}', space=sflag, size = 0x4, scoped, tag = 'scoped memory for encoder_forward.1']
    #allocation11 [shape = 'u8[32768]{0}', space=vmem, size = 0x8000, scoped, tag = 'input window, operand 4, single buffered']
    %11 = vsyncpa [#allocation5], 0
    %s12 = scalar_lea.sflag [#allocation5], 1
    %13 = vsyncpa %s12, 0
    %14 = vsyncpa [#allocation7], 0
    %s15 = scalar_lea.sflag [#allocation7], 1
    %16 = vsyncpa %s15, 0
    %17 = vsyncpa [#allocation10], 0
    loop: start=0, step=1, limit=6
    $region2: #{encoder_forward.1} parent=1 // loop_pre_header
      _
    $region3: #{encoder_forward.1} parent=1 // loop_header
      %s19 = sphi 0, %s23
      %p20 = scmp.ge.s32.totalorder %s19, 6
      %s26 = sphi 0, %s38
      %s27 = sphi 0, %s34
      %s28 = sphi 0, %s26
      %s29 = sphi 0, %s27
      %s30 = sphi 0, %s28
      %s31 = sphi 0, %s29
      %s43 = sphi 0, %s45
      %s46 = sphi 0, %s43
      %s47 = sphi 0, %s46
      %s63 = sphi 0, %s47
      %s69 = sphi 0, %s71
      %s72 = sphi 0, %s69
      %s73 = sphi 0, %s72
      %s89 = sphi 0, %s73
      %s93 = sphi 0, %s93
      %s95 = sphi 0, %s93
      %s96 = sphi 0, %s95
      %s110 = sphi 0, %s96
      %s114 = sphi 0, %s114
      %s116 = sphi 0, %s114
      %s117 = sphi 0, %s116
      %s131 = sphi 0, %s117
      %s135 = sphi 0, %s135
      %s137 = sphi 0, %s135
      %s138 = sphi 0, %s137
      %s152 = sphi 0, %s138
      %s156 = sphi 0, %s156
      %s158 = sphi 0, %s156
      %s159 = sphi 0, %s158
      %s173 = sphi 0, %s159
      %s179 = sphi 0, %s181
      %s182 = sphi 0, %s179
      %s183 = sphi 0, %s182
      %s199 = sphi 0, %s183
    $region4: #{encoder_forward.1} parent=1 // loop_header_branch
      %22 = sbr.rel (%p20) target = $region8
    $region5: #{encoder_forward.1} parent=1 // loop_body
      %s24 = ssub.s32 %s19, 1
      %s25 = ssub.s32 %s19, 2
      %s32 = sadd.s32 1, %s27
      %p33 = scmp.ge.s32.totalorder %s32, 2
      %s34 = scalar_select %p33, 0, %s32
      %s35 = sadd.s32 1, %s26
      %s36 = scalar_select %p33, %s35, %s26
      %p37 = scmp.ge.s32.totalorder %s36, 2
      %s38 = scalar_select %p37, 0, %s36
      %s39 = ssub.s32 %s26, %s38
      %s40 = ssub.s32 %s27, %s34
      %s41 = sor.u32 %s39, %s40
      %p42 = scmp.eq.s32.totalorder %s41, 0
      %s44 = sadd.s32 %s43, 1
      %s45 = scalar_select %p42, %s43, %s44
      %p48 = pneg %p42
      %p49 = scmp.eq.s32.totalorder %s19, 3
      %p50 = por %p48, %p49
      %p51 = scmp.ne.s32.totalorder %s43, %s46
      %p52 = scmp.eq.s32.totalorder %s19, 0
      %p53 = por %p51, %p52
      %p54 = scmp.ne.s32.totalorder %s43, %s46
      %p55 = scmp.eq.s32.totalorder %s24, 3
      %p56 = por %p54, %p55
      %p57 = scmp.ne.s32.totalorder %s46, %s47
      %p58 = scmp.eq.s32.totalorder %s24, 0
      %p59 = por %p57, %p58
      %p60 = scmp.ne.s32.totalorder %s46, %s47
      %p61 = scmp.eq.s32.totalorder %s25, 3
      %p62 = por %p60, %p61
      %p64 = scmp.ne.s32.totalorder %s47, %s63
      %p65 = scmp.eq.s32.totalorder %s25, 0
      %p66 = por %p64, %p65
      %s67 = ssub.s32 %s27, %s34
      %p68 = scmp.eq.s32.totalorder %s67, 0
      %s70 = sadd.s32 %s69, 1
      %s71 = scalar_select %p68, %s69, %s70
      %p74 = pneg %p68
      %p75 = scmp.eq.s32.totalorder %s19, 3
      %p76 = por %p74, %p75
      %p77 = scmp.ne.s32.totalorder %s69, %s72
      %p78 = scmp.eq.s32.totalorder %s19, 0
      %p79 = por %p77, %p78
      %p80 = scmp.ne.s32.totalorder %s69, %s72
      %p81 = scmp.eq.s32.totalorder %s24, 3
      %p82 = por %p80, %p81
      %p83 = scmp.ne.s32.totalorder %s72, %s73
      %p84 = scmp.eq.s32.totalorder %s24, 0
      %p85 = por %p83, %p84
      %p86 = scmp.ne.s32.totalorder %s72, %s73
      %p87 = scmp.eq.s32.totalorder %s25, 3
      %p88 = por %p86, %p87
      %p90 = scmp.ne.s32.totalorder %s73, %s89
      %p91 = scmp.eq.s32.totalorder %s25, 0
      %p92 = por %p90, %p91
      %s94 = sadd.s32 %s93, 1
      %p97 = scmp.eq.s32.totalorder %s19, 3
      %p98 = scmp.ne.s32.totalorder %s93, %s95
      %p99 = scmp.eq.s32.totalorder %s19, 0
      %p100 = por %p98, %p99
      %p101 = scmp.ne.s32.totalorder %s93, %s95
      %p102 = scmp.eq.s32.totalorder %s24, 3
      %p103 = por %p101, %p102
      %p104 = scmp.ne.s32.totalorder %s95, %s96
      %p105 = scmp.eq.s32.totalorder %s24, 0
      %p106 = por %p104, %p105
      %p107 = scmp.ne.s32.totalorder %s95, %s96
      %p108 = scmp.eq.s32.totalorder %s25, 3
      %p109 = por %p107, %p108
      %p111 = scmp.ne.s32.totalorder %s96, %s110
      %p112 = scmp.eq.s32.totalorder %s25, 0
      %p113 = por %p111, %p112
      %s115 = sadd.s32 %s114, 1
      %p118 = scmp.eq.s32.totalorder %s19, 3
      %p119 = scmp.ne.s32.totalorder %s114, %s116
      %p120 = scmp.eq.s32.totalorder %s19, 0
      %p121 = por %p119, %p120
      %p122 = scmp.ne.s32.totalorder %s114, %s116
      %p123 = scmp.eq.s32.totalorder %s24, 3
      %p124 = por %p122, %p123
      %p125 = scmp.ne.s32.totalorder %s116, %s117
      %p126 = scmp.eq.s32.totalorder %s24, 0
      %p127 = por %p125, %p126
      %p128 = scmp.ne.s32.totalorder %s116, %s117
      %p129 = scmp.eq.s32.totalorder %s25, 3
      %p130 = por %p128, %p129
      %p132 = scmp.ne.s32.totalorder %s117, %s131
      %p133 = scmp.eq.s32.totalorder %s25, 0
      %p134 = por %p132, %p133
      %s136 = sadd.s32 %s135, 1
      %p139 = scmp.eq.s32.totalorder %s19, 3
      %p140 = scmp.ne.s32.totalorder %s135, %s137
      %p141 = scmp.eq.s32.totalorder %s19, 0
      %p142 = por %p140, %p141
      %p143 = scmp.ne.s32.totalorder %s135, %s137
      %p144 = scmp.eq.s32.totalorder %s24, 3
      %p145 = por %p143, %p144
      %p146 = scmp.ne.s32.totalorder %s137, %s138
      %p147 = scmp.eq.s32.totalorder %s24, 0
      %p148 = por %p146, %p147
      %p149 = scmp.ne.s32.totalorder %s137, %s138
      %p150 = scmp.eq.s32.totalorder %s25, 3
      %p151 = por %p149, %p150
      %p153 = scmp.ne.s32.totalorder %s138, %s152
      %p154 = scmp.eq.s32.totalorder %s25, 0
      %p155 = por %p153, %p154
      %s157 = sadd.s32 %s156, 1
      %p160 = scmp.eq.s32.totalorder %s19, 3
      %p161 = scmp.ne.s32.totalorder %s156, %s158
      %p162 = scmp.eq.s32.totalorder %s19, 0
      %p163 = por %p161, %p162
      %p164 = scmp.ne.s32.totalorder %s156, %s158
      %p165 = scmp.eq.s32.totalorder %s24, 3
      %p166 = por %p164, %p165
      %p167 = scmp.ne.s32.totalorder %s158, %s159
      %p168 = scmp.eq.s32.totalorder %s24, 0
      %p169 = por %p167, %p168
      %p170 = scmp.ne.s32.totalorder %s158, %s159
      %p171 = scmp.eq.s32.totalorder %s25, 3
      %p172 = por %p170, %p171
      %p174 = scmp.ne.s32.totalorder %s159, %s173
      %p175 = scmp.eq.s32.totalorder %s25, 0
      %p176 = por %p174, %p175
      %s177 = ssub.s32 %s26, %s38
      %p178 = scmp.eq.s32.totalorder %s177, 0
      %s180 = sadd.s32 %s179, 1
      %s181 = scalar_select %p178, %s179, %s180
      %p184 = pneg %p178
      %p185 = scmp.eq.s32.totalorder %s19, 3
      %p186 = por %p184, %p185
      %p187 = scmp.ne.s32.totalorder %s179, %s182
      %p188 = scmp.eq.s32.totalorder %s19, 0
      %p189 = por %p187, %p188
      %p190 = scmp.ne.s32.totalorder %s179, %s182
      %p191 = scmp.eq.s32.totalorder %s24, 3
      %p192 = por %p190, %p191
      %p193 = scmp.ne.s32.totalorder %s182, %s183
      %p194 = scmp.eq.s32.totalorder %s24, 0
      %p195 = por %p193, %p194
      %p196 = scmp.ne.s32.totalorder %s182, %s183
      %p197 = scmp.eq.s32.totalorder %s25, 3
      %p198 = por %p196, %p197
      %p200 = scmp.ne.s32.totalorder %s183, %s199
      %p201 = scmp.eq.s32.totalorder %s25, 0
      %p202 = por %p200, %p201
      %p203 = scmp.le.s32.totalorder 1, %s19
      %p204 = scmp.lt.s32.totalorder %s19, 5
      %p205 = pnand %p203, %p204
      %p206 = pneg %p205
      // Predicated region
      $region9: #{encoder_forward.1} parent=5 // pred_check
        _
      $region10: #{encoder_forward.1} parent=5 // pred_check_branch
        %208 = sbr.rel (%p205) target = $region12
      $region11: #{encoder_forward.1} parent=5 // pred_region
        %s209 = ssub.s32 %s19, 1
        // Predicated region
        $region13: #{encoder_forward.1} parent=11 // pred_check
          %p210 = pneg %p106
        $region14: #{encoder_forward.1} parent=11 // pred_check_branch
          %212 = sbr.rel (%p210) target = $region16
        $region15: #{encoder_forward.1} parent=11 // pred_region
          %s214 = ssub.s32 4096, 4096
          %215 = vsyncadd [#allocation7], %s214
          %s216 = sshll.u32 [#allocation8], 4
          %s217 = int_to_ptr.vmem [resolvable:$true] %s216
          %222 = dma.hbm_to_vmem [thread:$0]  %s2, 4096, %s217, [#allocation7], 64, 64, 4
        $region16: #{encoder_forward.1} parent=11 // pred_fallthru
          _
        // Predicated region
        $region17: #{encoder_forward.1} parent=11 // pred_check
          %p223 = pneg %p127
        $region18: #{encoder_forward.1} parent=11 // pred_check_branch
          %225 = sbr.rel (%p223) target = $region20
        $region19: #{encoder_forward.1} parent=11 // pred_region
          %s227 = ssub.s32 256, 256
          %228 = vsyncadd [#allocation10], %s227
          %s229 = sshll.u32 [#allocation9], 4
          %s230 = int_to_ptr.vmem [resolvable:$true] %s229
          %235 = dma.hbm_to_vmem [thread:$0]  %s3, 256, %s230, [#allocation10], 128, 128, 8
        $region20: #{encoder_forward.1} parent=11 // pred_fallthru
          _
        // Predicated region
        $region21: #{encoder_forward.1} parent=11 // pred_check
          %p236 = pneg %p148
        $region22: #{encoder_forward.1} parent=11 // pred_check_branch
          %238 = sbr.rel (%p236) target = $region24
        $region23: #{encoder_forward.1} parent=11 // pred_region
          %s240 = ssub.s32 1024, 1024
          %241 = vsyncadd [#allocation10], %s240
          %s242 = sshll.u32 [#allocation11], 4
          %s243 = int_to_ptr.vmem [resolvable:$true] %s242
          %248 = dma.hbm_to_vmem [thread:$0]  %s4, 1024, %s243, [#allocation10], 64, 64, 4
        $region24: #{encoder_forward.1} parent=11 // pred_fallthru
          _
        // Predicated region
        $region25: #{encoder_forward.1} parent=11 // pred_check
          %p249 = pneg %p169
        $region26: #{encoder_forward.1} parent=11 // pred_check_branch
          %251 = sbr.rel (%p249) target = $region28
        $region27: #{encoder_forward.1} parent=11 // pred_region
          _
        $region28: #{encoder_forward.1} parent=11 // pred_fallthru
          _
      $region12: #{encoder_forward.1} parent=5 // pred_fallthru
        _
      %p252 = scmp.lt.s32.totalorder %s19, 4
      // Predicated region
      $region29: #{encoder_forward.1} parent=5 // pred_check
        %p253 = pneg %p252
      $region30: #{encoder_forward.1} parent=5 // pred_check_branch
        %255 = sbr.rel (%p253) target = $region32
      $region31: #{encoder_forward.1} parent=5 // pred_region
        // Predicated region
        $region33: #{encoder_forward.1} parent=31 // pred_check
          %p256 = pneg %p53
        $region34: #{encoder_forward.1} parent=31 // pred_check_branch
          %258 = sbr.rel (%p256) target = $region36
        $region35: #{encoder_forward.1} parent=31 // pred_region
          %s259 = sand.u32 %s43, 1
          %s260 = scalar_lea.sflag [#allocation5], %s259
          %s261 = sand.u32 %s43, 1
          %s262 = smul.addr %s261, 512
          %s263 = scalar_lea.vmem [#allocation4], %s262
          %s264 = smul.u32 16, %s26
          %s265 = smul.u32 4, %s27
          %s267 = ssub.s32 8192, 8192
          %268 = vsyncadd %s260, %s267
          %s269 = smul.addr %s264, 8
          %s270 = sadd.s32 %s265, %s269
          %s271 = smul.addr %s270, 128
          %s272 = scalar_lea.hbm %s0, %s271
          %s273 = sshll.u32 %s263, 4
          %s274 = int_to_ptr.vmem [resolvable:$true] %s273
          %279 = dma.hbm_to_vmem [thread:$0]  %s272, 8192, %s274, %s260, 1024, 512, 32
        $region36: #{encoder_forward.1} parent=31 // pred_fallthru
          _
        // Predicated region
        $region37: #{encoder_forward.1} parent=31 // pred_check
          %p280 = pneg %p79
        $region38: #{encoder_forward.1} parent=31 // pred_check_branch
          %282 = sbr.rel (%p280) target = $region40
        $region39: #{encoder_forward.1} parent=31 // pred_region
          %s283 = sand.u32 %s19, 1
          %s284 = scalar_lea.sflag [#allocation7], %s283
          %s285 = sand.u32 %s69, 1
          %s286 = smul.addr %s285, 256
          %s287 = scalar_lea.vmem [#allocation6], %s286
          %s288 = smul.u32 64, %s27
          %s290 = ssub.s32 4096, 4096
          %291 = vsyncadd %s284, %s290
          %s292 = smul.addr %s288, 64
          %s293 = scalar_lea.hbm %s1, %s292
          %s294 = sshll.u32 %s287, 4
          %s295 = int_to_ptr.vmem [resolvable:$true] %s294
          %300 = dma.hbm_to_vmem [thread:$0]  %s293, 4096, %s295, %s284, 64, 64, 4
        $region40: #{encoder_forward.1} parent=31 // pred_fallthru
          _
      $region32: #{encoder_forward.1} parent=5 // pred_fallthru
        _
      %p301 = scmp.le.s32.totalorder 1, %s19
      %p302 = scmp.lt.s32.totalorder %s19, 5
      %p303 = pnand %p301, %p302
      %p304 = pneg %p303
      // Predicated region
      $region41: #{encoder_forward.1} parent=5 // pred_check
        _
      $region42: #{encoder_forward.1} parent=5 // pred_check_branch
        %306 = sbr.rel (%p303) target = $region44
      $region43: #{encoder_forward.1} parent=5 // pred_region
        %s307 = ssub.s32 %s19, 1
        %s308 = sand.u32 %s46, 1
        %s309 = scalar_lea.sflag [#allocation5], %s308
        %s310 = sand.u32 %s46, 1
        %s311 = smul.addr %s310, 512
        %s312 = scalar_lea.vmem [#allocation4], %s311
        // Predicated region
        $region45: #{encoder_forward.1} parent=43 // pred_check
          %p313 = pneg %p59
        $region46: #{encoder_forward.1} parent=43 // pred_check_branch
          %315 = sbr.rel (%p313) target = $region48
        $region47: #{encoder_forward.1} parent=43 // pred_region
          %316 = dma.done %s309, 8192
        $region48: #{encoder_forward.1} parent=43 // pred_fallthru
          _
        %s317 = sand.u32 %s24, 1
        %s318 = scalar_lea.sflag [#allocation7], %s317
        %s319 = sand.u32 %s72, 1
        %s320 = smul.addr %s319, 256
        %s321 = scalar_lea.vmem [#allocation6], %s320
        // Predicated region
        $region49: #{encoder_forward.1} parent=43 // pred_check
          %p322 = pneg %p85
        $region50: #{encoder_forward.1} parent=43 // pred_check_branch
          %324 = sbr.rel (%p322) target = $region52
        $region51: #{encoder_forward.1} parent=43 // pred_region
          %325 = dma.done %s318, 4096
        $region52: #{encoder_forward.1} parent=43 // pred_fallthru
          _
        // Predicated region
        $region53: #{encoder_forward.1} parent=43 // pred_check
          %p326 = pneg %p106
        $region54: #{encoder_forward.1} parent=43 // pred_check_branch
          %328 = sbr.rel (%p326) target = $region56
        $region55: #{encoder_forward.1} parent=43 // pred_region
          %329 = dma.done [#allocation7], 4096
        $region56: #{encoder_forward.1} parent=43 // pred_fallthru
          _
        // Predicated region
        $region57: #{encoder_forward.1} parent=43 // pred_check
          %p330 = pneg %p127
        $region58: #{encoder_forward.1} parent=43 // pred_check_branch
          %332 = sbr.rel (%p330) target = $region60
        $region59: #{encoder_forward.1} parent=43 // pred_region
          %333 = dma.done [#allocation10], 256
        $region60: #{encoder_forward.1} parent=43 // pred_fallthru
          _
        // Predicated region
        $region61: #{encoder_forward.1} parent=43 // pred_check
          %p334 = pneg %p148
        $region62: #{encoder_forward.1} parent=43 // pred_check_branch
          %336 = sbr.rel (%p334) target = $region64
        $region63: #{encoder_forward.1} parent=43 // pred_region
          %337 = dma.done [#allocation10], 1024
        $region64: #{encoder_forward.1} parent=43 // pred_fallthru
          _
        %s338 = sand.u32 %s46, 1
        %s339 = scalar_lea.sflag [#allocation5], %s338
        %s340 = sand.u32 %s46, 1
        %s341 = smul.addr %s340, 512
        %s342 = scalar_lea.vmem [#allocation4], %s341
        %p343 = pneg %p59
        %p344 = pneg %p56
        %s345 = sand.u32 %s24, 1
        %s346 = scalar_lea.sflag [#allocation7], %s345
        %s347 = sand.u32 %s72, 1
        %s348 = smul.addr %s347, 256
        %s349 = scalar_lea.vmem [#allocation6], %s348
        %p350 = pneg %p85
        %p351 = pneg %p82
        %p352 = pneg %p106
        %p353 = pneg %p103
        %p354 = pneg %p127
        %p355 = pneg %p124
        %p356 = pneg %p148
        %p357 = pneg %p145
        %p358 = pneg %p169
        %p359 = pneg %p166
        %p360 = pneg %p195
        %p361 = pneg %p192
        %s362 = smul.u32 16, %s28
        %p363 = scmp.lt.s32.totalorder %s362, 31
        %s364 = scalar_select %p363, %s362, 31
        %s365 = smul.addr %s364, 8
        %s366 = scalar_lea.vmem %s6, %s365
        %s367 = smul.u32 16, %s28
        %s368 = smul.u32 4, %s29
        %s369 = smul.u32 64, %s29
        %s370 = smul.u32 16, %s28
        %p371 = scmp.lt.s32.totalorder %s370, 31
        %s372 = scalar_select %p371, %s370, 31
        %s373 = smul.addr %s372, 8
        %s374 = scalar_lea.vmem %s6, %s373
        %s375 = smul.u32 16, %s28
        %p377 = scmp.eq.s32.totalorder %s29, 0
        // Predicated region
        $region65: #{encoder_forward.1} parent=43 // pred_check
          %p378 = pneg %p377
        $region66: #{encoder_forward.1} parent=43 // pred_check_branch
          %380 = sbr.rel (%p378) target = $region68
        $region67: #{encoder_forward.1} parent=43 // pred_region
          %381 = vst [vmem:[#allocation2] sm:$0xff] 0.0
          %382 = vst [vmem:[#allocation2 + $0x8] sm:$0xff] 0.0
          %383 = vst [vmem:[#allocation2 + $0x10] sm:$0xff] 0.0
          %384 = vst [vmem:[#allocation2 + $0x18] sm:$0xff] 0.0
          %385 = vst [vmem:[#allocation2 + $0x20] sm:$0xff] 0.0
          %386 = vst [vmem:[#allocation2 + $0x28] sm:$0xff] 0.0
          %387 = vst [vmem:[#allocation2 + $0x30] sm:$0xff] 0.0
          %388 = vst [vmem:[#allocation2 + $0x38] sm:$0xff] 0.0
          %389 = vst [vmem:[#allocation2 + $0x40] sm:$0xff] 0.0
          %390 = vst [vmem:[#allocation2 + $0x48] sm:$0xff] 0.0
          %391 = vst [vmem:[#allocation2 + $0x50] sm:$0xff] 0.0
          %392 = vst [vmem:[#allocation2 + $0x58] sm:$0xff] 0.0
          %393 = vst [vmem:[#allocation2 + $0x60] sm:$0xff] 0.0
          %394 = vst [vmem:[#allocation2 + $0x68] sm:$0xff] 0.0
          %395 = vst [vmem:[#allocation2 + $0x70] sm:$0xff] 0.0
          %396 = vst [vmem:[#allocation2 + $0x78] sm:$0xff] 0.0
          %397 = vst [vmem:[#allocation3] sm:$0xff] 0.0
          %398 = vst [vmem:[#allocation3 + $0x8] sm:$0xff] 0.0
          %399 = vst [vmem:[#allocation3 + $0x10] sm:$0xff] 0.0
          %400 = vst [vmem:[#allocation3 + $0x18] sm:$0xff] 0.0
          %401 = vst [vmem:[#allocation3 + $0x20] sm:$0xff] 0.0
          %402 = vst [vmem:[#allocation3 + $0x28] sm:$0xff] 0.0
          %403 = vst [vmem:[#allocation3 + $0x30] sm:$0xff] 0.0
          %404 = vst [vmem:[#allocation3 + $0x38] sm:$0xff] 0.0
          %405 = vst [vmem:[#allocation3 + $0x40] sm:$0xff] 0.0
          %406 = vst [vmem:[#allocation3 + $0x48] sm:$0xff] 0.0
          %407 = vst [vmem:[#allocation3 + $0x50] sm:$0xff] 0.0
          %408 = vst [vmem:[#allocation3 + $0x58] sm:$0xff] 0.0
          %409 = vst [vmem:[#allocation3 + $0x60] sm:$0xff] 0.0
          %410 = vst [vmem:[#allocation3 + $0x68] sm:$0xff] 0.0
          %411 = vst [vmem:[#allocation3 + $0x70] sm:$0xff] 0.0
          %412 = vst [vmem:[#allocation3 + $0x78] sm:$0xff] 0.0
        $region68: #{encoder_forward.1} parent=43 // pred_fallthru
          _
        %v413 = vld [vmem:[%s312] sm:$0xff]
        %v414 = vld [vmem:[%s312 + $0x8] sm:$0xff]
        %v415 = vld [vmem:[%s312 + $0x10] sm:$0xff]
        %v416 = vld [vmem:[%s312 + $0x18] sm:$0xff]
        %v417 = vld [vmem:[%s312 + $0x20] sm:$0xff]
        %v418 = vld [vmem:[%s312 + $0x28] sm:$0xff]
        %v419 = vld [vmem:[%s312 + $0x30] sm:$0xff]
        %v420 = vld [vmem:[%s312 + $0x38] sm:$0xff]
        %v421 = vld [vmem:[%s312 + $0x40] sm:$0xff]
        %v422 = vld [vmem:[%s312 + $0x48] sm:$0xff]
        %v423 = vld [vmem:[%s312 + $0x50] sm:$0xff]
        %v424 = vld [vmem:[%s312 + $0x58] sm:$0xff]
        %v425 = vld [vmem:[%s312 + $0x60] sm:$0xff]
        %v426 = vld [vmem:[%s312 + $0x68] sm:$0xff]
        %v427 = vld [vmem:[%s312 + $0x70] sm:$0xff]
        %v428 = vld [vmem:[%s312 + $0x78] sm:$0xff]
        %v429 = vld [vmem:[%s312 + $0x80] sm:$0xff]
        %v430 = vld [vmem:[%s312 + $0x88] sm:$0xff]
        %v431 = vld [vmem:[%s312 + $0x90] sm:$0xff]
        %v432 = vld [vmem:[%s312 + $0x98] sm:$0xff]
        %v433 = vld [vmem:[%s312 + $0xa0] sm:$0xff]
        %v434 = vld [vmem:[%s312 + $0xa8] sm:$0xff]
        %v435 = vld [vmem:[%s312 + $0xb0] sm:$0xff]
        %v436 = vld [vmem:[%s312 + $0xb8] sm:$0xff]
        %v437 = vld [vmem:[%s312 + $0xc0] sm:$0xff]
        %v438 = vld [vmem:[%s312 + $0xc8] sm:$0xff]
        %v439 = vld [vmem:[%s312 + $0xd0] sm:$0xff]
        %v440 = vld [vmem:[%s312 + $0xd8] sm:$0xff]
        %v441 = vld [vmem:[%s312 + $0xe0] sm:$0xff]
        %v442 = vld [vmem:[%s312 + $0xe8] sm:$0xff]
        %v443 = vld [vmem:[%s312 + $0xf0] sm:$0xff]
        %v444 = vld [vmem:[%s312 + $0xf8] sm:$0xff]
        %v445 = vld [vmem:[%s312 + $0x100] sm:$0xff]
        %v446 = vld [vmem:[%s312 + $0x108] sm:$0xff]
        %v447 = vld [vmem:[%s312 + $0x110] sm:$0xff]
        %v448 = vld [vmem:[%s312 + $0x118] sm:$0xff]
        %v449 = vld [vmem:[%s312 + $0x120] sm:$0xff]
        %v450 = vld [vmem:[%s312 + $0x128] sm:$0xff]
        %v451 = vld [vmem:[%s312 + $0x130] sm:$0xff]
        %v452 = vld [vmem:[%s312 + $0x138] sm:$0xff]
        %v453 = vld [vmem:[%s312 + $0x140] sm:$0xff]
        %v454 = vld [vmem:[%s312 + $0x148] sm:$0xff]
        %v455 = vld [vmem:[%s312 + $0x150] sm:$0xff]
        %v456 = vld [vmem:[%s312 + $0x158] sm:$0xff]
        %v457 = vld [vmem:[%s312 + $0x160] sm:$0xff]
        %v458 = vld [vmem:[%s312 + $0x168] sm:$0xff]
        %v459 = vld [vmem:[%s312 + $0x170] sm:$0xff]
        %v460 = vld [vmem:[%s312 + $0x178] sm:$0xff]
        %v461 = vld [vmem:[%s312 + $0x180] sm:$0xff]
        %v462 = vld [vmem:[%s312 + $0x188] sm:$0xff]
        %v463 = vld [vmem:[%s312 + $0x190] sm:$0xff]
        %v464 = vld [vmem:[%s312 + $0x198] sm:$0xff]
        %v465 = vld [vmem:[%s312 + $0x1a0] sm:$0xff]
        %v466 = vld [vmem:[%s312 + $0x1a8] sm:$0xff]
        %v467 = vld [vmem:[%s312 + $0x1b0] sm:$0xff]
        %v468 = vld [vmem:[%s312 + $0x1b8] sm:$0xff]
        %v469 = vld [vmem:[%s312 + $0x1c0] sm:$0xff]
        %v470 = vld [vmem:[%s312 + $0x1c8] sm:$0xff]
        %v471 = vld [vmem:[%s312 + $0x1d0] sm:$0xff]
        %v472 = vld [vmem:[%s312 + $0x1d8] sm:$0xff]
        %v473 = vld [vmem:[%s312 + $0x1e0] sm:$0xff]
        %v474 = vld [vmem:[%s312 + $0x1e8] sm:$0xff]
        %v475 = vld [vmem:[%s312 + $0x1f0] sm:$0xff]
        %v476 = vld [vmem:[%s312 + $0x1f8] sm:$0xff]
        %v477 = vmul.f32 %v413, %v413
        %v478 = vmul.f32 %v414, %v414
        %v479 = vmul.f32 %v415, %v415
        %v480 = vmul.f32 %v416, %v416
        %v481 = vmul.f32 %v417, %v417
        %v482 = vmul.f32 %v418, %v418
        %v483 = vmul.f32 %v419, %v419
        %v484 = vmul.f32 %v420, %v420
        %v485 = vmul.f32 %v421, %v421
        %v486 = vmul.f32 %v422, %v422
        %v487 = vmul.f32 %v423, %v423
        %v488 = vmul.f32 %v424, %v424
        %v489 = vmul.f32 %v425, %v425
        %v490 = vmul.f32 %v426, %v426
        %v491 = vmul.f32 %v427, %v427
        %v492 = vmul.f32 %v428, %v428
        %v493 = vmul.f32 %v429, %v429
        %v494 = vmul.f32 %v430, %v430
        %v495 = vmul.f32 %v431, %v431
        %v496 = vmul.f32 %v432, %v432
        %v497 = vmul.f32 %v433, %v433
        %v498 = vmul.f32 %v434, %v434
        %v499 = vmul.f32 %v435, %v435
        %v500 = vmul.f32 %v436, %v436
        %v501 = vmul.f32 %v437, %v437
        %v502 = vmul.f32 %v438, %v438
        %v503 = vmul.f32 %v439, %v439
        %v504 = vmul.f32 %v440, %v440
        %v505 = vmul.f32 %v441, %v441
        %v506 = vmul.f32 %v442, %v442
        %v507 = vmul.f32 %v443, %v443
        %v508 = vmul.f32 %v444, %v444
        %v509 = vmul.f32 %v445, %v445
        %v510 = vmul.f32 %v446, %v446
        %v511 = vmul.f32 %v447, %v447
        %v512 = vmul.f32 %v448, %v448
        %v513 = vmul.f32 %v449, %v449
        %v514 = vmul.f32 %v450, %v450
        %v515 = vmul.f32 %v451, %v451
        %v516 = vmul.f32 %v452, %v452
        %v517 = vmul.f32 %v453, %v453
        %v518 = vmul.f32 %v454, %v454
        %v519 = vmul.f32 %v455, %v455
        %v520 = vmul.f32 %v456, %v456
        %v521 = vmul.f32 %v457, %v457
        %v522 = vmul.f32 %v458, %v458
        %v523 = vmul.f32 %v459, %v459
        %v524 = vmul.f32 %v460, %v460
        %v525 = vmul.f32 %v461, %v461
        %v526 = vmul.f32 %v462, %v462
        %v527 = vmul.f32 %v463, %v463
        %v528 = vmul.f32 %v464, %v464
        %v529 = vmul.f32 %v465, %v465
        %v530 = vmul.f32 %v466, %v466
        %v531 = vmul.f32 %v467, %v467
        %v532 = vmul.f32 %v468, %v468
        %v533 = vmul.f32 %v469, %v469
        %v534 = vmul.f32 %v470, %v470
        %v535 = vmul.f32 %v471, %v471
        %v536 = vmul.f32 %v472, %v472
        %v537 = vmul.f32 %v473, %v473
        %v538 = vmul.f32 %v474, %v474
        %v539 = vmul.f32 %v475, %v475
        %v540 = vmul.f32 %v476, %v476
        %v541 = vld [vmem:[#allocation3] sm:$0xff]
        %v542 = vld [vmem:[#allocation3 + $0x8] sm:$0xff]
        %v543 = vld [vmem:[#allocation3 + $0x10] sm:$0xff]
        %v544 = vld [vmem:[#allocation3 + $0x18] sm:$0xff]
        %v545 = vld [vmem:[#allocation3 + $0x20] sm:$0xff]
        %v546 = vld [vmem:[#allocation3 + $0x28] sm:$0xff]
        %v547 = vld [vmem:[#allocation3 + $0x30] sm:$0xff]
        %v548 = vld [vmem:[#allocation3 + $0x38] sm:$0xff]
        %v549 = vld [vmem:[#allocation3 + $0x40] sm:$0xff]
        %v550 = vld [vmem:[#allocation3 + $0x48] sm:$0xff]
        %v551 = vld [vmem:[#allocation3 + $0x50] sm:$0xff]
        %v552 = vld [vmem:[#allocation3 + $0x58] sm:$0xff]
        %v553 = vld [vmem:[#allocation3 + $0x60] sm:$0xff]
        %v554 = vld [vmem:[#allocation3 + $0x68] sm:$0xff]
        %v555 = vld [vmem:[#allocation3 + $0x70] sm:$0xff]
        %v556 = vld [vmem:[#allocation3 + $0x78] sm:$0xff]
        %v557 = vadd.f32 %v541, %v477
        %v558 = vadd.f32 %v542, %v481
        %v559 = vadd.f32 %v543, %v485
        %v560 = vadd.f32 %v544, %v489
        %v561 = vadd.f32 %v545, %v493
        %v562 = vadd.f32 %v546, %v497
        %v563 = vadd.f32 %v547, %v501
        %v564 = vadd.f32 %v548, %v505
        %v565 = vadd.f32 %v549, %v509
        %v566 = vadd.f32 %v550, %v513
        %v567 = vadd.f32 %v551, %v517
        %v568 = vadd.f32 %v552, %v521
        %v569 = vadd.f32 %v553, %v525
        %v570 = vadd.f32 %v554, %v529
        %v571 = vadd.f32 %v555, %v533
        %v572 = vadd.f32 %v556, %v537
        %v573 = vadd.f32 %v557, %v478
        %v574 = vadd.f32 %v558, %v482
        %v575 = vadd.f32 %v559, %v486
        %v576 = vadd.f32 %v560, %v490
        %v577 = vadd.f32 %v561, %v494
        %v578 = vadd.f32 %v562, %v498
        %v579 = vadd.f32 %v563, %v502
        %v580 = vadd.f32 %v564, %v506
        %v581 = vadd.f32 %v565, %v510
        %v582 = vadd.f32 %v566, %v514
        %v583 = vadd.f32 %v567, %v518
        %v584 = vadd.f32 %v568, %v522
        %v585 = vadd.f32 %v569, %v526
        %v586 = vadd.f32 %v570, %v530
        %v587 = vadd.f32 %v571, %v534
        %v588 = vadd.f32 %v572, %v538
        %v589 = vadd.f32 %v573, %v479
        %v590 = vadd.f32 %v574, %v483
        %v591 = vadd.f32 %v575, %v487
        %v592 = vadd.f32 %v576, %v491
        %v593 = vadd.f32 %v577, %v495
        %v594 = vadd.f32 %v578, %v499
        %v595 = vadd.f32 %v579, %v503
        %v596 = vadd.f32 %v580, %v507
        %v597 = vadd.f32 %v581, %v511
        %v598 = vadd.f32 %v582, %v515
        %v599 = vadd.f32 %v583, %v519
        %v600 = vadd.f32 %v584, %v523
        %v601 = vadd.f32 %v585, %v527
        %v602 = vadd.f32 %v586, %v531
        %v603 = vadd.f32 %v587, %v535
        %v604 = vadd.f32 %v588, %v539
        %v605 = vadd.f32 %v589, %v480
        %v606 = vadd.f32 %v590, %v484
        %v607 = vadd.f32 %v591, %v488
        %v608 = vadd.f32 %v592, %v492
        %v609 = vadd.f32 %v593, %v496
        %v610 = vadd.f32 %v594, %v500
        %v611 = vadd.f32 %v595, %v504
        %v612 = vadd.f32 %v596, %v508
        %v613 = vadd.f32 %v597, %v512
        %v614 = vadd.f32 %v598, %v516
        %v615 = vadd.f32 %v599, %v520
        %v616 = vadd.f32 %v600, %v524
        %v617 = vadd.f32 %v601, %v528
        %v618 = vadd.f32 %v602, %v532
        %v619 = vadd.f32 %v603, %v536
        %v620 = vadd.f32 %v604, %v540
        %621 = vst [vmem:[#allocation3] sm:$0xff] %v605
        %622 = vst [vmem:[#allocation3 + $0x8] sm:$0xff] %v606
        %623 = vst [vmem:[#allocation3 + $0x10] sm:$0xff] %v607
        %624 = vst [vmem:[#allocation3 + $0x18] sm:$0xff] %v608
        %625 = vst [vmem:[#allocation3 + $0x20] sm:$0xff] %v609
        %626 = vst [vmem:[#allocation3 + $0x28] sm:$0xff] %v610
        %627 = vst [vmem:[#allocation3 + $0x30] sm:$0xff] %v611
        %628 = vst [vmem:[#allocation3 + $0x38] sm:$0xff] %v612
        %629 = vst [vmem:[#allocation3 + $0x40] sm:$0xff] %v613
        %630 = vst [vmem:[#allocation3 + $0x48] sm:$0xff] %v614
        %631 = vst [vmem:[#allocation3 + $0x50] sm:$0xff] %v615
        %632 = vst [vmem:[#allocation3 + $0x58] sm:$0xff] %v616
        %633 = vst [vmem:[#allocation3 + $0x60] sm:$0xff] %v617
        %634 = vst [vmem:[#allocation3 + $0x68] sm:$0xff] %v618
        %635 = vst [vmem:[#allocation3 + $0x70] sm:$0xff] %v619
        %636 = vst [vmem:[#allocation3 + $0x78] sm:$0xff] %v620
        %v637 = vld [vmem:[#allocation2] sm:$0xff]
        %v638 = vld [vmem:[#allocation2 + $0x8] sm:$0xff]
        %v639 = vld [vmem:[#allocation2 + $0x10] sm:$0xff]
        %v640 = vld [vmem:[#allocation2 + $0x18] sm:$0xff]
        %v641 = vld [vmem:[#allocation2 + $0x20] sm:$0xff]
        %v642 = vld [vmem:[#allocation2 + $0x28] sm:$0xff]
        %v643 = vld [vmem:[#allocation2 + $0x30] sm:$0xff]
        %v644 = vld [vmem:[#allocation2 + $0x38] sm:$0xff]
        %v645 = vld [vmem:[#allocation2 + $0x40] sm:$0xff]
        %v646 = vld [vmem:[#allocation2 + $0x48] sm:$0xff]
        %v647 = vld [vmem:[#allocation2 + $0x50] sm:$0xff]
        %v648 = vld [vmem:[#allocation2 + $0x58] sm:$0xff]
        %v649 = vld [vmem:[#allocation2 + $0x60] sm:$0xff]
        %v650 = vld [vmem:[#allocation2 + $0x68] sm:$0xff]
        %v651 = vld [vmem:[#allocation2 + $0x70] sm:$0xff]
        %v652 = vld [vmem:[#allocation2 + $0x78] sm:$0xff]
        %v653 = vpack.c.bf16 %v417, %v413
        %v654 = vpack.c.bf16 %v418, %v414
        %v655 = vpack.c.bf16 %v419, %v415
        %v656 = vpack.c.bf16 %v420, %v416
        %v657 = vpack.c.bf16 %v425, %v421
        %v658 = vpack.c.bf16 %v426, %v422
        %v659 = vpack.c.bf16 %v427, %v423
        %v660 = vpack.c.bf16 %v428, %v424
        %v661 = vpack.c.bf16 %v433, %v429
        %v662 = vpack.c.bf16 %v434, %v430
        %v663 = vpack.c.bf16 %v435, %v431
        %v664 = vpack.c.bf16 %v436, %v432
        %v665 = vpack.c.bf16 %v441, %v437
        %v666 = vpack.c.bf16 %v442, %v438
        %v667 = vpack.c.bf16 %v443, %v439
        %v668 = vpack.c.bf16 %v444, %v440
        %v669 = vpack.c.bf16 %v449, %v445
        %v670 = vpack.c.bf16 %v450, %v446
        %v671 = vpack.c.bf16 %v451, %v447
        %v672 = vpack.c.bf16 %v452, %v448
        %v673 = vpack.c.bf16 %v457, %v453
        %v674 = vpack.c.bf16 %v458, %v454
        %v675 = vpack.c.bf16 %v459, %v455
        %v676 = vpack.c.bf16 %v460, %v456
        %v677 = vpack.c.bf16 %v465, %v461
        %v678 = vpack.c.bf16 %v466, %v462
        %v679 = vpack.c.bf16 %v467, %v463
        %v680 = vpack.c.bf16 %v468, %v464
        %v681 = vpack.c.bf16 %v473, %v469
        %v682 = vpack.c.bf16 %v474, %v470
        %v683 = vpack.c.bf16 %v475, %v471
        %v684 = vpack.c.bf16 %v476, %v472
        %v685 = vld [vmem:[%s321] sm:$0xf]
        %v686 = vld [vmem:[%s321 + $0x4] sm:$0xf]
        %v687 = vld [vmem:[%s321 + $0x8] sm:$0xf]
        %v688 = vld [vmem:[%s321 + $0xc] sm:$0xf]
        %v689 = vld [vmem:[%s321 + $0x10] sm:$0xf]
        %v690 = vld [vmem:[%s321 + $0x14] sm:$0xf]
        %v691 = vld [vmem:[%s321 + $0x18] sm:$0xf]
        %v692 = vld [vmem:[%s321 + $0x1c] sm:$0xf]
        %v693 = vld [vmem:[%s321 + $0x20] sm:$0xf]
        %v694 = vld [vmem:[%s321 + $0x24] sm:$0xf]
        %v695 = vld [vmem:[%s321 + $0x28] sm:$0xf]
        %v696 = vld [vmem:[%s321 + $0x2c] sm:$0xf]
        %v697 = vld [vmem:[%s321 + $0x30] sm:$0xf]
        %v698 = vld [vmem:[%s321 + $0x34] sm:$0xf]
        %v699 = vld [vmem:[%s321 + $0x38] sm:$0xf]
        %v700 = vld [vmem:[%s321 + $0x3c] sm:$0xf]
        %v701 = vld [vmem:[%s321 + $0x40] sm:$0xf]
        %v702 = vld [vmem:[%s321 + $0x44] sm:$0xf]
        %v703 = vld [vmem:[%s321 + $0x48] sm:$0xf]
        %v704 = vld [vmem:[%s321 + $0x4c] sm:$0xf]
        %v705 = vld [vmem:[%s321 + $0x50] sm:$0xf]
        %v706 = vld [vmem:[%s321 + $0x54] sm:$0xf]
        %v707 = vld [vmem:[%s321 + $0x58] sm:$0xf]
        %v708 = vld [vmem:[%s321 + $0x5c] sm:$0xf]
        %v709 = vld [vmem:[%s321 + $0x60] sm:$0xf]
        %v710 = vld [vmem:[%s321 + $0x64] sm:$0xf]
        %v711 = vld [vmem:[%s321 + $0x68] sm:$0xf]
        %v712 = vld [vmem:[%s321 + $0x6c] sm:$0xf]
        %v713 = vld [vmem:[%s321 + $0x70] sm:$0xf]
        %v714 = vld [vmem:[%s321 + $0x74] sm:$0xf]
        %v715 = vld [vmem:[%s321 + $0x78] sm:$0xf]
        %v716 = vld [vmem:[%s321 + $0x7c] sm:$0xf]
        %v717 = vld [vmem:[%s321 + $0x80] sm:$0xf]
        %v718 = vld [vmem:[%s321 + $0x84] sm:$0xf]
        %v719 = vld [vmem:[%s321 + $0x88] sm:$0xf]
        %v720 = vld [vmem:[%s321 + $0x8c] sm:$0xf]
        %v721 = vld [vmem:[%s321 + $0x90] sm:$0xf]
        %v722 = vld [vmem:[%s321 + $0x94] sm:$0xf]
        %v723 = vld [vmem:[%s321 + $0x98] sm:$0xf]
        %v724 = vld [vmem:[%s321 + $0x9c] sm:$0xf]
        %v725 = vld [vmem:[%s321 + $0xa0] sm:$0xf]
        %v726 = vld [vmem:[%s321 + $0xa4] sm:$0xf]
        %v727 = vld [vmem:[%s321 + $0xa8] sm:$0xf]
        %v728 = vld [vmem:[%s321 + $0xac] sm:$0xf]
        %v729 = vld [vmem:[%s321 + $0xb0] sm:$0xf]
        %v730 = vld [vmem:[%s321 + $0xb4] sm:$0xf]
        %v731 = vld [vmem:[%s321 + $0xb8] sm:$0xf]
        %v732 = vld [vmem:[%s321 + $0xbc] sm:$0xf]
        %v733 = vld [vmem:[%s321 + $0xc0] sm:$0xf]
        %v734 = vld [vmem:[%s321 + $0xc4] sm:$0xf]
        %v735 = vld [vmem:[%s321 + $0xc8] sm:$0xf]
        %v736 = vld [vmem:[%s321 + $0xcc] sm:$0xf]
        %v737 = vld [vmem:[%s321 + $0xd0] sm:$0xf]
        %v738 = vld [vmem:[%s321 + $0xd4] sm:$0xf]
        %v739 = vld [vmem:[%s321 + $0xd8] sm:$0xf]
        %v740 = vld [vmem:[%s321 + $0xdc] sm:$0xf]
        %v741 = vld [vmem:[%s321 + $0xe0] sm:$0xf]
        %v742 = vld [vmem:[%s321 + $0xe4] sm:$0xf]
        %v743 = vld [vmem:[%s321 + $0xe8] sm:$0xf]
        %v744 = vld [vmem:[%s321 + $0xec] sm:$0xf]
        %v745 = vld [vmem:[%s321 + $0xf0] sm:$0xf]
        %v746 = vld [vmem:[%s321 + $0xf4] sm:$0xf]
        %v747 = vld [vmem:[%s321 + $0xf8] sm:$0xf]
        %v748 = vld [vmem:[%s321 + $0xfc] sm:$0xf]
        %v813 = vunpack.c.l.b16 %v685
        %v814 = vunpack.c.l.b16 %v686
        %v815 = vunpack.c.l.b16 %v687
        %v816 = vunpack.c.l.b16 %v688
        %v817 = vunpack.c.l.b16 %v689
        %v818 = vunpack.c.l.b16 %v690
        %v819 = vunpack.c.l.b16 %v691
        %v820 = vunpack.c.l.b16 %v692
        %v821 = vunpack.c.l.b16 %v693
        %v822 = vunpack.c.l.b16 %v694
        %v823 = vunpack.c.l.b16 %v695
        %v824 = vunpack.c.l.b16 %v696
        %v825 = vunpack.c.l.b16 %v697
        %v826 = vunpack.c.l.b16 %v698
        %v827 = vunpack.c.l.b16 %v699
        %v828 = vunpack.c.l.b16 %v700
        %v829 = vunpack.c.l.b16 %v701
        %v830 = vunpack.c.l.b16 %v702
        %v831 = vunpack.c.l.b16 %v703
        %v832 = vunpack.c.l.b16 %v704
        %v833 = vunpack.c.l.b16 %v705
        %v834 = vunpack.c.l.b16 %v706
        %v835 = vunpack.c.l.b16 %v707
        %v836 = vunpack.c.l.b16 %v708
        %v837 = vunpack.c.l.b16 %v709
        %v838 = vunpack.c.l.b16 %v710
        %v839 = vunpack.c.l.b16 %v711
        %v840 = vunpack.c.l.b16 %v712
        %v841 = vunpack.c.l.b16 %v713
        %v842 = vunpack.c.l.b16 %v714
        %v843 = vunpack.c.l.b16 %v715
        %v844 = vunpack.c.l.b16 %v716
        %v845 = vunpack.c.l.b16 %v717
        %v846 = vunpack.c.l.b16 %v718
        %v847 = vunpack.c.l.b16 %v719
        %v848 = vunpack.c.l.b16 %v720
        %v849 = vunpack.c.l.b16 %v721
        %v850 = vunpack.c.l.b16 %v722
        %v851 = vunpack.c.l.b16 %v723
        %v852 = vunpack.c.l.b16 %v724
        %v853 = vunpack.c.l.b16 %v725
        %v854 = vunpack.c.l.b16 %v726
        %v855 = vunpack.c.l.b16 %v727
        %v856 = vunpack.c.l.b16 %v728
        %v857 = vunpack.c.l.b16 %v729
        %v858 = vunpack.c.l.b16 %v730
        %v859 = vunpack.c.l.b16 %v731
        %v860 = vunpack.c.l.b16 %v732
        %v861 = vunpack.c.l.b16 %v733
        %v862 = vunpack.c.l.b16 %v734
        %v863 = vunpack.c.l.b16 %v735
        %v864 = vunpack.c.l.b16 %v736
        %v865 = vunpack.c.l.b16 %v737
        %v866 = vunpack.c.l.b16 %v738
        %v867 = vunpack.c.l.b16 %v739
        %v868 = vunpack.c.l.b16 %v740
        %v869 = vunpack.c.l.b16 %v741
        %v870 = vunpack.c.l.b16 %v742
        %v871 = vunpack.c.l.b16 %v743
        %v872 = vunpack.c.l.b16 %v744
        %v873 = vunpack.c.l.b16 %v745
        %v874 = vunpack.c.l.b16 %v746
        %v875 = vunpack.c.l.b16 %v747
        %v876 = vunpack.c.l.b16 %v748
        %v877 = vpack.c.b16 %v814, %v813
        %v878 = vpack.c.b16 %v816, %v815
        %v879 = vpack.c.b16 %v818, %v817
        %v880 = vpack.c.b16 %v820, %v819
        %v881 = vpack.c.b16 %v822, %v821
        %v882 = vpack.c.b16 %v824, %v823
        %v883 = vpack.c.b16 %v826, %v825
        %v884 = vpack.c.b16 %v828, %v827
        %v885 = vpack.c.b16 %v830, %v829
        %v886 = vpack.c.b16 %v832, %v831
        %v887 = vpack.c.b16 %v834, %v833
        %v888 = vpack.c.b16 %v836, %v835
        %v889 = vpack.c.b16 %v838, %v837
        %v890 = vpack.c.b16 %v840, %v839
        %v891 = vpack.c.b16 %v842, %v841
        %v892 = vpack.c.b16 %v844, %v843
        %v893 = vpack.c.b16 %v846, %v845
        %v894 = vpack.c.b16 %v848, %v847
        %v895 = vpack.c.b16 %v850, %v849
        %v896 = vpack.c.b16 %v852, %v851
        %v897 = vpack.c.b16 %v854, %v853
        %v898 = vpack.c.b16 %v856, %v855
        %v899 = vpack.c.b16 %v858, %v857
        %v900 = vpack.c.b16 %v860, %v859
        %v901 = vpack.c.b16 %v862, %v861
        %v902 = vpack.c.b16 %v864, %v863
        %v903 = vpack.c.b16 %v866, %v865
        %v904 = vpack.c.b16 %v868, %v867
        %v905 = vpack.c.b16 %v870, %v869
        %v906 = vpack.c.b16 %v872, %v871
        %v907 = vpack.c.b16 %v874, %v873
        %v908 = vpack.c.b16 %v876, %v875
        %941 = vmatprep.subr.bf16.mxu0 0
        %942 = vmatpush1.bf16.msra.mxu0 %v877
        %943 = vmatprep.subr.bf16.mxu0 0
        %944 = vmatpush1.bf16.msra.mxu0 %v878
        %945 = vmatprep.subr.bf16.mxu0 0
        %946 = vmatpush1.bf16.msra.mxu0 %v879
        %947 = vmatprep.subr.bf16.mxu0 0
        %948 = vmatpush1.bf16.msra.mxu0 %v880
        %949 = vmatprep.subr.bf16.mxu0 0
        %950 = vmatpush1.bf16.msra.mxu0 %v881
        %951 = vmatprep.subr.bf16.mxu0 0
        %952 = vmatpush1.bf16.msra.mxu0 %v882
        %953 = vmatprep.subr.bf16.mxu0 0
        %954 = vmatpush1.bf16.msra.mxu0 %v883
        %955 = vmatprep.subr.bf16.mxu0 0
        %956 = vmatpush1.bf16.msra.mxu0 %v884
        %957 = vmatprep.subr.bf16.mxu0 0
        %958 = vmatpush1.bf16.msra.mxu0 %v885
        %959 = vmatprep.subr.bf16.mxu0 0
        %960 = vmatpush1.bf16.msra.mxu0 %v886
        %961 = vmatprep.subr.bf16.mxu0 0
        %962 = vmatpush1.bf16.msra.mxu0 %v887
        %963 = vmatprep.subr.bf16.mxu0 0
        %964 = vmatpush1.bf16.msra.mxu0 %v888
        %965 = vmatprep.subr.bf16.mxu0 0
        %966 = vmatpush1.bf16.msra.mxu0 %v889
        %967 = vmatprep.subr.bf16.mxu0 0
        %968 = vmatpush1.bf16.msra.mxu0 %v890
        %969 = vmatprep.subr.bf16.mxu0 0
        %970 = vmatpush1.bf16.msra.mxu0 %v891
        %971 = vmatprep.subr.bf16.mxu0 0
        %972 = vmatpush1.bf16.msra.mxu0 %v892
        %973 = vmatprep.mubr.bf16.mxu0 %v654
        %974 = vmatmul.mubr.bf16.gmra.mrb[0].mxu0 %v653
        %v975 = vpop.f32.mrb[0].mxu0
        %v976 = vadd.f32 0.0, %v975
        %v977 = vpop.f32.mrb[0].mxu0
        %v978 = vpop.f32.mrb[0].mxu0
        %v979 = vadd.f32 0.0, %v978
        %v980 = vpop.f32.mrb[0].mxu0
        %981 = vmatprep.mubr.bf16.mxu0 %v658
        %982 = vmatmul.mubr.bf16.gmra.mrb[0].mxu0 %v657
        %v983 = vpop.f32.mrb[0].mxu0
        %v984 = vadd.f32 0.0, %v983
        %v985 = vpop.f32.mrb[0].mxu0
        %v986 = vpop.f32.mrb[0].mxu0
        %v987 = vadd.f32 0.0, %v986
        %v988 = vpop.f32.mrb[0].mxu0
        %989 = vmatprep.mubr.bf16.mxu0 %v662
        %990 = vmatmul.mubr.bf16.gmra.mrb[0].mxu0 %v661
        %v991 = vpop.f32.mrb[0].mxu0
        %v992 = vadd.f32 0.0, %v991
        %v993 = vpop.f32.mrb[0].mxu0
        %v994 = vpop.f32.mrb[0].mxu0
        %v995 = vadd.f32 0.0, %v994
        %v996 = vpop.f32.mrb[0].mxu0
        %997 = vmatprep.mubr.bf16.mxu0 %v666
        %998 = vmatmul.mubr.bf16.gmra.mrb[0].mxu0 %v665
        %v999 = vpop.f32.mrb[0].mxu0
        %v1000 = vadd.f32 0.0, %v999
        %v1001 = vpop.f32.mrb[0].mxu0
        %v1002 = vpop.f32.mrb[0].mxu0
        %v1003 = vadd.f32 0.0, %v1002
        %v1004 = vpop.f32.mrb[0].mxu0
        %1005 = vmatprep.mubr.bf16.mxu0 %v670
        %1006 = vmatmul.mubr.bf16.gmra.mrb[0].mxu0 %v669
        %v1007 = vpop.f32.mrb[0].mxu0
        %v1008 = vadd.f32 0.0, %v1007
        %v1009 = vpop.f32.mrb[0].mxu0
        %v1010 = vpop.f32.mrb[0].mxu0
        %v1011 = vadd.f32 0.0, %v1010
        %v1012 = vpop.f32.mrb[0].mxu0
        %1013 = vmatprep.mubr.bf16.mxu0 %v674
        %1014 = vmatmul.mubr.bf16.gmra.mrb[0].mxu0 %v673
        %v1015 = vpop.f32.mrb[0].mxu0
        %v1016 = vadd.f32 0.0, %v1015
        %v1017 = vpop.f32.mrb[0].mxu0
        %v1018 = vpop.f32.mrb[0].mxu0
        %v1019 = vadd.f32 0.0, %v1018
        %v1020 = vpop.f32.mrb[0].mxu0
        %1021 = vmatprep.mubr.bf16.mxu0 %v678
        %1022 = vmatmul.mubr.bf16.gmra.mrb[0].mxu0 %v677
        %v1023 = vpop.f32.mrb[0].mxu0
        %v1024 = vadd.f32 0.0, %v1023
        %v1025 = vpop.f32.mrb[0].mxu0
        %v1026 = vpop.f32.mrb[0].mxu0
        %v1027 = vadd.f32 0.0, %v1026
        %v1028 = vpop.f32.mrb[0].mxu0
        %1029 = vmatprep.mubr.bf16.mxu0 %v682
        %1030 = vmatmul.mubr.bf16.gmra.mrb[0].mxu0 %v681
        %v1031 = vpop.f32.mrb[0].mxu0
        %v1032 = vadd.f32 0.0, %v1031
        %v1033 = vpop.f32.mrb[0].mxu0
        %v1034 = vpop.f32.mrb[0].mxu0
        %v1035 = vadd.f32 0.0, %v1034
        %v1036 = vpop.f32.mrb[0].mxu0
        %1037 = vdwg.mxu0
        %1038 = vmatprep.subr.bf16.mxu0 0
        %1039 = vmatpush1.bf16.msra.mxu0 %v893
        %1040 = vmatprep.subr.bf16.mxu0 0
        %1041 = vmatpush1.bf16.msra.mxu0 %v894
        %1042 = vmatprep.subr.bf16.mxu0 0
        %1043 = vmatpush1.bf16.msra.mxu0 %v895
        %1044 = vmatprep.subr.bf16.mxu0 0
        %1045 = vmatpush1.bf16.msra.mxu0 %v896
        %1046 = vmatprep.subr.bf16.mxu0 0
        %1047 = vmatpush1.bf16.msra.mxu0 %v897
        %1048 = vmatprep.subr.bf16.mxu0 0
        %1049 = vmatpush1.bf16.msra.mxu0 %v898
        %1050 = vmatprep.subr.bf16.mxu0 0
        %1051 = vmatpush1.bf16.msra.mxu0 %v899
        %1052 = vmatprep.subr.bf16.mxu0 0
        %1053 = vmatpush1.bf16.msra.mxu0 %v900
        %1054 = vmatprep.subr.bf16.mxu0 0
        %1055 = vmatpush1.bf16.msra.mxu0 %v901
        %1056 = vmatprep.subr.bf16.mxu0 0
        %1057 = vmatpush1.bf16.msra.mxu0 %v902
        %1058 = vmatprep.subr.bf16.mxu0 0
        %1059 = vmatpush1.bf16.msra.mxu0 %v903
        %1060 = vmatprep.subr.bf16.mxu0 0
        %1061 = vmatpush1.bf16.msra.mxu0 %v904
        %1062 = vmatprep.subr.bf16.mxu0 0
        %1063 = vmatpush1.bf16.msra.mxu0 %v905
        %1064 = vmatprep.subr.bf16.mxu0 0
        %1065 = vmatpush1.bf16.msra.mxu0 %v906
        %1066 = vmatprep.subr.bf16.mxu0 0
        %1067 = vmatpush1.bf16.msra.mxu0 %v907
        %1068 = vmatprep.subr.bf16.mxu0 0
        %1069 = vmatpush1.bf16.msra.mxu0 %v908
        %1070 = vmatprep.mubr.bf16.mxu0 %v656
        %1071 = vmatmul.mubr.bf16.gmra.mrb[0].mxu0 %v655
        %v1072 = vpop.f32.mrb[0].mxu0
        %v1073 = vadd.f32 %v976, %v1072
        %v1074 = vpop.f32.mrb[0].mxu0
        %v1075 = vpop.f32.mrb[0].mxu0
        %v1076 = vadd.f32 %v979, %v1075
        %v1077 = vpop.f32.mrb[0].mxu0
        %1078 = vmatprep.mubr.bf16.mxu0 %v660
        %1079 = vmatmul.mubr.bf16.gmra.mrb[0].mxu0 %v659
        %v1080 = vpop.f32.mrb[0].mxu0
        %v1081 = vadd.f32 %v984, %v1080
        %v1082 = vpop.f32.mrb[0].mxu0
        %v1083 = vpop.f32.mrb[0].mxu0
        %v1084 = vadd.f32 %v987, %v1083
        %v1085 = vpop.f32.mrb[0].mxu0
        %1086 = vmatprep.mubr.bf16.mxu0 %v664
        %1087 = vmatmul.mubr.bf16.gmra.mrb[0].mxu0 %v663
        %v1088 = vpop.f32.mrb[0].mxu0
        %v1089 = vadd.f32 %v992, %v1088
        %v1090 = vpop.f32.mrb[0].mxu0
        %v1091 = vpop.f32.mrb[0].mxu0
        %v1092 = vadd.f32 %v995, %v1091
        %v1093 = vpop.f32.mrb[0].mxu0
        %1094 = vmatprep.mubr.bf16.mxu0 %v668
        %1095 = vmatmul.mubr.bf16.gmra.mrb[0].mxu0 %v667
        %v1096 = vpop.f32.mrb[0].mxu0
        %v1097 = vadd.f32 %v1000, %v1096
        %v1098 = vpop.f32.mrb[0].mxu0
        %v1099 = vpop.f32.mrb[0].mxu0
        %v1100 = vadd.f32 %v1003, %v1099
        %v1101 = vpop.f32.mrb[0].mxu0
        %1102 = vmatprep.mubr.bf16.mxu0 %v672
        %1103 = vmatmul.mubr.bf16.gmra.mrb[0].mxu0 %v671
        %v1104 = vpop.f32.mrb[0].mxu0
        %v1105 = vadd.f32 %v1008, %v1104
        %v1106 = vpop.f32.mrb[0].mxu0
        %v1107 = vpop.f32.mrb[0].mxu0
        %v1108 = vadd.f32 %v1011, %v1107
        %v1109 = vpop.f32.mrb[0].mxu0
        %1110 = vmatprep.mubr.bf16.mxu0 %v676
        %1111 = vmatmul.mubr.bf16.gmra.mrb[0].mxu0 %v675
        %v1112 = vpop.f32.mrb[0].mxu0
        %v1113 = vadd.f32 %v1016, %v1112
        %v1114 = vpop.f32.mrb[0].mxu0
        %v1115 = vpop.f32.mrb[0].mxu0
        %v1116 = vadd.f32 %v1019, %v1115
        %v1117 = vpop.f32.mrb[0].mxu0
        %1118 = vmatprep.mubr.bf16.mxu0 %v680
        %1119 = vmatmul.mubr.bf16.gmra.mrb[0].mxu0 %v679
        %v1120 = vpop.f32.mrb[0].mxu0
        %v1121 = vadd.f32 %v1024, %v1120
        %v1122 = vpop.f32.mrb[0].mxu0
        %v1123 = vpop.f32.mrb[0].mxu0
        %v1124 = vadd.f32 %v1027, %v1123
        %v1125 = vpop.f32.mrb[0].mxu0
        %1126 = vmatprep.mubr.bf16.mxu0 %v684
        %1127 = vmatmul.mubr.bf16.gmra.mrb[0].mxu0 %v683
        %v1128 = vpop.f32.mrb[0].mxu0
        %v1129 = vadd.f32 %v1032, %v1128
        %v1130 = vpop.f32.mrb[0].mxu0
        %v1131 = vpop.f32.mrb[0].mxu0
        %v1132 = vadd.f32 %v1035, %v1131
        %v1133 = vpop.f32.mrb[0].mxu0
        %1134 = vdwg.mxu0
        %v1135 = vadd.f32 %v637, %v1073
        %v1136 = vadd.f32 %v638, %v1076
        %v1137 = vadd.f32 %v639, %v1081
        %v1138 = vadd.f32 %v640, %v1084
        %v1139 = vadd.f32 %v641, %v1089
        %v1140 = vadd.f32 %v642, %v1092
        %v1141 = vadd.f32 %v643, %v1097
        %v1142 = vadd.f32 %v644, %v1100
        %v1143 = vadd.f32 %v645, %v1105
        %v1144 = vadd.f32 %v646, %v1108
        %v1145 = vadd.f32 %v647, %v1113
        %v1146 = vadd.f32 %v648, %v1116
        %v1147 = vadd.f32 %v649, %v1121
        %v1148 = vadd.f32 %v650, %v1124
        %v1149 = vadd.f32 %v651, %v1129
        %v1150 = vadd.f32 %v652, %v1132
        %1151 = vst [vmem:[#allocation2] sm:$0xff] %v1135
        %1152 = vst [vmem:[#allocation2 + $0x8] sm:$0xff] %v1136
        %1153 = vst [vmem:[#allocation2 + $0x10] sm:$0xff] %v1137
        %1154 = vst [vmem:[#allocation2 + $0x18] sm:$0xff] %v1138
        %1155 = vst [vmem:[#allocation2 + $0x20] sm:$0xff] %v1139
        %1156 = vst [vmem:[#allocation2 + $0x28] sm:$0xff] %v1140
        %1157 = vst [vmem:[#allocation2 + $0x30] sm:$0xff] %v1141
        %1158 = vst [vmem:[#allocation2 + $0x38] sm:$0xff] %v1142
        %1159 = vst [vmem:[#allocation2 + $0x40] sm:$0xff] %v1143
        %1160 = vst [vmem:[#allocation2 + $0x48] sm:$0xff] %v1144
        %1161 = vst [vmem:[#allocation2 + $0x50] sm:$0xff] %v1145
        %1162 = vst [vmem:[#allocation2 + $0x58] sm:$0xff] %v1146
        %1163 = vst [vmem:[#allocation2 + $0x60] sm:$0xff] %v1147
        %1164 = vst [vmem:[#allocation2 + $0x68] sm:$0xff] %v1148
        %1165 = vst [vmem:[#allocation2 + $0x70] sm:$0xff] %v1149
        %1166 = vst [vmem:[#allocation2 + $0x78] sm:$0xff] %v1150
        %p1167 = scmp.eq.s32.totalorder %s29, 1
        // Predicated region
        $region69: #{encoder_forward.1} parent=43 // pred_check
          %p1168 = pneg %p1167
        $region70: #{encoder_forward.1} parent=43 // pred_check_branch
          %1170 = sbr.rel (%p1168) target = $region72
        $region71: #{encoder_forward.1} parent=43 // pred_region
          %v1171 = vld [vmem:[#allocation3] sm:$0xff]
          %v1172 = vld [vmem:[#allocation3 + $0x8] sm:$0xff]
          %v1173 = vld [vmem:[#allocation3 + $0x10] sm:$0xff]
          %v1174 = vld [vmem:[#allocation3 + $0x18] sm:$0xff]
          %v1175 = vld [vmem:[#allocation3 + $0x20] sm:$0xff]
          %v1176 = vld [vmem:[#allocation3 + $0x28] sm:$0xff]
          %v1177 = vld [vmem:[#allocation3 + $0x30] sm:$0xff]
          %v1178 = vld [vmem:[#allocation3 + $0x38] sm:$0xff]
          %v1179 = vld [vmem:[#allocation3 + $0x40] sm:$0xff]
          %v1180 = vld [vmem:[#allocation3 + $0x48] sm:$0xff]
          %v1181 = vld [vmem:[#allocation3 + $0x50] sm:$0xff]
          %v1182 = vld [vmem:[#allocation3 + $0x58] sm:$0xff]
          %v1183 = vld [vmem:[#allocation3 + $0x60] sm:$0xff]
          %v1184 = vld [vmem:[#allocation3 + $0x68] sm:$0xff]
          %v1185 = vld [vmem:[#allocation3 + $0x70] sm:$0xff]
          %v1186 = vld [vmem:[#allocation3 + $0x78] sm:$0xff]
          %1187 = vadd.xlane.f32.xlu0 %v1171
          %v1188 = vpop.xlane.xlu0 %1187
          %1189 = vadd.xlane.f32.xlu0 %v1172
          %v1190 = vpop.xlane.xlu0 %1189
          %1191 = vadd.xlane.f32.xlu0 %v1173
          %v1192 = vpop.xlane.xlu0 %1191
          %1193 = vadd.xlane.f32.xlu0 %v1174
          %v1194 = vpop.xlane.xlu0 %1193
          %1195 = vadd.xlane.f32.xlu0 %v1175
          %v1196 = vpop.xlane.xlu0 %1195
          %1197 = vadd.xlane.f32.xlu0 %v1176
          %v1198 = vpop.xlane.xlu0 %1197
          %1199 = vadd.xlane.f32.xlu0 %v1177
          %v1200 = vpop.xlane.xlu0 %1199
          %1201 = vadd.xlane.f32.xlu0 %v1178
          %v1202 = vpop.xlane.xlu0 %1201
          %1203 = vadd.xlane.f32.xlu0 %v1179
          %v1204 = vpop.xlane.xlu0 %1203
          %1205 = vadd.xlane.f32.xlu0 %v1180
          %v1206 = vpop.xlane.xlu0 %1205
          %1207 = vadd.xlane.f32.xlu0 %v1181
          %v1208 = vpop.xlane.xlu0 %1207
          %1209 = vadd.xlane.f32.xlu0 %v1182
          %v1210 = vpop.xlane.xlu0 %1209
          %1211 = vadd.xlane.f32.xlu0 %v1183
          %v1212 = vpop.xlane.xlu0 %1211
          %1213 = vadd.xlane.f32.xlu0 %v1184
          %v1214 = vpop.xlane.xlu0 %1213
          %1215 = vadd.xlane.f32.xlu0 %v1185
          %v1216 = vpop.xlane.xlu0 %1215
          %1217 = vadd.xlane.f32.xlu0 %v1186
          %v1218 = vpop.xlane.xlu0 %1217
          %vm1219 = vcmp.gt.f32.partialorder %v1188, 1e-24
          %vm1220 = vcmp.gt.f32.partialorder %v1190, 1e-24
          %vm1221 = vcmp.gt.f32.partialorder %v1192, 1e-24
          %vm1222 = vcmp.gt.f32.partialorder %v1194, 1e-24
          %vm1223 = vcmp.gt.f32.partialorder %v1196, 1e-24
          %vm1224 = vcmp.gt.f32.partialorder %v1198, 1e-24
          %vm1225 = vcmp.gt.f32.partialorder %v1200, 1e-24
          %vm1226 = vcmp.gt.f32.partialorder %v1202, 1e-24
          %vm1227 = vcmp.gt.f32.partialorder %v1204, 1e-24
          %vm1228 = vcmp.gt.f32.partialorder %v1206, 1e-24
          %vm1229 = vcmp.gt.f32.partialorder %v1208, 1e-24
          %vm1230 = vcmp.gt.f32.partialorder %v1210, 1e-24
          %vm1231 = vcmp.gt.f32.partialorder %v1212, 1e-24
          %vm1232 = vcmp.gt.f32.partialorder %v1214, 1e-24
          %vm1233 = vcmp.gt.f32.partialorder %v1216, 1e-24
          %vm1234 = vcmp.gt.f32.partialorder %v1218, 1e-24
          %v1235 = vrsqrt.pop %v1188
          %v1236 = vrsqrt.pop %v1190
          %v1237 = vrsqrt.pop %v1192
          %v1238 = vrsqrt.pop %v1194
          %v1239 = vrsqrt.pop %v1196
          %v1240 = vrsqrt.pop %v1198
          %v1241 = vrsqrt.pop %v1200
          %v1242 = vrsqrt.pop %v1202
          %v1243 = vrsqrt.pop %v1204
          %v1244 = vrsqrt.pop %v1206
          %v1245 = vrsqrt.pop %v1208
          %v1246 = vrsqrt.pop %v1210
          %v1247 = vrsqrt.pop %v1212
          %v1248 = vrsqrt.pop %v1214
          %v1249 = vrsqrt.pop %v1216
          %v1250 = vrsqrt.pop %v1218
          %v1251 = vsel %vm1219, %v1235, 1e+12
          %v1252 = vsel %vm1220, %v1236, 1e+12
          %v1253 = vsel %vm1221, %v1237, 1e+12
          %v1254 = vsel %vm1222, %v1238, 1e+12
          %v1255 = vsel %vm1223, %v1239, 1e+12
          %v1256 = vsel %vm1224, %v1240, 1e+12
          %v1257 = vsel %vm1225, %v1241, 1e+12
          %v1258 = vsel %vm1226, %v1242, 1e+12
          %v1259 = vsel %vm1227, %v1243, 1e+12
          %v1260 = vsel %vm1228, %v1244, 1e+12
          %v1261 = vsel %vm1229, %v1245, 1e+12
          %v1262 = vsel %vm1230, %v1246, 1e+12
          %v1263 = vsel %vm1231, %v1247, 1e+12
          %v1264 = vsel %vm1232, %v1248, 1e+12
          %v1265 = vsel %vm1233, %v1249, 1e+12
          %v1266 = vsel %vm1234, %v1250, 1e+12
          %v1267 = vld [vmem:[#allocation9] sm:$0x1]
          %v1268 = vld [vmem:[#allocation2] sm:$0xff]
          %v1269 = vld [vmem:[#allocation2 + $0x8] sm:$0xff]
          %v1270 = vld [vmem:[#allocation2 + $0x10] sm:$0xff]
          %v1271 = vld [vmem:[#allocation2 + $0x18] sm:$0xff]
          %v1272 = vld [vmem:[#allocation2 + $0x20] sm:$0xff]
          %v1273 = vld [vmem:[#allocation2 + $0x28] sm:$0xff]
          %v1274 = vld [vmem:[#allocation2 + $0x30] sm:$0xff]
          %v1275 = vld [vmem:[#allocation2 + $0x38] sm:$0xff]
          %v1276 = vld [vmem:[#allocation2 + $0x40] sm:$0xff]
          %v1277 = vld [vmem:[#allocation2 + $0x48] sm:$0xff]
          %v1278 = vld [vmem:[#allocation2 + $0x50] sm:$0xff]
          %v1279 = vld [vmem:[#allocation2 + $0x58] sm:$0xff]
          %v1280 = vld [vmem:[#allocation2 + $0x60] sm:$0xff]
          %v1281 = vld [vmem:[#allocation2 + $0x68] sm:$0xff]
          %v1282 = vld [vmem:[#allocation2 + $0x70] sm:$0xff]
          %v1283 = vld [vmem:[#allocation2 + $0x78] sm:$0xff]
          %v1284 = vmul.f32 %v1268, %v1251
          %v1285 = vmul.f32 %v1269, %v1252
          %v1286 = vmul.f32 %v1270, %v1253
          %v1287 = vmul.f32 %v1271, %v1254
          %v1288 = vmul.f32 %v1272, %v1255
          %v1289 = vmul.f32 %v1273, %v1256
          %v1290 = vmul.f32 %v1274, %v1257
          %v1291 = vmul.f32 %v1275, %v1258
          %v1292 = vmul.f32 %v1276, %v1259
          %v1293 = vmul.f32 %v1277, %v1260
          %v1294 = vmul.f32 %v1278, %v1261
          %v1295 = vmul.f32 %v1279, %v1262
          %v1296 = vmul.f32 %v1280, %v1263
          %v1297 = vmul.f32 %v1281, %v1264
          %v1298 = vmul.f32 %v1282, %v1265
          %v1299 = vmul.f32 %v1283, %v1266
          %v1300 = vlaneseq
          %v1301 = vshrl.u32 %v1300, 7
          %v1302 = vsub.s32 0, %v1301
          %v1303 = vrot.slane %v1267, %v1302
          %v1304 = vadd.f32 %v1284, %v1303
          %v1305 = vadd.f32 %v1285, %v1303
          %v1306 = vadd.f32 %v1286, %v1303
          %v1307 = vadd.f32 %v1287, %v1303
          %v1308 = vadd.f32 %v1288, %v1303
          %v1309 = vadd.f32 %v1289, %v1303
          %v1310 = vadd.f32 %v1290, %v1303
          %v1311 = vadd.f32 %v1291, %v1303
          %v1312 = vadd.f32 %v1292, %v1303
          %v1313 = vadd.f32 %v1293, %v1303
          %v1314 = vadd.f32 %v1294, %v1303
          %v1315 = vadd.f32 %v1295, %v1303
          %v1316 = vadd.f32 %v1296, %v1303
          %v1317 = vadd.f32 %v1297, %v1303
          %v1318 = vadd.f32 %v1298, %v1303
          %v1319 = vadd.f32 %v1299, %v1303
          %v1320 = vmul.f32 %v1304, 0.5
          %v1321 = vmul.f32 %v1305, 0.5
          %v1322 = vmul.f32 %v1306, 0.5
          %v1323 = vmul.f32 %v1307, 0.5
          %v1324 = vmul.f32 %v1308, 0.5
          %v1325 = vmul.f32 %v1309, 0.5
          %v1326 = vmul.f32 %v1310, 0.5
          %v1327 = vmul.f32 %v1311, 0.5
          %v1328 = vmul.f32 %v1312, 0.5
          %v1329 = vmul.f32 %v1313, 0.5
          %v1330 = vmul.f32 %v1314, 0.5
          %v1331 = vmul.f32 %v1315, 0.5
          %v1332 = vmul.f32 %v1316, 0.5
          %v1333 = vmul.f32 %v1317, 0.5
          %v1334 = vmul.f32 %v1318, 0.5
          %v1335 = vmul.f32 %v1319, 0.5
          %v1336 = vtanh.pop %v1320
          %v1337 = vtanh.pop %v1321
          %v1338 = vtanh.pop %v1322
          %v1339 = vtanh.pop %v1323
          %v1340 = vtanh.pop %v1324
          %v1341 = vtanh.pop %v1325
          %v1342 = vtanh.pop %v1326
          %v1343 = vtanh.pop %v1327
          %v1344 = vtanh.pop %v1328
          %v1345 = vtanh.pop %v1329
          %v1346 = vtanh.pop %v1330
          %v1347 = vtanh.pop %v1331
          %v1348 = vtanh.pop %v1332
          %v1349 = vtanh.pop %v1333
          %v1350 = vtanh.pop %v1334
          %v1351 = vtanh.pop %v1335
          %v1352 = vadd.f32 %v1336, 1.0
          %v1353 = vadd.f32 %v1337, 1.0
          %v1354 = vadd.f32 %v1338, 1.0
          %v1355 = vadd.f32 %v1339, 1.0
          %v1356 = vadd.f32 %v1340, 1.0
          %v1357 = vadd.f32 %v1341, 1.0
          %v1358 = vadd.f32 %v1342, 1.0
          %v1359 = vadd.f32 %v1343, 1.0
          %v1360 = vadd.f32 %v1344, 1.0
          %v1361 = vadd.f32 %v1345, 1.0
          %v1362 = vadd.f32 %v1346, 1.0
          %v1363 = vadd.f32 %v1347, 1.0
          %v1364 = vadd.f32 %v1348, 1.0
          %v1365 = vadd.f32 %v1349, 1.0
          %v1366 = vadd.f32 %v1350, 1.0
          %v1367 = vadd.f32 %v1351, 1.0
          %v1368 = vmul.f32 %v1352, 0.5
          %v1369 = vmul.f32 %v1353, 0.5
          %v1370 = vmul.f32 %v1354, 0.5
          %v1371 = vmul.f32 %v1355, 0.5
          %v1372 = vmul.f32 %v1356, 0.5
          %v1373 = vmul.f32 %v1357, 0.5
          %v1374 = vmul.f32 %v1358, 0.5
          %v1375 = vmul.f32 %v1359, 0.5
          %v1376 = vmul.f32 %v1360, 0.5
          %v1377 = vmul.f32 %v1361, 0.5
          %v1378 = vmul.f32 %v1362, 0.5
          %v1379 = vmul.f32 %v1363, 0.5
          %v1380 = vmul.f32 %v1364, 0.5
          %v1381 = vmul.f32 %v1365, 0.5
          %v1382 = vmul.f32 %v1366, 0.5
          %v1383 = vmul.f32 %v1367, 0.5
          %v1384 = vmul.f32 %v1304, %v1368
          %v1385 = vmul.f32 %v1305, %v1369
          %v1386 = vmul.f32 %v1306, %v1370
          %v1387 = vmul.f32 %v1307, %v1371
          %v1388 = vmul.f32 %v1308, %v1372
          %v1389 = vmul.f32 %v1309, %v1373
          %v1390 = vmul.f32 %v1310, %v1374
          %v1391 = vmul.f32 %v1311, %v1375
          %v1392 = vmul.f32 %v1312, %v1376
          %v1393 = vmul.f32 %v1313, %v1377
          %v1394 = vmul.f32 %v1314, %v1378
          %v1395 = vmul.f32 %v1315, %v1379
          %v1396 = vmul.f32 %v1316, %v1380
          %v1397 = vmul.f32 %v1317, %v1381
          %v1398 = vmul.f32 %v1318, %v1382
          %v1399 = vmul.f32 %v1319, %v1383
          %v1400 = vld [vmem:[#allocation9 + $0x5] sm:$0x1]
          %v1401 = vld [vmem:[#allocation9 + $0xa] sm:$0x1]
          %1402 = vadd.xlane.f32.xlu0 %v1384
          %v1403 = vpop.xlane.xlu0 %1402
          %1404 = vadd.xlane.f32.xlu0 %v1385
          %v1405 = vpop.xlane.xlu0 %1404
          %1406 = vadd.xlane.f32.xlu0 %v1386
          %v1407 = vpop.xlane.xlu0 %1406
          %1408 = vadd.xlane.f32.xlu0 %v1387
          %v1409 = vpop.xlane.xlu0 %1408
          %1410 = vadd.xlane.f32.xlu0 %v1388
          %v1411 = vpop.xlane.xlu0 %1410
          %1412 = vadd.xlane.f32.xlu0 %v1389
          %v1413 = vpop.xlane.xlu0 %1412
          %1414 = vadd.xlane.f32.xlu0 %v1390
          %v1415 = vpop.xlane.xlu0 %1414
          %1416 = vadd.xlane.f32.xlu0 %v1391
          %v1417 = vpop.xlane.xlu0 %1416
          %1418 = vadd.xlane.f32.xlu0 %v1392
          %v1419 = vpop.xlane.xlu0 %1418
          %1420 = vadd.xlane.f32.xlu0 %v1393
          %v1421 = vpop.xlane.xlu0 %1420
          %1422 = vadd.xlane.f32.xlu0 %v1394
          %v1423 = vpop.xlane.xlu0 %1422
          %1424 = vadd.xlane.f32.xlu0 %v1395
          %v1425 = vpop.xlane.xlu0 %1424
          %1426 = vadd.xlane.f32.xlu0 %v1396
          %v1427 = vpop.xlane.xlu0 %1426
          %1428 = vadd.xlane.f32.xlu0 %v1397
          %v1429 = vpop.xlane.xlu0 %1428
          %1430 = vadd.xlane.f32.xlu0 %v1398
          %v1431 = vpop.xlane.xlu0 %1430
          %1432 = vadd.xlane.f32.xlu0 %v1399
          %v1433 = vpop.xlane.xlu0 %1432
          %v1434 = vmul.f32 %v1384, %v1384
          %v1435 = vmul.f32 %v1385, %v1385
          %v1436 = vmul.f32 %v1386, %v1386
          %v1437 = vmul.f32 %v1387, %v1387
          %v1438 = vmul.f32 %v1388, %v1388
          %v1439 = vmul.f32 %v1389, %v1389
          %v1440 = vmul.f32 %v1390, %v1390
          %v1441 = vmul.f32 %v1391, %v1391
          %v1442 = vmul.f32 %v1392, %v1392
          %v1443 = vmul.f32 %v1393, %v1393
          %v1444 = vmul.f32 %v1394, %v1394
          %v1445 = vmul.f32 %v1395, %v1395
          %v1446 = vmul.f32 %v1396, %v1396
          %v1447 = vmul.f32 %v1397, %v1397
          %v1448 = vmul.f32 %v1398, %v1398
          %v1449 = vmul.f32 %v1399, %v1399
          %1450 = vadd.xlane.f32.xlu0 %v1434
          %v1451 = vpop.xlane.xlu0 %1450
          %1452 = vadd.xlane.f32.xlu0 %v1435
          %v1453 = vpop.xlane.xlu0 %1452
          %1454 = vadd.xlane.f32.xlu0 %v1436
          %v1455 = vpop.xlane.xlu0 %1454
          %1456 = vadd.xlane.f32.xlu0 %v1437
          %v1457 = vpop.xlane.xlu0 %1456
          %1458 = vadd.xlane.f32.xlu0 %v1438
          %v1459 = vpop.xlane.xlu0 %1458
          %1460 = vadd.xlane.f32.xlu0 %v1439
          %v1461 = vpop.xlane.xlu0 %1460
          %1462 = vadd.xlane.f32.xlu0 %v1440
          %v1463 = vpop.xlane.xlu0 %1462
          %1464 = vadd.xlane.f32.xlu0 %v1441
          %v1465 = vpop.xlane.xlu0 %1464
          %1466 = vadd.xlane.f32.xlu0 %v1442
          %v1467 = vpop.xlane.xlu0 %1466
          %1468 = vadd.xlane.f32.xlu0 %v1443
          %v1469 = vpop.xlane.xlu0 %1468
          %1470 = vadd.xlane.f32.xlu0 %v1444
          %v1471 = vpop.xlane.xlu0 %1470
          %1472 = vadd.xlane.f32.xlu0 %v1445
          %v1473 = vpop.xlane.xlu0 %1472
          %1474 = vadd.xlane.f32.xlu0 %v1446
          %v1475 = vpop.xlane.xlu0 %1474
          %1476 = vadd.xlane.f32.xlu0 %v1447
          %v1477 = vpop.xlane.xlu0 %1476
          %1478 = vadd.xlane.f32.xlu0 %v1448
          %v1479 = vpop.xlane.xlu0 %1478
          %1480 = vadd.xlane.f32.xlu0 %v1449
          %v1481 = vpop.xlane.xlu0 %1480
          %v1482 = vmul.f32 %v1403, 0.0078125
          %v1483 = vmul.f32 %v1405, 0.0078125
          %v1484 = vmul.f32 %v1407, 0.0078125
          %v1485 = vmul.f32 %v1409, 0.0078125
          %v1486 = vmul.f32 %v1411, 0.0078125
          %v1487 = vmul.f32 %v1413, 0.0078125
          %v1488 = vmul.f32 %v1415, 0.0078125
          %v1489 = vmul.f32 %v1417, 0.0078125
          %v1490 = vmul.f32 %v1419, 0.0078125
          %v1491 = vmul.f32 %v1421, 0.0078125
          %v1492 = vmul.f32 %v1423, 0.0078125
          %v1493 = vmul.f32 %v1425, 0.0078125
          %v1494 = vmul.f32 %v1427, 0.0078125
          %v1495 = vmul.f32 %v1429, 0.0078125
          %v1496 = vmul.f32 %v1431, 0.0078125
          %v1497 = vmul.f32 %v1433, 0.0078125
          %v1498 = vmul.f32 %v1451, 0.0078125
          %v1499 = vmul.f32 %v1453, 0.0078125
          %v1500 = vmul.f32 %v1455, 0.0078125
          %v1501 = vmul.f32 %v1457, 0.0078125
          %v1502 = vmul.f32 %v1459, 0.0078125
          %v1503 = vmul.f32 %v1461, 0.0078125
          %v1504 = vmul.f32 %v1463, 0.0078125
          %v1505 = vmul.f32 %v1465, 0.0078125
          %v1506 = vmul.f32 %v1467, 0.0078125
          %v1507 = vmul.f32 %v1469, 0.0078125
          %v1508 = vmul.f32 %v1471, 0.0078125
          %v1509 = vmul.f32 %v1473, 0.0078125
          %v1510 = vmul.f32 %v1475, 0.0078125
          %v1511 = vmul.f32 %v1477, 0.0078125
          %v1512 = vmul.f32 %v1479, 0.0078125
          %v1513 = vmul.f32 %v1481, 0.0078125
          %v1514 = vmul.f32 %v1482, %v1482
          %v1515 = vmul.f32 %v1483, %v1483
          %v1516 = vmul.f32 %v1484, %v1484
          %v1517 = vmul.f32 %v1485, %v1485
          %v1518 = vmul.f32 %v1486, %v1486
          %v1519 = vmul.f32 %v1487, %v1487
          %v1520 = vmul.f32 %v1488, %v1488
          %v1521 = vmul.f32 %v1489, %v1489
          %v1522 = vmul.f32 %v1490, %v1490
          %v1523 = vmul.f32 %v1491, %v1491
          %v1524 = vmul.f32 %v1492, %v1492
          %v1525 = vmul.f32 %v1493, %v1493
          %v1526 = vmul.f32 %v1494, %v1494
          %v1527 = vmul.f32 %v1495, %v1495
          %v1528 = vmul.f32 %v1496, %v1496
          %v1529 = vmul.f32 %v1497, %v1497
          %v1530 = vsub.f32 %v1498, %v1514
          %v1531 = vsub.f32 %v1499, %v1515
          %v1532 = vsub.f32 %v1500, %v1516
          %v1533 = vsub.f32 %v1501, %v1517
          %v1534 = vsub.f32 %v1502, %v1518
          %v1535 = vsub.f32 %v1503, %v1519
          %v1536 = vsub.f32 %v1504, %v1520
          %v1537 = vsub.f32 %v1505, %v1521
          %v1538 = vsub.f32 %v1506, %v1522
          %v1539 = vsub.f32 %v1507, %v1523
          %v1540 = vsub.f32 %v1508, %v1524
          %v1541 = vsub.f32 %v1509, %v1525
          %v1542 = vsub.f32 %v1510, %v1526
          %v1543 = vsub.f32 %v1511, %v1527
          %v1544 = vsub.f32 %v1512, %v1528
          %v1545 = vsub.f32 %v1513, %v1529
          %v1546 = vadd.f32 %v1530, 0.1
          %v1547 = vadd.f32 %v1531, 0.1
          %v1548 = vadd.f32 %v1532, 0.1
          %v1549 = vadd.f32 %v1533, 0.1
          %v1550 = vadd.f32 %v1534, 0.1
          %v1551 = vadd.f32 %v1535, 0.1
          %v1552 = vadd.f32 %v1536, 0.1
          %v1553 = vadd.f32 %v1537, 0.1
          %v1554 = vadd.f32 %v1538, 0.1
          %v1555 = vadd.f32 %v1539, 0.1
          %v1556 = vadd.f32 %v1540, 0.1
          %v1557 = vadd.f32 %v1541, 0.1
          %v1558 = vadd.f32 %v1542, 0.1
          %v1559 = vadd.f32 %v1543, 0.1
          %v1560 = vadd.f32 %v1544, 0.1
          %v1561 = vadd.f32 %v1545, 0.1
          %v1562 = vrsqrt.pop %v1546
          %v1563 = vrsqrt.pop %v1547
          %v1564 = vrsqrt.pop %v1548
          %v1565 = vrsqrt.pop %v1549
          %v1566 = vrsqrt.pop %v1550
          %v1567 = vrsqrt.pop %v1551
          %v1568 = vrsqrt.pop %v1552
          %v1569 = vrsqrt.pop %v1553
          %v1570 = vrsqrt.pop %v1554
          %v1571 = vrsqrt.pop %v1555
          %v1572 = vrsqrt.pop %v1556
          %v1573 = vrsqrt.pop %v1557
          %v1574 = vrsqrt.pop %v1558
          %v1575 = vrsqrt.pop %v1559
          %v1576 = vrsqrt.pop %v1560
          %v1577 = vrsqrt.pop %v1561
          %v1578 = vlaneseq
          %v1579 = vshrl.u32 %v1578, 7
          %v1580 = vsub.s32 0, %v1579
          %v1581 = vrot.slane %v1400, %v1580
          %v1582 = vmul.f32 %v1581, %v1562
          %v1583 = vmul.f32 %v1581, %v1563
          %v1584 = vmul.f32 %v1581, %v1564
          %v1585 = vmul.f32 %v1581, %v1565
          %v1586 = vmul.f32 %v1581, %v1566
          %v1587 = vmul.f32 %v1581, %v1567
          %v1588 = vmul.f32 %v1581, %v1568
          %v1589 = vmul.f32 %v1581, %v1569
          %v1590 = vmul.f32 %v1581, %v1570
          %v1591 = vmul.f32 %v1581, %v1571
          %v1592 = vmul.f32 %v1581, %v1572
          %v1593 = vmul.f32 %v1581, %v1573
          %v1594 = vmul.f32 %v1581, %v1574
          %v1595 = vmul.f32 %v1581, %v1575
          %v1596 = vmul.f32 %v1581, %v1576
          %v1597 = vmul.f32 %v1581, %v1577
          %v1598 = vsub.f32 %v1384, %v1482
          %v1599 = vsub.f32 %v1385, %v1483
          %v1600 = vsub.f32 %v1386, %v1484
          %v1601 = vsub.f32 %v1387, %v1485
          %v1602 = vsub.f32 %v1388, %v1486
          %v1603 = vsub.f32 %v1389, %v1487
          %v1604 = vsub.f32 %v1390, %v1488
          %v1605 = vsub.f32 %v1391, %v1489
          %v1606 = vsub.f32 %v1392, %v1490
          %v1607 = vsub.f32 %v1393, %v1491
          %v1608 = vsub.f32 %v1394, %v1492
          %v1609 = vsub.f32 %v1395, %v1493
          %v1610 = vsub.f32 %v1396, %v1494
          %v1611 = vsub.f32 %v1397, %v1495
          %v1612 = vsub.f32 %v1398, %v1496
          %v1613 = vsub.f32 %v1399, %v1497
          %v1614 = vmul.f32 %v1598, %v1582
          %v1615 = vmul.f32 %v1599, %v1583
          %v1616 = vmul.f32 %v1600, %v1584
          %v1617 = vmul.f32 %v1601, %v1585
          %v1618 = vmul.f32 %v1602, %v1586
          %v1619 = vmul.f32 %v1603, %v1587
          %v1620 = vmul.f32 %v1604, %v1588
          %v1621 = vmul.f32 %v1605, %v1589
          %v1622 = vmul.f32 %v1606, %v1590
          %v1623 = vmul.f32 %v1607, %v1591
          %v1624 = vmul.f32 %v1608, %v1592
          %v1625 = vmul.f32 %v1609, %v1593
          %v1626 = vmul.f32 %v1610, %v1594
          %v1627 = vmul.f32 %v1611, %v1595
          %v1628 = vmul.f32 %v1612, %v1596
          %v1629 = vmul.f32 %v1613, %v1597
          %v1630 = vlaneseq
          %v1631 = vshrl.u32 %v1630, 7
          %v1632 = vsub.s32 0, %v1631
          %v1633 = vrot.slane %v1401, %v1632
          %v1634 = vadd.f32 %v1614, %v1633
          %v1635 = vadd.f32 %v1615, %v1633
          %v1636 = vadd.f32 %v1616, %v1633
          %v1637 = vadd.f32 %v1617, %v1633
          %v1638 = vadd.f32 %v1618, %v1633
          %v1639 = vadd.f32 %v1619, %v1633
          %v1640 = vadd.f32 %v1620, %v1633
          %v1641 = vadd.f32 %v1621, %v1633
          %v1642 = vadd.f32 %v1622, %v1633
          %v1643 = vadd.f32 %v1623, %v1633
          %v1644 = vadd.f32 %v1624, %v1633
          %v1645 = vadd.f32 %v1625, %v1633
          %v1646 = vadd.f32 %v1626, %v1633
          %v1647 = vadd.f32 %v1627, %v1633
          %v1648 = vadd.f32 %v1628, %v1633
          %v1649 = vadd.f32 %v1629, %v1633
          %v1650 = vpack.c.bf16 %v1635, %v1634
          %v1651 = vpack.c.bf16 %v1637, %v1636
          %v1652 = vpack.c.bf16 %v1639, %v1638
          %v1653 = vpack.c.bf16 %v1641, %v1640
          %v1654 = vpack.c.bf16 %v1643, %v1642
          %v1655 = vpack.c.bf16 %v1645, %v1644
          %v1656 = vpack.c.bf16 %v1647, %v1646
          %v1657 = vpack.c.bf16 %v1649, %v1648
          %v1658 = vld [vmem:[#allocation8] sm:$0xf]
          %v1659 = vld [vmem:[#allocation8 + $0x4] sm:$0xf]
          %v1660 = vld [vmem:[#allocation8 + $0x8] sm:$0xf]
          %v1661 = vld [vmem:[#allocation8 + $0xc] sm:$0xf]
          %v1662 = vld [vmem:[#allocation8 + $0x10] sm:$0xf]
          %v1663 = vld [vmem:[#allocation8 + $0x14] sm:$0xf]
          %v1664 = vld [vmem:[#allocation8 + $0x18] sm:$0xf]
          %v1665 = vld [vmem:[#allocation8 + $0x1c] sm:$0xf]
          %v1666 = vld [vmem:[#allocation8 + $0x20] sm:$0xf]
          %v1667 = vld [vmem:[#allocation8 + $0x24] sm:$0xf]
          %v1668 = vld [vmem:[#allocation8 + $0x28] sm:$0xf]
          %v1669 = vld [vmem:[#allocation8 + $0x2c] sm:$0xf]
          %v1670 = vld [vmem:[#allocation8 + $0x30] sm:$0xf]
          %v1671 = vld [vmem:[#allocation8 + $0x34] sm:$0xf]
          %v1672 = vld [vmem:[#allocation8 + $0x38] sm:$0xf]
          %v1673 = vld [vmem:[#allocation8 + $0x3c] sm:$0xf]
          %v1674 = vld [vmem:[#allocation9 + $0x1] sm:$0x1]
          %v1675 = vlaneseq
          %v1676 = vshrl.u32 %v1675, 7
          %v1677 = vsub.s32 0, %v1676
          %v1678 = vrot.slane %v1674, %v1677
          %v1695 = vunpack.c.l.b16 %v1658
          %v1696 = vunpack.c.l.b16 %v1659
          %v1697 = vunpack.c.l.b16 %v1660
          %v1698 = vunpack.c.l.b16 %v1661
          %v1699 = vunpack.c.l.b16 %v1662
          %v1700 = vunpack.c.l.b16 %v1663
          %v1701 = vunpack.c.l.b16 %v1664
          %v1702 = vunpack.c.l.b16 %v1665
          %v1703 = vunpack.c.l.b16 %v1666
          %v1704 = vunpack.c.l.b16 %v1667
          %v1705 = vunpack.c.l.b16 %v1668
          %v1706 = vunpack.c.l.b16 %v1669
          %v1707 = vunpack.c.l.b16 %v1670
          %v1708 = vunpack.c.l.b16 %v1671
          %v1709 = vunpack.c.l.b16 %v1672
          %v1710 = vunpack.c.l.b16 %v1673
          %v1711 = vpack.c.b16 %v1696, %v1695
          %v1712 = vpack.c.b16 %v1698, %v1697
          %v1713 = vpack.c.b16 %v1700, %v1699
          %v1714 = vpack.c.b16 %v1702, %v1701
          %v1715 = vpack.c.b16 %v1704, %v1703
          %v1716 = vpack.c.b16 %v1706, %v1705
          %v1717 = vpack.c.b16 %v1708, %v1707
          %v1718 = vpack.c.b16 %v1710, %v1709
          %1727 = vmatprep.subr.bf16.mxu0 0
          %1728 = vmatpush1.bf16.msra.mxu0 %v1711
          %1729 = vmatprep.subr.bf16.mxu0 0
          %1730 = vmatpush1.bf16.msra.mxu0 %v1712
          %1731 = vmatprep.subr.bf16.mxu0 0
          %1732 = vmatpush1.bf16.msra.mxu0 %v1713
          %1733 = vmatprep.subr.bf16.mxu0 0
          %1734 = vmatpush1.bf16.msra.mxu0 %v1714
          %1735 = vmatprep.subr.bf16.mxu0 0
          %1736 = vmatpush1.bf16.msra.mxu0 %v1715
          %1737 = vmatprep.subr.bf16.mxu0 0
          %1738 = vmatpush1.bf16.msra.mxu0 %v1716
          %1739 = vmatprep.subr.bf16.mxu0 0
          %1740 = vmatpush1.bf16.msra.mxu0 %v1717
          %1741 = vmatprep.subr.bf16.mxu0 0
          %1742 = vmatpush1.bf16.msra.mxu0 %v1718
          %1743 = vmatprep.subr.bf16.mxu0 0
          %1744 = vmatpush1.bf16.msra.mxu0 0
          %1745 = vmatprep.subr.bf16.mxu0 0
          %1746 = vmatpush1.bf16.msra.mxu0 0
          %1747 = vmatprep.subr.bf16.mxu0 0
          %1748 = vmatpush1.bf16.msra.mxu0 0
          %1749 = vmatprep.subr.bf16.mxu0 0
          %1750 = vmatpush1.bf16.msra.mxu0 0
          %1751 = vmatprep.subr.bf16.mxu0 0
          %1752 = vmatpush1.bf16.msra.mxu0 0
          %1753 = vmatprep.subr.bf16.mxu0 0
          %1754 = vmatpush1.bf16.msra.mxu0 0
          %1755 = vmatprep.subr.bf16.mxu0 0
          %1756 = vmatpush1.bf16.msra.mxu0 0
          %1757 = vmatprep.subr.bf16.mxu0 0
          %1758 = vmatpush1.bf16.msra.mxu0 0
          %1759 = vmatprep.mubr.bf16.mxu0 0
          %1760 = vmatmul.mubr.bf16.gmra.mrb[0].mxu0 %v1650
          %v1761 = vpop.f32.mrb[0].mxu0
          %v1762 = vadd.f32 %v1678, %v1761
          %v1763 = vpop.f32.mrb[0].mxu0
          %v1764 = vpop.f32.mrb[0].mxu0
          %v1765 = vadd.f32 %v1678, %v1764
          %v1766 = vpop.f32.mrb[0].mxu0
          %1767 = vmatprep.mubr.bf16.mxu0 0
          %1768 = vmatmul.mubr.bf16.gmra.mrb[0].mxu0 %v1651
          %v1769 = vpop.f32.mrb[0].mxu0
          %v1770 = vadd.f32 %v1678, %v1769
          %v1771 = vpop.f32.mrb[0].mxu0
          %v1772 = vpop.f32.mrb[0].mxu0
          %v1773 = vadd.f32 %v1678, %v1772
          %v1774 = vpop.f32.mrb[0].mxu0
          %1775 = vmatprep.mubr.bf16.mxu0 0
          %1776 = vmatmul.mubr.bf16.gmra.mrb[0].mxu0 %v1652
          %v1777 = vpop.f32.mrb[0].mxu0
          %v1778 = vadd.f32 %v1678, %v1777
          %v1779 = vpop.f32.mrb[0].mxu0
          %v1780 = vpop.f32.mrb[0].mxu0
          %v1781 = vadd.f32 %v1678, %v1780
          %v1782 = vpop.f32.mrb[0].mxu0
          %1783 = vmatprep.mubr.bf16.mxu0 0
          %1784 = vmatmul.mubr.bf16.gmra.mrb[0].mxu0 %v1653
          %v1785 = vpop.f32.mrb[0].mxu0
          %v1786 = vadd.f32 %v1678, %v1785
          %v1787 = vpop.f32.mrb[0].mxu0
          %v1788 = vpop.f32.mrb[0].mxu0
          %v1789 = vadd.f32 %v1678, %v1788
          %v1790 = vpop.f32.mrb[0].mxu0
          %1791 = vmatprep.mubr.bf16.mxu0 0
          %1792 = vmatmul.mubr.bf16.gmra.mrb[0].mxu0 %v1654
          %v1793 = vpop.f32.mrb[0].mxu0
          %v1794 = vadd.f32 %v1678, %v1793
          %v1795 = vpop.f32.mrb[0].mxu0
          %v1796 = vpop.f32.mrb[0].mxu0
          %v1797 = vadd.f32 %v1678, %v1796
          %v1798 = vpop.f32.mrb[0].mxu0
          %1799 = vmatprep.mubr.bf16.mxu0 0
          %1800 = vmatmul.mubr.bf16.gmra.mrb[0].mxu0 %v1655
          %v1801 = vpop.f32.mrb[0].mxu0
          %v1802 = vadd.f32 %v1678, %v1801
          %v1803 = vpop.f32.mrb[0].mxu0
          %v1804 = vpop.f32.mrb[0].mxu0
          %v1805 = vadd.f32 %v1678, %v1804
          %v1806 = vpop.f32.mrb[0].mxu0
          %1807 = vmatprep.mubr.bf16.mxu0 0
          %1808 = vmatmul.mubr.bf16.gmra.mrb[0].mxu0 %v1656
          %v1809 = vpop.f32.mrb[0].mxu0
          %v1810 = vadd.f32 %v1678, %v1809
          %v1811 = vpop.f32.mrb[0].mxu0
          %v1812 = vpop.f32.mrb[0].mxu0
          %v1813 = vadd.f32 %v1678, %v1812
          %v1814 = vpop.f32.mrb[0].mxu0
          %1815 = vmatprep.mubr.bf16.mxu0 0
          %1816 = vmatmul.mubr.bf16.gmra.mrb[0].mxu0 %v1657
          %v1817 = vpop.f32.mrb[0].mxu0
          %v1818 = vadd.f32 %v1678, %v1817
          %v1819 = vpop.f32.mrb[0].mxu0
          %v1820 = vpop.f32.mrb[0].mxu0
          %v1821 = vadd.f32 %v1678, %v1820
          %v1822 = vpop.f32.mrb[0].mxu0
          %1823 = vdwg.mxu0
          %v1824 = vadd.f32 %v1762, %v1634
          %v1825 = vadd.f32 %v1765, %v1635
          %v1826 = vadd.f32 %v1770, %v1636
          %v1827 = vadd.f32 %v1773, %v1637
          %v1828 = vadd.f32 %v1778, %v1638
          %v1829 = vadd.f32 %v1781, %v1639
          %v1830 = vadd.f32 %v1786, %v1640
          %v1831 = vadd.f32 %v1789, %v1641
          %v1832 = vadd.f32 %v1794, %v1642
          %v1833 = vadd.f32 %v1797, %v1643
          %v1834 = vadd.f32 %v1802, %v1644
          %v1835 = vadd.f32 %v1805, %v1645
          %v1836 = vadd.f32 %v1810, %v1646
          %v1837 = vadd.f32 %v1813, %v1647
          %v1838 = vadd.f32 %v1818, %v1648
          %v1839 = vadd.f32 %v1821, %v1649
          %v1840 = vmul.f32 %v1824, 0.5
          %v1841 = vmul.f32 %v1825, 0.5
          %v1842 = vmul.f32 %v1826, 0.5
          %v1843 = vmul.f32 %v1827, 0.5
          %v1844 = vmul.f32 %v1828, 0.5
          %v1845 = vmul.f32 %v1829, 0.5
          %v1846 = vmul.f32 %v1830, 0.5
          %v1847 = vmul.f32 %v1831, 0.5
          %v1848 = vmul.f32 %v1832, 0.5
          %v1849 = vmul.f32 %v1833, 0.5
          %v1850 = vmul.f32 %v1834, 0.5
          %v1851 = vmul.f32 %v1835, 0.5
          %v1852 = vmul.f32 %v1836, 0.5
          %v1853 = vmul.f32 %v1837, 0.5
          %v1854 = vmul.f32 %v1838, 0.5
          %v1855 = vmul.f32 %v1839, 0.5
          %v1856 = vtanh.pop %v1840
          %v1857 = vtanh.pop %v1841
          %v1858 = vtanh.pop %v1842
          %v1859 = vtanh.pop %v1843
          %v1860 = vtanh.pop %v1844
          %v1861 = vtanh.pop %v1845
          %v1862 = vtanh.pop %v1846
          %v1863 = vtanh.pop %v1847
          %v1864 = vtanh.pop %v1848
          %v1865 = vtanh.pop %v1849
          %v1866 = vtanh.pop %v1850
          %v1867 = vtanh.pop %v1851
          %v1868 = vtanh.pop %v1852
          %v1869 = vtanh.pop %v1853
          %v1870 = vtanh.pop %v1854
          %v1871 = vtanh.pop %v1855
          %v1872 = vadd.f32 %v1856, 1.0
          %v1873 = vadd.f32 %v1857, 1.0
          %v1874 = vadd.f32 %v1858, 1.0
          %v1875 = vadd.f32 %v1859, 1.0
          %v1876 = vadd.f32 %v1860, 1.0
          %v1877 = vadd.f32 %v1861, 1.0
          %v1878 = vadd.f32 %v1862, 1.0
          %v1879 = vadd.f32 %v1863, 1.0
          %v1880 = vadd.f32 %v1864, 1.0
          %v1881 = vadd.f32 %v1865, 1.0
          %v1882 = vadd.f32 %v1866, 1.0
          %v1883 = vadd.f32 %v1867, 1.0
          %v1884 = vadd.f32 %v1868, 1.0
          %v1885 = vadd.f32 %v1869, 1.0
          %v1886 = vadd.f32 %v1870, 1.0
          %v1887 = vadd.f32 %v1871, 1.0
          %v1888 = vmul.f32 %v1872, 0.5
          %v1889 = vmul.f32 %v1873, 0.5
          %v1890 = vmul.f32 %v1874, 0.5
          %v1891 = vmul.f32 %v1875, 0.5
          %v1892 = vmul.f32 %v1876, 0.5
          %v1893 = vmul.f32 %v1877, 0.5
          %v1894 = vmul.f32 %v1878, 0.5
          %v1895 = vmul.f32 %v1879, 0.5
          %v1896 = vmul.f32 %v1880, 0.5
          %v1897 = vmul.f32 %v1881, 0.5
          %v1898 = vmul.f32 %v1882, 0.5
          %v1899 = vmul.f32 %v1883, 0.5
          %v1900 = vmul.f32 %v1884, 0.5
          %v1901 = vmul.f32 %v1885, 0.5
          %v1902 = vmul.f32 %v1886, 0.5
          %v1903 = vmul.f32 %v1887, 0.5
          %v1904 = vmul.f32 %v1824, %v1888
          %v1905 = vmul.f32 %v1825, %v1889
          %v1906 = vmul.f32 %v1826, %v1890
          %v1907 = vmul.f32 %v1827, %v1891
          %v1908 = vmul.f32 %v1828, %v1892
          %v1909 = vmul.f32 %v1829, %v1893
          %v1910 = vmul.f32 %v1830, %v1894
          %v1911 = vmul.f32 %v1831, %v1895
          %v1912 = vmul.f32 %v1832, %v1896
          %v1913 = vmul.f32 %v1833, %v1897
          %v1914 = vmul.f32 %v1834, %v1898
          %v1915 = vmul.f32 %v1835, %v1899
          %v1916 = vmul.f32 %v1836, %v1900
          %v1917 = vmul.f32 %v1837, %v1901
          %v1918 = vmul.f32 %v1838, %v1902
          %v1919 = vmul.f32 %v1839, %v1903
          %v1920 = vld [vmem:[#allocation9 + $0x6] sm:$0x1]
          %v1921 = vld [vmem:[#allocation9 + $0xb] sm:$0x1]
          %1922 = vadd.xlane.f32.xlu0 %v1904
          %v1923 = vpop.xlane.xlu0 %1922
          %1924 = vadd.xlane.f32.xlu0 %v1905
          %v1925 = vpop.xlane.xlu0 %1924
          %1926 = vadd.xlane.f32.xlu0 %v1906
          %v1927 = vpop.xlane.xlu0 %1926
          %1928 = vadd.xlane.f32.xlu0 %v1907
          %v1929 = vpop.xlane.xlu0 %1928
          %1930 = vadd.xlane.f32.xlu0 %v1908
          %v1931 = vpop.xlane.xlu0 %1930
          %1932 = vadd.xlane.f32.xlu0 %v1909
          %v1933 = vpop.xlane.xlu0 %1932
          %1934 = vadd.xlane.f32.xlu0 %v1910
          %v1935 = vpop.xlane.xlu0 %1934
          %1936 = vadd.xlane.f32.xlu0 %v1911
          %v1937 = vpop.xlane.xlu0 %1936
          %1938 = vadd.xlane.f32.xlu0 %v1912
          %v1939 = vpop.xlane.xlu0 %1938
          %1940 = vadd.xlane.f32.xlu0 %v1913
          %v1941 = vpop.xlane.xlu0 %1940
          %1942 = vadd.xlane.f32.xlu0 %v1914
          %v1943 = vpop.xlane.xlu0 %1942
          %1944 = vadd.xlane.f32.xlu0 %v1915
          %v1945 = vpop.xlane.xlu0 %1944
          %1946 = vadd.xlane.f32.xlu0 %v1916
          %v1947 = vpop.xlane.xlu0 %1946
          %1948 = vadd.xlane.f32.xlu0 %v1917
          %v1949 = vpop.xlane.xlu0 %1948
          %1950 = vadd.xlane.f32.xlu0 %v1918
          %v1951 = vpop.xlane.xlu0 %1950
          %1952 = vadd.xlane.f32.xlu0 %v1919
          %v1953 = vpop.xlane.xlu0 %1952
          %v1954 = vmul.f32 %v1904, %v1904
          %v1955 = vmul.f32 %v1905, %v1905
          %v1956 = vmul.f32 %v1906, %v1906
          %v1957 = vmul.f32 %v1907, %v1907
          %v1958 = vmul.f32 %v1908, %v1908
          %v1959 = vmul.f32 %v1909, %v1909
          %v1960 = vmul.f32 %v1910, %v1910
          %v1961 = vmul.f32 %v1911, %v1911
          %v1962 = vmul.f32 %v1912, %v1912
          %v1963 = vmul.f32 %v1913, %v1913
          %v1964 = vmul.f32 %v1914, %v1914
          %v1965 = vmul.f32 %v1915, %v1915
          %v1966 = vmul.f32 %v1916, %v1916
          %v1967 = vmul.f32 %v1917, %v1917
          %v1968 = vmul.f32 %v1918, %v1918
          %v1969 = vmul.f32 %v1919, %v1919
          %1970 = vadd.xlane.f32.xlu0 %v1954
          %v1971 = vpop.xlane.xlu0 %1970
          %1972 = vadd.xlane.f32.xlu0 %v1955
          %v1973 = vpop.xlane.xlu0 %1972
          %1974 = vadd.xlane.f32.xlu0 %v1956
          %v1975 = vpop.xlane.xlu0 %1974
          %1976 = vadd.xlane.f32.xlu0 %v1957
          %v1977 = vpop.xlane.xlu0 %1976
          %1978 = vadd.xlane.f32.xlu0 %v1958
          %v1979 = vpop.xlane.xlu0 %1978
          %1980 = vadd.xlane.f32.xlu0 %v1959
          %v1981 = vpop.xlane.xlu0 %1980
          %1982 = vadd.xlane.f32.xlu0 %v1960
          %v1983 = vpop.xlane.xlu0 %1982
          %1984 = vadd.xlane.f32.xlu0 %v1961
          %v1985 = vpop.xlane.xlu0 %1984
          %1986 = vadd.xlane.f32.xlu0 %v1962
          %v1987 = vpop.xlane.xlu0 %1986
          %1988 = vadd.xlane.f32.xlu0 %v1963
          %v1989 = vpop.xlane.xlu0 %1988
          %1990 = vadd.xlane.f32.xlu0 %v1964
          %v1991 = vpop.xlane.xlu0 %1990
          %1992 = vadd.xlane.f32.xlu0 %v1965
          %v1993 = vpop.xlane.xlu0 %1992
          %1994 = vadd.xlane.f32.xlu0 %v1966
          %v1995 = vpop.xlane.xlu0 %1994
          %1996 = vadd.xlane.f32.xlu0 %v1967
          %v1997 = vpop.xlane.xlu0 %1996
          %1998 = vadd.xlane.f32.xlu0 %v1968
          %v1999 = vpop.xlane.xlu0 %1998
          %2000 = vadd.xlane.f32.xlu0 %v1969
          %v2001 = vpop.xlane.xlu0 %2000
          %v2002 = vmul.f32 %v1923, 0.0078125
          %v2003 = vmul.f32 %v1925, 0.0078125
          %v2004 = vmul.f32 %v1927, 0.0078125
          %v2005 = vmul.f32 %v1929, 0.0078125
          %v2006 = vmul.f32 %v1931, 0.0078125
          %v2007 = vmul.f32 %v1933, 0.0078125
          %v2008 = vmul.f32 %v1935, 0.0078125
          %v2009 = vmul.f32 %v1937, 0.0078125
          %v2010 = vmul.f32 %v1939, 0.0078125
          %v2011 = vmul.f32 %v1941, 0.0078125
          %v2012 = vmul.f32 %v1943, 0.0078125
          %v2013 = vmul.f32 %v1945, 0.0078125
          %v2014 = vmul.f32 %v1947, 0.0078125
          %v2015 = vmul.f32 %v1949, 0.0078125
          %v2016 = vmul.f32 %v1951, 0.0078125
          %v2017 = vmul.f32 %v1953, 0.0078125
          %v2018 = vmul.f32 %v1971, 0.0078125
          %v2019 = vmul.f32 %v1973, 0.0078125
          %v2020 = vmul.f32 %v1975, 0.0078125
          %v2021 = vmul.f32 %v1977, 0.0078125
          %v2022 = vmul.f32 %v1979, 0.0078125
          %v2023 = vmul.f32 %v1981, 0.0078125
          %v2024 = vmul.f32 %v1983, 0.0078125
          %v2025 = vmul.f32 %v1985, 0.0078125
          %v2026 = vmul.f32 %v1987, 0.0078125
          %v2027 = vmul.f32 %v1989, 0.0078125
          %v2028 = vmul.f32 %v1991, 0.0078125
          %v2029 = vmul.f32 %v1993, 0.0078125
          %v2030 = vmul.f32 %v1995, 0.0078125
          %v2031 = vmul.f32 %v1997, 0.0078125
          %v2032 = vmul.f32 %v1999, 0.0078125
          %v2033 = vmul.f32 %v2001, 0.0078125
          %v2034 = vmul.f32 %v2002, %v2002
          %v2035 = vmul.f32 %v2003, %v2003
          %v2036 = vmul.f32 %v2004, %v2004
          %v2037 = vmul.f32 %v2005, %v2005
          %v2038 = vmul.f32 %v2006, %v2006
          %v2039 = vmul.f32 %v2007, %v2007
          %v2040 = vmul.f32 %v2008, %v2008
          %v2041 = vmul.f32 %v2009, %v2009
          %v2042 = vmul.f32 %v2010, %v2010
          %v2043 = vmul.f32 %v2011, %v2011
          %v2044 = vmul.f32 %v2012, %v2012
          %v2045 = vmul.f32 %v2013, %v2013
          %v2046 = vmul.f32 %v2014, %v2014
          %v2047 = vmul.f32 %v2015, %v2015
          %v2048 = vmul.f32 %v2016, %v2016
          %v2049 = vmul.f32 %v2017, %v2017
          %v2050 = vsub.f32 %v2018, %v2034
          %v2051 = vsub.f32 %v2019, %v2035
          %v2052 = vsub.f32 %v2020, %v2036
          %v2053 = vsub.f32 %v2021, %v2037
          %v2054 = vsub.f32 %v2022, %v2038
          %v2055 = vsub.f32 %v2023, %v2039
          %v2056 = vsub.f32 %v2024, %v2040
          %v2057 = vsub.f32 %v2025, %v2041
          %v2058 = vsub.f32 %v2026, %v2042
          %v2059 = vsub.f32 %v2027, %v2043
          %v2060 = vsub.f32 %v2028, %v2044
          %v2061 = vsub.f32 %v2029, %v2045
          %v2062 = vsub.f32 %v2030, %v2046
          %v2063 = vsub.f32 %v2031, %v2047
          %v2064 = vsub.f32 %v2032, %v2048
          %v2065 = vsub.f32 %v2033, %v2049
          %v2066 = vadd.f32 %v2050, 0.1
          %v2067 = vadd.f32 %v2051, 0.1
          %v2068 = vadd.f32 %v2052, 0.1
          %v2069 = vadd.f32 %v2053, 0.1
          %v2070 = vadd.f32 %v2054, 0.1
          %v2071 = vadd.f32 %v2055, 0.1
          %v2072 = vadd.f32 %v2056, 0.1
          %v2073 = vadd.f32 %v2057, 0.1
          %v2074 = vadd.f32 %v2058, 0.1
          %v2075 = vadd.f32 %v2059, 0.1
          %v2076 = vadd.f32 %v2060, 0.1
          %v2077 = vadd.f32 %v2061, 0.1
          %v2078 = vadd.f32 %v2062, 0.1
          %v2079 = vadd.f32 %v2063, 0.1
          %v2080 = vadd.f32 %v2064, 0.1
          %v2081 = vadd.f32 %v2065, 0.1
          %v2082 = vrsqrt.pop %v2066
          %v2083 = vrsqrt.pop %v2067
          %v2084 = vrsqrt.pop %v2068
          %v2085 = vrsqrt.pop %v2069
          %v2086 = vrsqrt.pop %v2070
          %v2087 = vrsqrt.pop %v2071
          %v2088 = vrsqrt.pop %v2072
          %v2089 = vrsqrt.pop %v2073
          %v2090 = vrsqrt.pop %v2074
          %v2091 = vrsqrt.pop %v2075
          %v2092 = vrsqrt.pop %v2076
          %v2093 = vrsqrt.pop %v2077
          %v2094 = vrsqrt.pop %v2078
          %v2095 = vrsqrt.pop %v2079
          %v2096 = vrsqrt.pop %v2080
          %v2097 = vrsqrt.pop %v2081
          %v2098 = vlaneseq
          %v2099 = vshrl.u32 %v2098, 7
          %v2100 = vsub.s32 0, %v2099
          %v2101 = vrot.slane %v1920, %v2100
          %v2102 = vmul.f32 %v2101, %v2082
          %v2103 = vmul.f32 %v2101, %v2083
          %v2104 = vmul.f32 %v2101, %v2084
          %v2105 = vmul.f32 %v2101, %v2085
          %v2106 = vmul.f32 %v2101, %v2086
          %v2107 = vmul.f32 %v2101, %v2087
          %v2108 = vmul.f32 %v2101, %v2088
          %v2109 = vmul.f32 %v2101, %v2089
          %v2110 = vmul.f32 %v2101, %v2090
          %v2111 = vmul.f32 %v2101, %v2091
          %v2112 = vmul.f32 %v2101, %v2092
          %v2113 = vmul.f32 %v2101, %v2093
          %v2114 = vmul.f32 %v2101, %v2094
          %v2115 = vmul.f32 %v2101, %v2095
          %v2116 = vmul.f32 %v2101, %v2096
          %v2117 = vmul.f32 %v2101, %v2097
          %v2118 = vsub.f32 %v1904, %v2002
          %v2119 = vsub.f32 %v1905, %v2003
          %v2120 = vsub.f32 %v1906, %v2004
          %v2121 = vsub.f32 %v1907, %v2005
          %v2122 = vsub.f32 %v1908, %v2006
          %v2123 = vsub.f32 %v1909, %v2007
          %v2124 = vsub.f32 %v1910, %v2008
          %v2125 = vsub.f32 %v1911, %v2009
          %v2126 = vsub.f32 %v1912, %v2010
          %v2127 = vsub.f32 %v1913, %v2011
          %v2128 = vsub.f32 %v1914, %v2012
          %v2129 = vsub.f32 %v1915, %v2013
          %v2130 = vsub.f32 %v1916, %v2014
          %v2131 = vsub.f32 %v1917, %v2015
          %v2132 = vsub.f32 %v1918, %v2016
          %v2133 = vsub.f32 %v1919, %v2017
          %v2134 = vmul.f32 %v2118, %v2102
          %v2135 = vmul.f32 %v2119, %v2103
          %v2136 = vmul.f32 %v2120, %v2104
          %v2137 = vmul.f32 %v2121, %v2105
          %v2138 = vmul.f32 %v2122, %v2106
          %v2139 = vmul.f32 %v2123, %v2107
          %v2140 = vmul.f32 %v2124, %v2108
          %v2141 = vmul.f32 %v2125, %v2109
          %v2142 = vmul.f32 %v2126, %v2110
          %v2143 = vmul.f32 %v2127, %v2111
          %v2144 = vmul.f32 %v2128, %v2112
          %v2145 = vmul.f32 %v2129, %v2113
          %v2146 = vmul.f32 %v2130, %v2114
          %v2147 = vmul.f32 %v2131, %v2115
          %v2148 = vmul.f32 %v2132, %v2116
          %v2149 = vmul.f32 %v2133, %v2117
          %v2150 = vlaneseq
          %v2151 = vshrl.u32 %v2150, 7
          %v2152 = vsub.s32 0, %v2151
          %v2153 = vrot.slane %v1921, %v2152
          %v2154 = vadd.f32 %v2134, %v2153
          %v2155 = vadd.f32 %v2135, %v2153
          %v2156 = vadd.f32 %v2136, %v2153
          %v2157 = vadd.f32 %v2137, %v2153
          %v2158 = vadd.f32 %v2138, %v2153
          %v2159 = vadd.f32 %v2139, %v2153
          %v2160 = vadd.f32 %v2140, %v2153
          %v2161 = vadd.f32 %v2141, %v2153
          %v2162 = vadd.f32 %v2142, %v2153
          %v2163 = vadd.f32 %v2143, %v2153
          %v2164 = vadd.f32 %v2144, %v2153
          %v2165 = vadd.f32 %v2145, %v2153
          %v2166 = vadd.f32 %v2146, %v2153
          %v2167 = vadd.f32 %v2147, %v2153
          %v2168 = vadd.f32 %v2148, %v2153
          %v2169 = vadd.f32 %v2149, %v2153
          %v2170 = vadd.f32 %v1634, %v2154
          %v2171 = vadd.f32 %v1635, %v2155
          %v2172 = vadd.f32 %v1636, %v2156
          %v2173 = vadd.f32 %v1637, %v2157
          %v2174 = vadd.f32 %v1638, %v2158
          %v2175 = vadd.f32 %v1639, %v2159
          %v2176 = vadd.f32 %v1640, %v2160
          %v2177 = vadd.f32 %v1641, %v2161
          %v2178 = vadd.f32 %v1642, %v2162
          %v2179 = vadd.f32 %v1643, %v2163
          %v2180 = vadd.f32 %v1644, %v2164
          %v2181 = vadd.f32 %v1645, %v2165
          %v2182 = vadd.f32 %v1646, %v2166
          %v2183 = vadd.f32 %v1647, %v2167
          %v2184 = vadd.f32 %v1648, %v2168
          %v2185 = vadd.f32 %v1649, %v2169
          %v2186 = vpack.c.bf16 %v2155, %v2154
          %v2187 = vpack.c.bf16 %v2157, %v2156
          %v2188 = vpack.c.bf16 %v2159, %v2158
          %v2189 = vpack.c.bf16 %v2161, %v2160
          %v2190 = vpack.c.bf16 %v2163, %v2162
          %v2191 = vpack.c.bf16 %v2165, %v2164
          %v2192 = vpack.c.bf16 %v2167, %v2166
          %v2193 = vpack.c.bf16 %v2169, %v2168
          %s2194 = scalar_lea.vmem [#allocation8], 64
          %v2195 = vld [vmem:[%s2194] sm:$0xf]
          %v2196 = vld [vmem:[%s2194 + $0x4] sm:$0xf]
          %v2197 = vld [vmem:[%s2194 + $0x8] sm:$0xf]
          %v2198 = vld [vmem:[%s2194 + $0xc] sm:$0xf]
          %v2199 = vld [vmem:[%s2194 + $0x10] sm:$0xf]
          %v2200 = vld [vmem:[%s2194 + $0x14] sm:$0xf]
          %v2201 = vld [vmem:[%s2194 + $0x18] sm:$0xf]
          %v2202 = vld [vmem:[%s2194 + $0x1c] sm:$0xf]
          %v2203 = vld [vmem:[%s2194 + $0x20] sm:$0xf]
          %v2204 = vld [vmem:[%s2194 + $0x24] sm:$0xf]
          %v2205 = vld [vmem:[%s2194 + $0x28] sm:$0xf]
          %v2206 = vld [vmem:[%s2194 + $0x2c] sm:$0xf]
          %v2207 = vld [vmem:[%s2194 + $0x30] sm:$0xf]
          %v2208 = vld [vmem:[%s2194 + $0x34] sm:$0xf]
          %v2209 = vld [vmem:[%s2194 + $0x38] sm:$0xf]
          %v2210 = vld [vmem:[%s2194 + $0x3c] sm:$0xf]
          %v2211 = vld [vmem:[#allocation9 + $0x2] sm:$0x1]
          %v2212 = vlaneseq
          %v2213 = vshrl.u32 %v2212, 7
          %v2214 = vsub.s32 0, %v2213
          %v2215 = vrot.slane %v2211, %v2214
          %v2232 = vunpack.c.l.b16 %v2195
          %v2233 = vunpack.c.l.b16 %v2196
          %v2234 = vunpack.c.l.b16 %v2197
          %v2235 = vunpack.c.l.b16 %v2198
          %v2236 = vunpack.c.l.b16 %v2199
          %v2237 = vunpack.c.l.b16 %v2200
          %v2238 = vunpack.c.l.b16 %v2201
          %v2239 = vunpack.c.l.b16 %v2202
          %v2240 = vunpack.c.l.b16 %v2203
          %v2241 = vunpack.c.l.b16 %v2204
          %v2242 = vunpack.c.l.b16 %v2205
          %v2243 = vunpack.c.l.b16 %v2206
          %v2244 = vunpack.c.l.b16 %v2207
          %v2245 = vunpack.c.l.b16 %v2208
          %v2246 = vunpack.c.l.b16 %v2209
          %v2247 = vunpack.c.l.b16 %v2210
          %v2248 = vpack.c.b16 %v2233, %v2232
          %v2249 = vpack.c.b16 %v2235, %v2234
          %v2250 = vpack.c.b16 %v2237, %v2236
          %v2251 = vpack.c.b16 %v2239, %v2238
          %v2252 = vpack.c.b16 %v2241, %v2240
          %v2253 = vpack.c.b16 %v2243, %v2242
          %v2254 = vpack.c.b16 %v2245, %v2244
          %v2255 = vpack.c.b16 %v2247, %v2246
          %2264 = vmatprep.subr.bf16.mxu0 0
          %2265 = vmatpush1.bf16.msra.mxu0 %v2248
          %2266 = vmatprep.subr.bf16.mxu0 0
          %2267 = vmatpush1.bf16.msra.mxu0 %v2249
          %2268 = vmatprep.subr.bf16.mxu0 0
          %2269 = vmatpush1.bf16.msra.mxu0 %v2250
          %2270 = vmatprep.subr.bf16.mxu0 0
          %2271 = vmatpush1.bf16.msra.mxu0 %v2251
          %2272 = vmatprep.subr.bf16.mxu0 0
          %2273 = vmatpush1.bf16.msra.mxu0 %v2252
          %2274 = vmatprep.subr.bf16.mxu0 0
          %2275 = vmatpush1.bf16.msra.mxu0 %v2253
          %2276 = vmatprep.subr.bf16.mxu0 0
          %2277 = vmatpush1.bf16.msra.mxu0 %v2254
          %2278 = vmatprep.subr.bf16.mxu0 0
          %2279 = vmatpush1.bf16.msra.mxu0 %v2255
          %2280 = vmatprep.subr.bf16.mxu0 0
          %2281 = vmatpush1.bf16.msra.mxu0 0
          %2282 = vmatprep.subr.bf16.mxu0 0
          %2283 = vmatpush1.bf16.msra.mxu0 0
          %2284 = vmatprep.subr.bf16.mxu0 0
          %2285 = vmatpush1.bf16.msra.mxu0 0
          %2286 = vmatprep.subr.bf16.mxu0 0
          %2287 = vmatpush1.bf16.msra.mxu0 0
          %2288 = vmatprep.subr.bf16.mxu0 0
          %2289 = vmatpush1.bf16.msra.mxu0 0
          %2290 = vmatprep.subr.bf16.mxu0 0
          %2291 = vmatpush1.bf16.msra.mxu0 0
          %2292 = vmatprep.subr.bf16.mxu0 0
          %2293 = vmatpush1.bf16.msra.mxu0 0
          %2294 = vmatprep.subr.bf16.mxu0 0
          %2295 = vmatpush1.bf16.msra.mxu0 0
          %2296 = vmatprep.mubr.bf16.mxu0 0
          %2297 = vmatmul.mubr.bf16.gmra.mrb[0].mxu0 %v2186
          %v2298 = vpop.f32.mrb[0].mxu0
          %v2299 = vadd.f32 %v2215, %v2298
          %v2300 = vpop.f32.mrb[0].mxu0
          %v2301 = vpop.f32.mrb[0].mxu0
          %v2302 = vadd.f32 %v2215, %v2301
          %v2303 = vpop.f32.mrb[0].mxu0
          %2304 = vmatprep.mubr.bf16.mxu0 0
          %2305 = vmatmul.mubr.bf16.gmra.mrb[0].mxu0 %v2187
          %v2306 = vpop.f32.mrb[0].mxu0
          %v2307 = vadd.f32 %v2215, %v2306
          %v2308 = vpop.f32.mrb[0].mxu0
          %v2309 = vpop.f32.mrb[0].mxu0
          %v2310 = vadd.f32 %v2215, %v2309
          %v2311 = vpop.f32.mrb[0].mxu0
          %2312 = vmatprep.mubr.bf16.mxu0 0
          %2313 = vmatmul.mubr.bf16.gmra.mrb[0].mxu0 %v2188
          %v2314 = vpop.f32.mrb[0].mxu0
          %v2315 = vadd.f32 %v2215, %v2314
          %v2316 = vpop.f32.mrb[0].mxu0
          %v2317 = vpop.f32.mrb[0].mxu0
          %v2318 = vadd.f32 %v2215, %v2317
          %v2319 = vpop.f32.mrb[0].mxu0
          %2320 = vmatprep.mubr.bf16.mxu0 0
          %2321 = vmatmul.mubr.bf16.gmra.mrb[0].mxu0 %v2189
          %v2322 = vpop.f32.mrb[0].mxu0
          %v2323 = vadd.f32 %v2215, %v2322
          %v2324 = vpop.f32.mrb[0].mxu0
          %v2325 = vpop.f32.mrb[0].mxu0
          %v2326 = vadd.f32 %v2215, %v2325
          %v2327 = vpop.f32.mrb[0].mxu0
          %2328 = vmatprep.mubr.bf16.mxu0 0
          %2329 = vmatmul.mubr.bf16.gmra.mrb[0].mxu0 %v2190
          %v2330 = vpop.f32.mrb[0].mxu0
          %v2331 = vadd.f32 %v2215, %v2330
          %v2332 = vpop.f32.mrb[0].mxu0
          %v2333 = vpop.f32.mrb[0].mxu0
          %v2334 = vadd.f32 %v2215, %v2333
          %v2335 = vpop.f32.mrb[0].mxu0
          %2336 = vmatprep.mubr.bf16.mxu0 0
          %2337 = vmatmul.mubr.bf16.gmra.mrb[0].mxu0 %v2191
          %v2338 = vpop.f32.mrb[0].mxu0
          %v2339 = vadd.f32 %v2215, %v2338
          %v2340 = vpop.f32.mrb[0].mxu0
          %v2341 = vpop.f32.mrb[0].mxu0
          %v2342 = vadd.f32 %v2215, %v2341
          %v2343 = vpop.f32.mrb[0].mxu0
          %2344 = vmatprep.mubr.bf16.mxu0 0
          %2345 = vmatmul.mubr.bf16.gmra.mrb[0].mxu0 %v2192
          %v2346 = vpop.f32.mrb[0].mxu0
          %v2347 = vadd.f32 %v2215, %v2346
          %v2348 = vpop.f32.mrb[0].mxu0
          %v2349 = vpop.f32.mrb[0].mxu0
          %v2350 = vadd.f32 %v2215, %v2349
          %v2351 = vpop.f32.mrb[0].mxu0
          %2352 = vmatprep.mubr.bf16.mxu0 0
          %2353 = vmatmul.mubr.bf16.gmra.mrb[0].mxu0 %v2193
          %v2354 = vpop.f32.mrb[0].mxu0
          %v2355 = vadd.f32 %v2215, %v2354
          %v2356 = vpop.f32.mrb[0].mxu0
          %v2357 = vpop.f32.mrb[0].mxu0
          %v2358 = vadd.f32 %v2215, %v2357
          %v2359 = vpop.f32.mrb[0].mxu0
          %2360 = vdwg.mxu0
          %v2361 = vadd.f32 %v2299, %v2170
          %v2362 = vadd.f32 %v2302, %v2171
          %v2363 = vadd.f32 %v2307, %v2172
          %v2364 = vadd.f32 %v2310, %v2173
          %v2365 = vadd.f32 %v2315, %v2174
          %v2366 = vadd.f32 %v2318, %v2175
          %v2367 = vadd.f32 %v2323, %v2176
          %v2368 = vadd.f32 %v2326, %v2177
          %v2369 = vadd.f32 %v2331, %v2178
          %v2370 = vadd.f32 %v2334, %v2179
          %v2371 = vadd.f32 %v2339, %v2180
          %v2372 = vadd.f32 %v2342, %v2181
          %v2373 = vadd.f32 %v2347, %v2182
          %v2374 = vadd.f32 %v2350, %v2183
          %v2375 = vadd.f32 %v2355, %v2184
          %v2376 = vadd.f32 %v2358, %v2185
          %v2377 = vmul.f32 %v2361, 0.5
          %v2378 = vmul.f32 %v2362, 0.5
          %v2379 = vmul.f32 %v2363, 0.5
          %v2380 = vmul.f32 %v2364, 0.5
          %v2381 = vmul.f32 %v2365, 0.5
          %v2382 = vmul.f32 %v2366, 0.5
          %v2383 = vmul.f32 %v2367, 0.5
          %v2384 = vmul.f32 %v2368, 0.5
          %v2385 = vmul.f32 %v2369, 0.5
          %v2386 = vmul.f32 %v2370, 0.5
          %v2387 = vmul.f32 %v2371, 0.5
          %v2388 = vmul.f32 %v2372, 0.5
          %v2389 = vmul.f32 %v2373, 0.5
          %v2390 = vmul.f32 %v2374, 0.5
          %v2391 = vmul.f32 %v2375, 0.5
          %v2392 = vmul.f32 %v2376, 0.5
          %v2393 = vtanh.pop %v2377
          %v2394 = vtanh.pop %v2378
          %v2395 = vtanh.pop %v2379
          %v2396 = vtanh.pop %v2380
          %v2397 = vtanh.pop %v2381
          %v2398 = vtanh.pop %v2382
          %v2399 = vtanh.pop %v2383
          %v2400 = vtanh.pop %v2384
          %v2401 = vtanh.pop %v2385
          %v2402 = vtanh.pop %v2386
          %v2403 = vtanh.pop %v2387
          %v2404 = vtanh.pop %v2388
          %v2405 = vtanh.pop %v2389
          %v2406 = vtanh.pop %v2390
          %v2407 = vtanh.pop %v2391
          %v2408 = vtanh.pop %v2392
          %v2409 = vadd.f32 %v2393, 1.0
          %v2410 = vadd.f32 %v2394, 1.0
          %v2411 = vadd.f32 %v2395, 1.0
          %v2412 = vadd.f32 %v2396, 1.0
          %v2413 = vadd.f32 %v2397, 1.0
          %v2414 = vadd.f32 %v2398, 1.0
          %v2415 = vadd.f32 %v2399, 1.0
          %v2416 = vadd.f32 %v2400, 1.0
          %v2417 = vadd.f32 %v2401, 1.0
          %v2418 = vadd.f32 %v2402, 1.0
          %v2419 = vadd.f32 %v2403, 1.0
          %v2420 = vadd.f32 %v2404, 1.0
          %v2421 = vadd.f32 %v2405, 1.0
          %v2422 = vadd.f32 %v2406, 1.0
          %v2423 = vadd.f32 %v2407, 1.0
          %v2424 = vadd.f32 %v2408, 1.0
          %v2425 = vmul.f32 %v2409, 0.5
          %v2426 = vmul.f32 %v2410, 0.5
          %v2427 = vmul.f32 %v2411, 0.5
          %v2428 = vmul.f32 %v2412, 0.5
          %v2429 = vmul.f32 %v2413, 0.5
          %v2430 = vmul.f32 %v2414, 0.5
          %v2431 = vmul.f32 %v2415, 0.5
          %v2432 = vmul.f32 %v2416, 0.5
          %v2433 = vmul.f32 %v2417, 0.5
          %v2434 = vmul.f32 %v2418, 0.5
          %v2435 = vmul.f32 %v2419, 0.5
          %v2436 = vmul.f32 %v2420, 0.5
          %v2437 = vmul.f32 %v2421, 0.5
          %v2438 = vmul.f32 %v2422, 0.5
          %v2439 = vmul.f32 %v2423, 0.5
          %v2440 = vmul.f32 %v2424, 0.5
          %v2441 = vmul.f32 %v2361, %v2425
          %v2442 = vmul.f32 %v2362, %v2426
          %v2443 = vmul.f32 %v2363, %v2427
          %v2444 = vmul.f32 %v2364, %v2428
          %v2445 = vmul.f32 %v2365, %v2429
          %v2446 = vmul.f32 %v2366, %v2430
          %v2447 = vmul.f32 %v2367, %v2431
          %v2448 = vmul.f32 %v2368, %v2432
          %v2449 = vmul.f32 %v2369, %v2433
          %v2450 = vmul.f32 %v2370, %v2434
          %v2451 = vmul.f32 %v2371, %v2435
          %v2452 = vmul.f32 %v2372, %v2436
          %v2453 = vmul.f32 %v2373, %v2437
          %v2454 = vmul.f32 %v2374, %v2438
          %v2455 = vmul.f32 %v2375, %v2439
          %v2456 = vmul.f32 %v2376, %v2440
          %v2457 = vld [vmem:[#allocation9 + $0x7] sm:$0x1]
          %v2458 = vld [vmem:[#allocation9 + $0xc] sm:$0x1]
          %2459 = vadd.xlane.f32.xlu0 %v2441
          %v2460 = vpop.xlane.xlu0 %2459
          %2461 = vadd.xlane.f32.xlu0 %v2442
          %v2462 = vpop.xlane.xlu0 %2461
          %2463 = vadd.xlane.f32.xlu0 %v2443
          %v2464 = vpop.xlane.xlu0 %2463
          %2465 = vadd.xlane.f32.xlu0 %v2444
          %v2466 = vpop.xlane.xlu0 %2465
          %2467 = vadd.xlane.f32.xlu0 %v2445
          %v2468 = vpop.xlane.xlu0 %2467
          %2469 = vadd.xlane.f32.xlu0 %v2446
          %v2470 = vpop.xlane.xlu0 %2469
          %2471 = vadd.xlane.f32.xlu0 %v2447
          %v2472 = vpop.xlane.xlu0 %2471
          %2473 = vadd.xlane.f32.xlu0 %v2448
          %v2474 = vpop.xlane.xlu0 %2473
          %2475 = vadd.xlane.f32.xlu0 %v2449
          %v2476 = vpop.xlane.xlu0 %2475
          %2477 = vadd.xlane.f32.xlu0 %v2450
          %v2478 = vpop.xlane.xlu0 %2477
          %2479 = vadd.xlane.f32.xlu0 %v2451
          %v2480 = vpop.xlane.xlu0 %2479
          %2481 = vadd.xlane.f32.xlu0 %v2452
          %v2482 = vpop.xlane.xlu0 %2481
          %2483 = vadd.xlane.f32.xlu0 %v2453
          %v2484 = vpop.xlane.xlu0 %2483
          %2485 = vadd.xlane.f32.xlu0 %v2454
          %v2486 = vpop.xlane.xlu0 %2485
          %2487 = vadd.xlane.f32.xlu0 %v2455
          %v2488 = vpop.xlane.xlu0 %2487
          %2489 = vadd.xlane.f32.xlu0 %v2456
          %v2490 = vpop.xlane.xlu0 %2489
          %v2491 = vmul.f32 %v2441, %v2441
          %v2492 = vmul.f32 %v2442, %v2442
          %v2493 = vmul.f32 %v2443, %v2443
          %v2494 = vmul.f32 %v2444, %v2444
          %v2495 = vmul.f32 %v2445, %v2445
          %v2496 = vmul.f32 %v2446, %v2446
          %v2497 = vmul.f32 %v2447, %v2447
          %v2498 = vmul.f32 %v2448, %v2448
          %v2499 = vmul.f32 %v2449, %v2449
          %v2500 = vmul.f32 %v2450, %v2450
          %v2501 = vmul.f32 %v2451, %v2451
          %v2502 = vmul.f32 %v2452, %v2452
          %v2503 = vmul.f32 %v2453, %v2453
          %v2504 = vmul.f32 %v2454, %v2454
          %v2505 = vmul.f32 %v2455, %v2455
          %v2506 = vmul.f32 %v2456, %v2456
          %2507 = vadd.xlane.f32.xlu0 %v2491
          %v2508 = vpop.xlane.xlu0 %2507
          %2509 = vadd.xlane.f32.xlu0 %v2492
          %v2510 = vpop.xlane.xlu0 %2509
          %2511 = vadd.xlane.f32.xlu0 %v2493
          %v2512 = vpop.xlane.xlu0 %2511
          %2513 = vadd.xlane.f32.xlu0 %v2494
          %v2514 = vpop.xlane.xlu0 %2513
          %2515 = vadd.xlane.f32.xlu0 %v2495
          %v2516 = vpop.xlane.xlu0 %2515
          %2517 = vadd.xlane.f32.xlu0 %v2496
          %v2518 = vpop.xlane.xlu0 %2517
          %2519 = vadd.xlane.f32.xlu0 %v2497
          %v2520 = vpop.xlane.xlu0 %2519
          %2521 = vadd.xlane.f32.xlu0 %v2498
          %v2522 = vpop.xlane.xlu0 %2521
          %2523 = vadd.xlane.f32.xlu0 %v2499
          %v2524 = vpop.xlane.xlu0 %2523
          %2525 = vadd.xlane.f32.xlu0 %v2500
          %v2526 = vpop.xlane.xlu0 %2525
          %2527 = vadd.xlane.f32.xlu0 %v2501
          %v2528 = vpop.xlane.xlu0 %2527
          %2529 = vadd.xlane.f32.xlu0 %v2502
          %v2530 = vpop.xlane.xlu0 %2529
          %2531 = vadd.xlane.f32.xlu0 %v2503
          %v2532 = vpop.xlane.xlu0 %2531
          %2533 = vadd.xlane.f32.xlu0 %v2504
          %v2534 = vpop.xlane.xlu0 %2533
          %2535 = vadd.xlane.f32.xlu0 %v2505
          %v2536 = vpop.xlane.xlu0 %2535
          %2537 = vadd.xlane.f32.xlu0 %v2506
          %v2538 = vpop.xlane.xlu0 %2537
          %v2539 = vmul.f32 %v2460, 0.0078125
          %v2540 = vmul.f32 %v2462, 0.0078125
          %v2541 = vmul.f32 %v2464, 0.0078125
          %v2542 = vmul.f32 %v2466, 0.0078125
          %v2543 = vmul.f32 %v2468, 0.0078125
          %v2544 = vmul.f32 %v2470, 0.0078125
          %v2545 = vmul.f32 %v2472, 0.0078125
          %v2546 = vmul.f32 %v2474, 0.0078125
          %v2547 = vmul.f32 %v2476, 0.0078125
          %v2548 = vmul.f32 %v2478, 0.0078125
          %v2549 = vmul.f32 %v2480, 0.0078125
          %v2550 = vmul.f32 %v2482, 0.0078125
          %v2551 = vmul.f32 %v2484, 0.0078125
          %v2552 = vmul.f32 %v2486, 0.0078125
          %v2553 = vmul.f32 %v2488, 0.0078125
          %v2554 = vmul.f32 %v2490, 0.0078125
          %v2555 = vmul.f32 %v2508, 0.0078125
          %v2556 = vmul.f32 %v2510, 0.0078125
          %v2557 = vmul.f32 %v2512, 0.0078125
          %v2558 = vmul.f32 %v2514, 0.0078125
          %v2559 = vmul.f32 %v2516, 0.0078125
          %v2560 = vmul.f32 %v2518, 0.0078125
          %v2561 = vmul.f32 %v2520, 0.0078125
          %v2562 = vmul.f32 %v2522, 0.0078125
          %v2563 = vmul.f32 %v2524, 0.0078125
          %v2564 = vmul.f32 %v2526, 0.0078125
          %v2565 = vmul.f32 %v2528, 0.0078125
          %v2566 = vmul.f32 %v2530, 0.0078125
          %v2567 = vmul.f32 %v2532, 0.0078125
          %v2568 = vmul.f32 %v2534, 0.0078125
          %v2569 = vmul.f32 %v2536, 0.0078125
          %v2570 = vmul.f32 %v2538, 0.0078125
          %v2571 = vmul.f32 %v2539, %v2539
          %v2572 = vmul.f32 %v2540, %v2540
          %v2573 = vmul.f32 %v2541, %v2541
          %v2574 = vmul.f32 %v2542, %v2542
          %v2575 = vmul.f32 %v2543, %v2543
          %v2576 = vmul.f32 %v2544, %v2544
          %v2577 = vmul.f32 %v2545, %v2545
          %v2578 = vmul.f32 %v2546, %v2546
          %v2579 = vmul.f32 %v2547, %v2547
          %v2580 = vmul.f32 %v2548, %v2548
          %v2581 = vmul.f32 %v2549, %v2549
          %v2582 = vmul.f32 %v2550, %v2550
          %v2583 = vmul.f32 %v2551, %v2551
          %v2584 = vmul.f32 %v2552, %v2552
          %v2585 = vmul.f32 %v2553, %v2553
          %v2586 = vmul.f32 %v2554, %v2554
          %v2587 = vsub.f32 %v2555, %v2571
          %v2588 = vsub.f32 %v2556, %v2572
          %v2589 = vsub.f32 %v2557, %v2573
          %v2590 = vsub.f32 %v2558, %v2574
          %v2591 = vsub.f32 %v2559, %v2575
          %v2592 = vsub.f32 %v2560, %v2576
          %v2593 = vsub.f32 %v2561, %v2577
          %v2594 = vsub.f32 %v2562, %v2578
          %v2595 = vsub.f32 %v2563, %v2579
          %v2596 = vsub.f32 %v2564, %v2580
          %v2597 = vsub.f32 %v2565, %v2581
          %v2598 = vsub.f32 %v2566, %v2582
          %v2599 = vsub.f32 %v2567, %v2583
          %v2600 = vsub.f32 %v2568, %v2584
          %v2601 = vsub.f32 %v2569, %v2585
          %v2602 = vsub.f32 %v2570, %v2586
          %v2603 = vadd.f32 %v2587, 0.1
          %v2604 = vadd.f32 %v2588, 0.1
          %v2605 = vadd.f32 %v2589, 0.1
          %v2606 = vadd.f32 %v2590, 0.1
          %v2607 = vadd.f32 %v2591, 0.1
          %v2608 = vadd.f32 %v2592, 0.1
          %v2609 = vadd.f32 %v2593, 0.1
          %v2610 = vadd.f32 %v2594, 0.1
          %v2611 = vadd.f32 %v2595, 0.1
          %v2612 = vadd.f32 %v2596, 0.1
          %v2613 = vadd.f32 %v2597, 0.1
          %v2614 = vadd.f32 %v2598, 0.1
          %v2615 = vadd.f32 %v2599, 0.1
          %v2616 = vadd.f32 %v2600, 0.1
          %v2617 = vadd.f32 %v2601, 0.1
          %v2618 = vadd.f32 %v2602, 0.1
          %v2619 = vrsqrt.pop %v2603
          %v2620 = vrsqrt.pop %v2604
          %v2621 = vrsqrt.pop %v2605
          %v2622 = vrsqrt.pop %v2606
          %v2623 = vrsqrt.pop %v2607
          %v2624 = vrsqrt.pop %v2608
          %v2625 = vrsqrt.pop %v2609
          %v2626 = vrsqrt.pop %v2610
          %v2627 = vrsqrt.pop %v2611
          %v2628 = vrsqrt.pop %v2612
          %v2629 = vrsqrt.pop %v2613
          %v2630 = vrsqrt.pop %v2614
          %v2631 = vrsqrt.pop %v2615
          %v2632 = vrsqrt.pop %v2616
          %v2633 = vrsqrt.pop %v2617
          %v2634 = vrsqrt.pop %v2618
          %v2635 = vlaneseq
          %v2636 = vshrl.u32 %v2635, 7
          %v2637 = vsub.s32 0, %v2636
          %v2638 = vrot.slane %v2457, %v2637
          %v2639 = vmul.f32 %v2638, %v2619
          %v2640 = vmul.f32 %v2638, %v2620
          %v2641 = vmul.f32 %v2638, %v2621
          %v2642 = vmul.f32 %v2638, %v2622
          %v2643 = vmul.f32 %v2638, %v2623
          %v2644 = vmul.f32 %v2638, %v2624
          %v2645 = vmul.f32 %v2638, %v2625
          %v2646 = vmul.f32 %v2638, %v2626
          %v2647 = vmul.f32 %v2638, %v2627
          %v2648 = vmul.f32 %v2638, %v2628
          %v2649 = vmul.f32 %v2638, %v2629
          %v2650 = vmul.f32 %v2638, %v2630
          %v2651 = vmul.f32 %v2638, %v2631
          %v2652 = vmul.f32 %v2638, %v2632
          %v2653 = vmul.f32 %v2638, %v2633
          %v2654 = vmul.f32 %v2638, %v2634
          %v2655 = vsub.f32 %v2441, %v2539
          %v2656 = vsub.f32 %v2442, %v2540
          %v2657 = vsub.f32 %v2443, %v2541
          %v2658 = vsub.f32 %v2444, %v2542
          %v2659 = vsub.f32 %v2445, %v2543
          %v2660 = vsub.f32 %v2446, %v2544
          %v2661 = vsub.f32 %v2447, %v2545
          %v2662 = vsub.f32 %v2448, %v2546
          %v2663 = vsub.f32 %v2449, %v2547
          %v2664 = vsub.f32 %v2450, %v2548
          %v2665 = vsub.f32 %v2451, %v2549
          %v2666 = vsub.f32 %v2452, %v2550
          %v2667 = vsub.f32 %v2453, %v2551
          %v2668 = vsub.f32 %v2454, %v2552
          %v2669 = vsub.f32 %v2455, %v2553
          %v2670 = vsub.f32 %v2456, %v2554
          %v2671 = vmul.f32 %v2655, %v2639
          %v2672 = vmul.f32 %v2656, %v2640
          %v2673 = vmul.f32 %v2657, %v2641
          %v2674 = vmul.f32 %v2658, %v2642
          %v2675 = vmul.f32 %v2659, %v2643
          %v2676 = vmul.f32 %v2660, %v2644
          %v2677 = vmul.f32 %v2661, %v2645
          %v2678 = vmul.f32 %v2662, %v2646
          %v2679 = vmul.f32 %v2663, %v2647
          %v2680 = vmul.f32 %v2664, %v2648
          %v2681 = vmul.f32 %v2665, %v2649
          %v2682 = vmul.f32 %v2666, %v2650
          %v2683 = vmul.f32 %v2667, %v2651
          %v2684 = vmul.f32 %v2668, %v2652
          %v2685 = vmul.f32 %v2669, %v2653
          %v2686 = vmul.f32 %v2670, %v2654
          %v2687 = vlaneseq
          %v2688 = vshrl.u32 %v2687, 7
          %v2689 = vsub.s32 0, %v2688
          %v2690 = vrot.slane %v2458, %v2689
          %v2691 = vadd.f32 %v2671, %v2690
          %v2692 = vadd.f32 %v2672, %v2690
          %v2693 = vadd.f32 %v2673, %v2690
          %v2694 = vadd.f32 %v2674, %v2690
          %v2695 = vadd.f32 %v2675, %v2690
          %v2696 = vadd.f32 %v2676, %v2690
          %v2697 = vadd.f32 %v2677, %v2690
          %v2698 = vadd.f32 %v2678, %v2690
          %v2699 = vadd.f32 %v2679, %v2690
          %v2700 = vadd.f32 %v2680, %v2690
          %v2701 = vadd.f32 %v2681, %v2690
          %v2702 = vadd.f32 %v2682, %v2690
          %v2703 = vadd.f32 %v2683, %v2690
          %v2704 = vadd.f32 %v2684, %v2690
          %v2705 = vadd.f32 %v2685, %v2690
          %v2706 = vadd.f32 %v2686, %v2690
          %v2707 = vadd.f32 %v2170, %v2691
          %v2708 = vadd.f32 %v2171, %v2692
          %v2709 = vadd.f32 %v2172, %v2693
          %v2710 = vadd.f32 %v2173, %v2694
          %v2711 = vadd.f32 %v2174, %v2695
          %v2712 = vadd.f32 %v2175, %v2696
          %v2713 = vadd.f32 %v2176, %v2697
          %v2714 = vadd.f32 %v2177, %v2698
          %v2715 = vadd.f32 %v2178, %v2699
          %v2716 = vadd.f32 %v2179, %v2700
          %v2717 = vadd.f32 %v2180, %v2701
          %v2718 = vadd.f32 %v2181, %v2702
          %v2719 = vadd.f32 %v2182, %v2703
          %v2720 = vadd.f32 %v2183, %v2704
          %v2721 = vadd.f32 %v2184, %v2705
          %v2722 = vadd.f32 %v2185, %v2706
          %v2723 = vpack.c.bf16 %v2692, %v2691
          %v2724 = vpack.c.bf16 %v2694, %v2693
          %v2725 = vpack.c.bf16 %v2696, %v2695
          %v2726 = vpack.c.bf16 %v2698, %v2697
          %v2727 = vpack.c.bf16 %v2700, %v2699
          %v2728 = vpack.c.bf16 %v2702, %v2701
          %v2729 = vpack.c.bf16 %v2704, %v2703
          %v2730 = vpack.c.bf16 %v2706, %v2705
          %s2731 = scalar_lea.vmem [#allocation8], 128
          %v2732 = vld [vmem:[%s2731] sm:$0xf]
          %v2733 = vld [vmem:[%s2731 + $0x4] sm:$0xf]
          %v2734 = vld [vmem:[%s2731 + $0x8] sm:$0xf]
          %v2735 = vld [vmem:[%s2731 + $0xc] sm:$0xf]
          %v2736 = vld [vmem:[%s2731 + $0x10] sm:$0xf]
          %v2737 = vld [vmem:[%s2731 + $0x14] sm:$0xf]
          %v2738 = vld [vmem:[%s2731 + $0x18] sm:$0xf]
          %v2739 = vld [vmem:[%s2731 + $0x1c] sm:$0xf]
          %v2740 = vld [vmem:[%s2731 + $0x20] sm:$0xf]
          %v2741 = vld [vmem:[%s2731 + $0x24] sm:$0xf]
          %v2742 = vld [vmem:[%s2731 + $0x28] sm:$0xf]
          %v2743 = vld [vmem:[%s2731 + $0x2c] sm:$0xf]
          %v2744 = vld [vmem:[%s2731 + $0x30] sm:$0xf]
          %v2745 = vld [vmem:[%s2731 + $0x34] sm:$0xf]
          %v2746 = vld [vmem:[%s2731 + $0x38] sm:$0xf]
          %v2747 = vld [vmem:[%s2731 + $0x3c] sm:$0xf]
          %v2748 = vld [vmem:[#allocation9 + $0x3] sm:$0x1]
          %v2749 = vlaneseq
          %v2750 = vshrl.u32 %v2749, 7
          %v2751 = vsub.s32 0, %v2750
          %v2752 = vrot.slane %v2748, %v2751
          %v2769 = vunpack.c.l.b16 %v2732
          %v2770 = vunpack.c.l.b16 %v2733
          %v2771 = vunpack.c.l.b16 %v2734
          %v2772 = vunpack.c.l.b16 %v2735
          %v2773 = vunpack.c.l.b16 %v2736
          %v2774 = vunpack.c.l.b16 %v2737
          %v2775 = vunpack.c.l.b16 %v2738
          %v2776 = vunpack.c.l.b16 %v2739
          %v2777 = vunpack.c.l.b16 %v2740
          %v2778 = vunpack.c.l.b16 %v2741
          %v2779 = vunpack.c.l.b16 %v2742
          %v2780 = vunpack.c.l.b16 %v2743
          %v2781 = vunpack.c.l.b16 %v2744
          %v2782 = vunpack.c.l.b16 %v2745
          %v2783 = vunpack.c.l.b16 %v2746
          %v2784 = vunpack.c.l.b16 %v2747
          %v2785 = vpack.c.b16 %v2770, %v2769
          %v2786 = vpack.c.b16 %v2772, %v2771
          %v2787 = vpack.c.b16 %v2774, %v2773
          %v2788 = vpack.c.b16 %v2776, %v2775
          %v2789 = vpack.c.b16 %v2778, %v2777
          %v2790 = vpack.c.b16 %v2780, %v2779
          %v2791 = vpack.c.b16 %v2782, %v2781
          %v2792 = vpack.c.b16 %v2784, %v2783
          %2801 = vmatprep.subr.bf16.mxu0 0
          %2802 = vmatpush1.bf16.msra.mxu0 %v2785
          %2803 = vmatprep.subr.bf16.mxu0 0
          %2804 = vmatpush1.bf16.msra.mxu0 %v2786
          %2805 = vmatprep.subr.bf16.mxu0 0
          %2806 = vmatpush1.bf16.msra.mxu0 %v2787
          %2807 = vmatprep.subr.bf16.mxu0 0
          %2808 = vmatpush1.bf16.msra.mxu0 %v2788
          %2809 = vmatprep.subr.bf16.mxu0 0
          %2810 = vmatpush1.bf16.msra.mxu0 %v2789
          %2811 = vmatprep.subr.bf16.mxu0 0
          %2812 = vmatpush1.bf16.msra.mxu0 %v2790
          %2813 = vmatprep.subr.bf16.mxu0 0
          %2814 = vmatpush1.bf16.msra.mxu0 %v2791
          %2815 = vmatprep.subr.bf16.mxu0 0
          %2816 = vmatpush1.bf16.msra.mxu0 %v2792
          %2817 = vmatprep.subr.bf16.mxu0 0
          %2818 = vmatpush1.bf16.msra.mxu0 0
          %2819 = vmatprep.subr.bf16.mxu0 0
          %2820 = vmatpush1.bf16.msra.mxu0 0
          %2821 = vmatprep.subr.bf16.mxu0 0
          %2822 = vmatpush1.bf16.msra.mxu0 0
          %2823 = vmatprep.subr.bf16.mxu0 0
          %2824 = vmatpush1.bf16.msra.mxu0 0
          %2825 = vmatprep.subr.bf16.mxu0 0
          %2826 = vmatpush1.bf16.msra.mxu0 0
          %2827 = vmatprep.subr.bf16.mxu0 0
          %2828 = vmatpush1.bf16.msra.mxu0 0
          %2829 = vmatprep.subr.bf16.mxu0 0
          %2830 = vmatpush1.bf16.msra.mxu0 0
          %2831 = vmatprep.subr.bf16.mxu0 0
          %2832 = vmatpush1.bf16.msra.mxu0 0
          %2833 = vmatprep.mubr.bf16.mxu0 0
          %2834 = vmatmul.mubr.bf16.gmra.mrb[0].mxu0 %v2723
          %v2835 = vpop.f32.mrb[0].mxu0
          %v2836 = vadd.f32 %v2752, %v2835
          %v2837 = vpop.f32.mrb[0].mxu0
          %v2838 = vpop.f32.mrb[0].mxu0
          %v2839 = vadd.f32 %v2752, %v2838
          %v2840 = vpop.f32.mrb[0].mxu0
          %2841 = vmatprep.mubr.bf16.mxu0 0
          %2842 = vmatmul.mubr.bf16.gmra.mrb[0].mxu0 %v2724
          %v2843 = vpop.f32.mrb[0].mxu0
          %v2844 = vadd.f32 %v2752, %v2843
          %v2845 = vpop.f32.mrb[0].mxu0
          %v2846 = vpop.f32.mrb[0].mxu0
          %v2847 = vadd.f32 %v2752, %v2846
          %v2848 = vpop.f32.mrb[0].mxu0
          %2849 = vmatprep.mubr.bf16.mxu0 0
          %2850 = vmatmul.mubr.bf16.gmra.mrb[0].mxu0 %v2725
          %v2851 = vpop.f32.mrb[0].mxu0
          %v2852 = vadd.f32 %v2752, %v2851
          %v2853 = vpop.f32.mrb[0].mxu0
          %v2854 = vpop.f32.mrb[0].mxu0
          %v2855 = vadd.f32 %v2752, %v2854
          %v2856 = vpop.f32.mrb[0].mxu0
          %2857 = vmatprep.mubr.bf16.mxu0 0
          %2858 = vmatmul.mubr.bf16.gmra.mrb[0].mxu0 %v2726
          %v2859 = vpop.f32.mrb[0].mxu0
          %v2860 = vadd.f32 %v2752, %v2859
          %v2861 = vpop.f32.mrb[0].mxu0
          %v2862 = vpop.f32.mrb[0].mxu0
          %v2863 = vadd.f32 %v2752, %v2862
          %v2864 = vpop.f32.mrb[0].mxu0
          %2865 = vmatprep.mubr.bf16.mxu0 0
          %2866 = vmatmul.mubr.bf16.gmra.mrb[0].mxu0 %v2727
          %v2867 = vpop.f32.mrb[0].mxu0
          %v2868 = vadd.f32 %v2752, %v2867
          %v2869 = vpop.f32.mrb[0].mxu0
          %v2870 = vpop.f32.mrb[0].mxu0
          %v2871 = vadd.f32 %v2752, %v2870
          %v2872 = vpop.f32.mrb[0].mxu0
          %2873 = vmatprep.mubr.bf16.mxu0 0
          %2874 = vmatmul.mubr.bf16.gmra.mrb[0].mxu0 %v2728
          %v2875 = vpop.f32.mrb[0].mxu0
          %v2876 = vadd.f32 %v2752, %v2875
          %v2877 = vpop.f32.mrb[0].mxu0
          %v2878 = vpop.f32.mrb[0].mxu0
          %v2879 = vadd.f32 %v2752, %v2878
          %v2880 = vpop.f32.mrb[0].mxu0
          %2881 = vmatprep.mubr.bf16.mxu0 0
          %2882 = vmatmul.mubr.bf16.gmra.mrb[0].mxu0 %v2729
          %v2883 = vpop.f32.mrb[0].mxu0
          %v2884 = vadd.f32 %v2752, %v2883
          %v2885 = vpop.f32.mrb[0].mxu0
          %v2886 = vpop.f32.mrb[0].mxu0
          %v2887 = vadd.f32 %v2752, %v2886
          %v2888 = vpop.f32.mrb[0].mxu0
          %2889 = vmatprep.mubr.bf16.mxu0 0
          %2890 = vmatmul.mubr.bf16.gmra.mrb[0].mxu0 %v2730
          %v2891 = vpop.f32.mrb[0].mxu0
          %v2892 = vadd.f32 %v2752, %v2891
          %v2893 = vpop.f32.mrb[0].mxu0
          %v2894 = vpop.f32.mrb[0].mxu0
          %v2895 = vadd.f32 %v2752, %v2894
          %v2896 = vpop.f32.mrb[0].mxu0
          %2897 = vdwg.mxu0
          %v2898 = vadd.f32 %v2836, %v2707
          %v2899 = vadd.f32 %v2839, %v2708
          %v2900 = vadd.f32 %v2844, %v2709
          %v2901 = vadd.f32 %v2847, %v2710
          %v2902 = vadd.f32 %v2852, %v2711
          %v2903 = vadd.f32 %v2855, %v2712
          %v2904 = vadd.f32 %v2860, %v2713
          %v2905 = vadd.f32 %v2863, %v2714
          %v2906 = vadd.f32 %v2868, %v2715
          %v2907 = vadd.f32 %v2871, %v2716
          %v2908 = vadd.f32 %v2876, %v2717
          %v2909 = vadd.f32 %v2879, %v2718
          %v2910 = vadd.f32 %v2884, %v2719
          %v2911 = vadd.f32 %v2887, %v2720
          %v2912 = vadd.f32 %v2892, %v2721
          %v2913 = vadd.f32 %v2895, %v2722
          %v2914 = vmul.f32 %v2898, 0.5
          %v2915 = vmul.f32 %v2899, 0.5
          %v2916 = vmul.f32 %v2900, 0.5
          %v2917 = vmul.f32 %v2901, 0.5
          %v2918 = vmul.f32 %v2902, 0.5
          %v2919 = vmul.f32 %v2903, 0.5
          %v2920 = vmul.f32 %v2904, 0.5
          %v2921 = vmul.f32 %v2905, 0.5
          %v2922 = vmul.f32 %v2906, 0.5
          %v2923 = vmul.f32 %v2907, 0.5
          %v2924 = vmul.f32 %v2908, 0.5
          %v2925 = vmul.f32 %v2909, 0.5
          %v2926 = vmul.f32 %v2910, 0.5
          %v2927 = vmul.f32 %v2911, 0.5
          %v2928 = vmul.f32 %v2912, 0.5
          %v2929 = vmul.f32 %v2913, 0.5
          %v2930 = vtanh.pop %v2914
          %v2931 = vtanh.pop %v2915
          %v2932 = vtanh.pop %v2916
          %v2933 = vtanh.pop %v2917
          %v2934 = vtanh.pop %v2918
          %v2935 = vtanh.pop %v2919
          %v2936 = vtanh.pop %v2920
          %v2937 = vtanh.pop %v2921
          %v2938 = vtanh.pop %v2922
          %v2939 = vtanh.pop %v2923
          %v2940 = vtanh.pop %v2924
          %v2941 = vtanh.pop %v2925
          %v2942 = vtanh.pop %v2926
          %v2943 = vtanh.pop %v2927
          %v2944 = vtanh.pop %v2928
          %v2945 = vtanh.pop %v2929
          %v2946 = vadd.f32 %v2930, 1.0
          %v2947 = vadd.f32 %v2931, 1.0
          %v2948 = vadd.f32 %v2932, 1.0
          %v2949 = vadd.f32 %v2933, 1.0
          %v2950 = vadd.f32 %v2934, 1.0
          %v2951 = vadd.f32 %v2935, 1.0
          %v2952 = vadd.f32 %v2936, 1.0
          %v2953 = vadd.f32 %v2937, 1.0
          %v2954 = vadd.f32 %v2938, 1.0
          %v2955 = vadd.f32 %v2939, 1.0
          %v2956 = vadd.f32 %v2940, 1.0
          %v2957 = vadd.f32 %v2941, 1.0
          %v2958 = vadd.f32 %v2942, 1.0
          %v2959 = vadd.f32 %v2943, 1.0
          %v2960 = vadd.f32 %v2944, 1.0
          %v2961 = vadd.f32 %v2945, 1.0
          %v2962 = vmul.f32 %v2946, 0.5
          %v2963 = vmul.f32 %v2947, 0.5
          %v2964 = vmul.f32 %v2948, 0.5
          %v2965 = vmul.f32 %v2949, 0.5
          %v2966 = vmul.f32 %v2950, 0.5
          %v2967 = vmul.f32 %v2951, 0.5
          %v2968 = vmul.f32 %v2952, 0.5
          %v2969 = vmul.f32 %v2953, 0.5
          %v2970 = vmul.f32 %v2954, 0.5
          %v2971 = vmul.f32 %v2955, 0.5
          %v2972 = vmul.f32 %v2956, 0.5
          %v2973 = vmul.f32 %v2957, 0.5
          %v2974 = vmul.f32 %v2958, 0.5
          %v2975 = vmul.f32 %v2959, 0.5
          %v2976 = vmul.f32 %v2960, 0.5
          %v2977 = vmul.f32 %v2961, 0.5
          %v2978 = vmul.f32 %v2898, %v2962
          %v2979 = vmul.f32 %v2899, %v2963
          %v2980 = vmul.f32 %v2900, %v2964
          %v2981 = vmul.f32 %v2901, %v2965
          %v2982 = vmul.f32 %v2902, %v2966
          %v2983 = vmul.f32 %v2903, %v2967
          %v2984 = vmul.f32 %v2904, %v2968
          %v2985 = vmul.f32 %v2905, %v2969
          %v2986 = vmul.f32 %v2906, %v2970
          %v2987 = vmul.f32 %v2907, %v2971
          %v2988 = vmul.f32 %v2908, %v2972
          %v2989 = vmul.f32 %v2909, %v2973
          %v2990 = vmul.f32 %v2910, %v2974
          %v2991 = vmul.f32 %v2911, %v2975
          %v2992 = vmul.f32 %v2912, %v2976
          %v2993 = vmul.f32 %v2913, %v2977
          %v2994 = vld [vmem:[#allocation9 + $0x8] sm:$0x1]
          %v2995 = vld [vmem:[#allocation9 + $0xd] sm:$0x1]
          %2996 = vadd.xlane.f32.xlu0 %v2978
          %v2997 = vpop.xlane.xlu0 %2996
          %2998 = vadd.xlane.f32.xlu0 %v2979
          %v2999 = vpop.xlane.xlu0 %2998
          %3000 = vadd.xlane.f32.xlu0 %v2980
          %v3001 = vpop.xlane.xlu0 %3000
          %3002 = vadd.xlane.f32.xlu0 %v2981
          %v3003 = vpop.xlane.xlu0 %3002
          %3004 = vadd.xlane.f32.xlu0 %v2982
          %v3005 = vpop.xlane.xlu0 %3004
          %3006 = vadd.xlane.f32.xlu0 %v2983
          %v3007 = vpop.xlane.xlu0 %3006
          %3008 = vadd.xlane.f32.xlu0 %v2984
          %v3009 = vpop.xlane.xlu0 %3008
          %3010 = vadd.xlane.f32.xlu0 %v2985
          %v3011 = vpop.xlane.xlu0 %3010
          %3012 = vadd.xlane.f32.xlu0 %v2986
          %v3013 = vpop.xlane.xlu0 %3012
          %3014 = vadd.xlane.f32.xlu0 %v2987
          %v3015 = vpop.xlane.xlu0 %3014
          %3016 = vadd.xlane.f32.xlu0 %v2988
          %v3017 = vpop.xlane.xlu0 %3016
          %3018 = vadd.xlane.f32.xlu0 %v2989
          %v3019 = vpop.xlane.xlu0 %3018
          %3020 = vadd.xlane.f32.xlu0 %v2990
          %v3021 = vpop.xlane.xlu0 %3020
          %3022 = vadd.xlane.f32.xlu0 %v2991
          %v3023 = vpop.xlane.xlu0 %3022
          %3024 = vadd.xlane.f32.xlu0 %v2992
          %v3025 = vpop.xlane.xlu0 %3024
          %3026 = vadd.xlane.f32.xlu0 %v2993
          %v3027 = vpop.xlane.xlu0 %3026
          %v3028 = vmul.f32 %v2978, %v2978
          %v3029 = vmul.f32 %v2979, %v2979
          %v3030 = vmul.f32 %v2980, %v2980
          %v3031 = vmul.f32 %v2981, %v2981
          %v3032 = vmul.f32 %v2982, %v2982
          %v3033 = vmul.f32 %v2983, %v2983
          %v3034 = vmul.f32 %v2984, %v2984
          %v3035 = vmul.f32 %v2985, %v2985
          %v3036 = vmul.f32 %v2986, %v2986
          %v3037 = vmul.f32 %v2987, %v2987
          %v3038 = vmul.f32 %v2988, %v2988
          %v3039 = vmul.f32 %v2989, %v2989
          %v3040 = vmul.f32 %v2990, %v2990
          %v3041 = vmul.f32 %v2991, %v2991
          %v3042 = vmul.f32 %v2992, %v2992
          %v3043 = vmul.f32 %v2993, %v2993
          %3044 = vadd.xlane.f32.xlu0 %v3028
          %v3045 = vpop.xlane.xlu0 %3044
          %3046 = vadd.xlane.f32.xlu0 %v3029
          %v3047 = vpop.xlane.xlu0 %3046
          %3048 = vadd.xlane.f32.xlu0 %v3030
          %v3049 = vpop.xlane.xlu0 %3048
          %3050 = vadd.xlane.f32.xlu0 %v3031
          %v3051 = vpop.xlane.xlu0 %3050
          %3052 = vadd.xlane.f32.xlu0 %v3032
          %v3053 = vpop.xlane.xlu0 %3052
          %3054 = vadd.xlane.f32.xlu0 %v3033
          %v3055 = vpop.xlane.xlu0 %3054
          %3056 = vadd.xlane.f32.xlu0 %v3034
          %v3057 = vpop.xlane.xlu0 %3056
          %3058 = vadd.xlane.f32.xlu0 %v3035
          %v3059 = vpop.xlane.xlu0 %3058
          %3060 = vadd.xlane.f32.xlu0 %v3036
          %v3061 = vpop.xlane.xlu0 %3060
          %3062 = vadd.xlane.f32.xlu0 %v3037
          %v3063 = vpop.xlane.xlu0 %3062
          %3064 = vadd.xlane.f32.xlu0 %v3038
          %v3065 = vpop.xlane.xlu0 %3064
          %3066 = vadd.xlane.f32.xlu0 %v3039
          %v3067 = vpop.xlane.xlu0 %3066
          %3068 = vadd.xlane.f32.xlu0 %v3040
          %v3069 = vpop.xlane.xlu0 %3068
          %3070 = vadd.xlane.f32.xlu0 %v3041
          %v3071 = vpop.xlane.xlu0 %3070
          %3072 = vadd.xlane.f32.xlu0 %v3042
          %v3073 = vpop.xlane.xlu0 %3072
          %3074 = vadd.xlane.f32.xlu0 %v3043
          %v3075 = vpop.xlane.xlu0 %3074
          %v3076 = vmul.f32 %v2997, 0.0078125
          %v3077 = vmul.f32 %v2999, 0.0078125
          %v3078 = vmul.f32 %v3001, 0.0078125
          %v3079 = vmul.f32 %v3003, 0.0078125
          %v3080 = vmul.f32 %v3005, 0.0078125
          %v3081 = vmul.f32 %v3007, 0.0078125
          %v3082 = vmul.f32 %v3009, 0.0078125
          %v3083 = vmul.f32 %v3011, 0.0078125
          %v3084 = vmul.f32 %v3013, 0.0078125
          %v3085 = vmul.f32 %v3015, 0.0078125
          %v3086 = vmul.f32 %v3017, 0.0078125
          %v3087 = vmul.f32 %v3019, 0.0078125
          %v3088 = vmul.f32 %v3021, 0.0078125
          %v3089 = vmul.f32 %v3023, 0.0078125
          %v3090 = vmul.f32 %v3025, 0.0078125
          %v3091 = vmul.f32 %v3027, 0.0078125
          %v3092 = vmul.f32 %v3045, 0.0078125
          %v3093 = vmul.f32 %v3047, 0.0078125
          %v3094 = vmul.f32 %v3049, 0.0078125
          %v3095 = vmul.f32 %v3051, 0.0078125
          %v3096 = vmul.f32 %v3053, 0.0078125
          %v3097 = vmul.f32 %v3055, 0.0078125
          %v3098 = vmul.f32 %v3057, 0.0078125
          %v3099 = vmul.f32 %v3059, 0.0078125
          %v3100 = vmul.f32 %v3061, 0.0078125
          %v3101 = vmul.f32 %v3063, 0.0078125
          %v3102 = vmul.f32 %v3065, 0.0078125
          %v3103 = vmul.f32 %v3067, 0.0078125
          %v3104 = vmul.f32 %v3069, 0.0078125
          %v3105 = vmul.f32 %v3071, 0.0078125
          %v3106 = vmul.f32 %v3073, 0.0078125
          %v3107 = vmul.f32 %v3075, 0.0078125
          %v3108 = vmul.f32 %v3076, %v3076
          %v3109 = vmul.f32 %v3077, %v3077
          %v3110 = vmul.f32 %v3078, %v3078
          %v3111 = vmul.f32 %v3079, %v3079
          %v3112 = vmul.f32 %v3080, %v3080
          %v3113 = vmul.f32 %v3081, %v3081
          %v3114 = vmul.f32 %v3082, %v3082
          %v3115 = vmul.f32 %v3083, %v3083
          %v3116 = vmul.f32 %v3084, %v3084
          %v3117 = vmul.f32 %v3085, %v3085
          %v3118 = vmul.f32 %v3086, %v3086
          %v3119 = vmul.f32 %v3087, %v3087
          %v3120 = vmul.f32 %v3088, %v3088
          %v3121 = vmul.f32 %v3089, %v3089
          %v3122 = vmul.f32 %v3090, %v3090
          %v3123 = vmul.f32 %v3091, %v3091
          %v3124 = vsub.f32 %v3092, %v3108
          %v3125 = vsub.f32 %v3093, %v3109
          %v3126 = vsub.f32 %v3094, %v3110
          %v3127 = vsub.f32 %v3095, %v3111
          %v3128 = vsub.f32 %v3096, %v3112
          %v3129 = vsub.f32 %v3097, %v3113
          %v3130 = vsub.f32 %v3098, %v3114
          %v3131 = vsub.f32 %v3099, %v3115
          %v3132 = vsub.f32 %v3100, %v3116
          %v3133 = vsub.f32 %v3101, %v3117
          %v3134 = vsub.f32 %v3102, %v3118
          %v3135 = vsub.f32 %v3103, %v3119
          %v3136 = vsub.f32 %v3104, %v3120
          %v3137 = vsub.f32 %v3105, %v3121
          %v3138 = vsub.f32 %v3106, %v3122
          %v3139 = vsub.f32 %v3107, %v3123
          %v3140 = vadd.f32 %v3124, 0.1
          %v3141 = vadd.f32 %v3125, 0.1
          %v3142 = vadd.f32 %v3126, 0.1
          %v3143 = vadd.f32 %v3127, 0.1
          %v3144 = vadd.f32 %v3128, 0.1
          %v3145 = vadd.f32 %v3129, 0.1
          %v3146 = vadd.f32 %v3130, 0.1
          %v3147 = vadd.f32 %v3131, 0.1
          %v3148 = vadd.f32 %v3132, 0.1
          %v3149 = vadd.f32 %v3133, 0.1
          %v3150 = vadd.f32 %v3134, 0.1
          %v3151 = vadd.f32 %v3135, 0.1
          %v3152 = vadd.f32 %v3136, 0.1
          %v3153 = vadd.f32 %v3137, 0.1
          %v3154 = vadd.f32 %v3138, 0.1
          %v3155 = vadd.f32 %v3139, 0.1
          %v3156 = vrsqrt.pop %v3140
          %v3157 = vrsqrt.pop %v3141
          %v3158 = vrsqrt.pop %v3142
          %v3159 = vrsqrt.pop %v3143
          %v3160 = vrsqrt.pop %v3144
          %v3161 = vrsqrt.pop %v3145
          %v3162 = vrsqrt.pop %v3146
          %v3163 = vrsqrt.pop %v3147
          %v3164 = vrsqrt.pop %v3148
          %v3165 = vrsqrt.pop %v3149
          %v3166 = vrsqrt.pop %v3150
          %v3167 = vrsqrt.pop %v3151
          %v3168 = vrsqrt.pop %v3152
          %v3169 = vrsqrt.pop %v3153
          %v3170 = vrsqrt.pop %v3154
          %v3171 = vrsqrt.pop %v3155
          %v3172 = vlaneseq
          %v3173 = vshrl.u32 %v3172, 7
          %v3174 = vsub.s32 0, %v3173
          %v3175 = vrot.slane %v2994, %v3174
          %v3176 = vmul.f32 %v3175, %v3156
          %v3177 = vmul.f32 %v3175, %v3157
          %v3178 = vmul.f32 %v3175, %v3158
          %v3179 = vmul.f32 %v3175, %v3159
          %v3180 = vmul.f32 %v3175, %v3160
          %v3181 = vmul.f32 %v3175, %v3161
          %v3182 = vmul.f32 %v3175, %v3162
          %v3183 = vmul.f32 %v3175, %v3163
          %v3184 = vmul.f32 %v3175, %v3164
          %v3185 = vmul.f32 %v3175, %v3165
          %v3186 = vmul.f32 %v3175, %v3166
          %v3187 = vmul.f32 %v3175, %v3167
          %v3188 = vmul.f32 %v3175, %v3168
          %v3189 = vmul.f32 %v3175, %v3169
          %v3190 = vmul.f32 %v3175, %v3170
          %v3191 = vmul.f32 %v3175, %v3171
          %v3192 = vsub.f32 %v2978, %v3076
          %v3193 = vsub.f32 %v2979, %v3077
          %v3194 = vsub.f32 %v2980, %v3078
          %v3195 = vsub.f32 %v2981, %v3079
          %v3196 = vsub.f32 %v2982, %v3080
          %v3197 = vsub.f32 %v2983, %v3081
          %v3198 = vsub.f32 %v2984, %v3082
          %v3199 = vsub.f32 %v2985, %v3083
          %v3200 = vsub.f32 %v2986, %v3084
          %v3201 = vsub.f32 %v2987, %v3085
          %v3202 = vsub.f32 %v2988, %v3086
          %v3203 = vsub.f32 %v2989, %v3087
          %v3204 = vsub.f32 %v2990, %v3088
          %v3205 = vsub.f32 %v2991, %v3089
          %v3206 = vsub.f32 %v2992, %v3090
          %v3207 = vsub.f32 %v2993, %v3091
          %v3208 = vmul.f32 %v3192, %v3176
          %v3209 = vmul.f32 %v3193, %v3177
          %v3210 = vmul.f32 %v3194, %v3178
          %v3211 = vmul.f32 %v3195, %v3179
          %v3212 = vmul.f32 %v3196, %v3180
          %v3213 = vmul.f32 %v3197, %v3181
          %v3214 = vmul.f32 %v3198, %v3182
          %v3215 = vmul.f32 %v3199, %v3183
          %v3216 = vmul.f32 %v3200, %v3184
          %v3217 = vmul.f32 %v3201, %v3185
          %v3218 = vmul.f32 %v3202, %v3186
          %v3219 = vmul.f32 %v3203, %v3187
          %v3220 = vmul.f32 %v3204, %v3188
          %v3221 = vmul.f32 %v3205, %v3189
          %v3222 = vmul.f32 %v3206, %v3190
          %v3223 = vmul.f32 %v3207, %v3191
          %v3224 = vlaneseq
          %v3225 = vshrl.u32 %v3224, 7
          %v3226 = vsub.s32 0, %v3225
          %v3227 = vrot.slane %v2995, %v3226
          %v3228 = vadd.f32 %v3208, %v3227
          %v3229 = vadd.f32 %v3209, %v3227
          %v3230 = vadd.f32 %v3210, %v3227
          %v3231 = vadd.f32 %v3211, %v3227
          %v3232 = vadd.f32 %v3212, %v3227
          %v3233 = vadd.f32 %v3213, %v3227
          %v3234 = vadd.f32 %v3214, %v3227
          %v3235 = vadd.f32 %v3215, %v3227
          %v3236 = vadd.f32 %v3216, %v3227
          %v3237 = vadd.f32 %v3217, %v3227
          %v3238 = vadd.f32 %v3218, %v3227
          %v3239 = vadd.f32 %v3219, %v3227
          %v3240 = vadd.f32 %v3220, %v3227
          %v3241 = vadd.f32 %v3221, %v3227
          %v3242 = vadd.f32 %v3222, %v3227
          %v3243 = vadd.f32 %v3223, %v3227
          %v3244 = vadd.f32 %v2707, %v3228
          %v3245 = vadd.f32 %v2708, %v3229
          %v3246 = vadd.f32 %v2709, %v3230
          %v3247 = vadd.f32 %v2710, %v3231
          %v3248 = vadd.f32 %v2711, %v3232
          %v3249 = vadd.f32 %v2712, %v3233
          %v3250 = vadd.f32 %v2713, %v3234
          %v3251 = vadd.f32 %v2714, %v3235
          %v3252 = vadd.f32 %v2715, %v3236
          %v3253 = vadd.f32 %v2716, %v3237
          %v3254 = vadd.f32 %v2717, %v3238
          %v3255 = vadd.f32 %v2718, %v3239
          %v3256 = vadd.f32 %v2719, %v3240
          %v3257 = vadd.f32 %v2720, %v3241
          %v3258 = vadd.f32 %v2721, %v3242
          %v3259 = vadd.f32 %v2722, %v3243
          %v3260 = vpack.c.bf16 %v3229, %v3228
          %v3261 = vpack.c.bf16 %v3231, %v3230
          %v3262 = vpack.c.bf16 %v3233, %v3232
          %v3263 = vpack.c.bf16 %v3235, %v3234
          %v3264 = vpack.c.bf16 %v3237, %v3236
          %v3265 = vpack.c.bf16 %v3239, %v3238
          %v3266 = vpack.c.bf16 %v3241, %v3240
          %v3267 = vpack.c.bf16 %v3243, %v3242
          %s3268 = scalar_lea.vmem [#allocation8], 192
          %v3269 = vld [vmem:[%s3268] sm:$0xf]
          %v3270 = vld [vmem:[%s3268 + $0x4] sm:$0xf]
          %v3271 = vld [vmem:[%s3268 + $0x8] sm:$0xf]
          %v3272 = vld [vmem:[%s3268 + $0xc] sm:$0xf]
          %v3273 = vld [vmem:[%s3268 + $0x10] sm:$0xf]
          %v3274 = vld [vmem:[%s3268 + $0x14] sm:$0xf]
          %v3275 = vld [vmem:[%s3268 + $0x18] sm:$0xf]
          %v3276 = vld [vmem:[%s3268 + $0x1c] sm:$0xf]
          %v3277 = vld [vmem:[%s3268 + $0x20] sm:$0xf]
          %v3278 = vld [vmem:[%s3268 + $0x24] sm:$0xf]
          %v3279 = vld [vmem:[%s3268 + $0x28] sm:$0xf]
          %v3280 = vld [vmem:[%s3268 + $0x2c] sm:$0xf]
          %v3281 = vld [vmem:[%s3268 + $0x30] sm:$0xf]
          %v3282 = vld [vmem:[%s3268 + $0x34] sm:$0xf]
          %v3283 = vld [vmem:[%s3268 + $0x38] sm:$0xf]
          %v3284 = vld [vmem:[%s3268 + $0x3c] sm:$0xf]
          %v3285 = vld [vmem:[#allocation9 + $0x4] sm:$0x1]
          %v3286 = vlaneseq
          %v3287 = vshrl.u32 %v3286, 7
          %v3288 = vsub.s32 0, %v3287
          %v3289 = vrot.slane %v3285, %v3288
          %v3306 = vunpack.c.l.b16 %v3269
          %v3307 = vunpack.c.l.b16 %v3270
          %v3308 = vunpack.c.l.b16 %v3271
          %v3309 = vunpack.c.l.b16 %v3272
          %v3310 = vunpack.c.l.b16 %v3273
          %v3311 = vunpack.c.l.b16 %v3274
          %v3312 = vunpack.c.l.b16 %v3275
          %v3313 = vunpack.c.l.b16 %v3276
          %v3314 = vunpack.c.l.b16 %v3277
          %v3315 = vunpack.c.l.b16 %v3278
          %v3316 = vunpack.c.l.b16 %v3279
          %v3317 = vunpack.c.l.b16 %v3280
          %v3318 = vunpack.c.l.b16 %v3281
          %v3319 = vunpack.c.l.b16 %v3282
          %v3320 = vunpack.c.l.b16 %v3283
          %v3321 = vunpack.c.l.b16 %v3284
          %v3322 = vpack.c.b16 %v3307, %v3306
          %v3323 = vpack.c.b16 %v3309, %v3308
          %v3324 = vpack.c.b16 %v3311, %v3310
          %v3325 = vpack.c.b16 %v3313, %v3312
          %v3326 = vpack.c.b16 %v3315, %v3314
          %v3327 = vpack.c.b16 %v3317, %v3316
          %v3328 = vpack.c.b16 %v3319, %v3318
          %v3329 = vpack.c.b16 %v3321, %v3320
          %3338 = vmatprep.subr.bf16.mxu0 0
          %3339 = vmatpush1.bf16.msra.mxu0 %v3322
          %3340 = vmatprep.subr.bf16.mxu0 0
          %3341 = vmatpush1.bf16.msra.mxu0 %v3323
          %3342 = vmatprep.subr.bf16.mxu0 0
          %3343 = vmatpush1.bf16.msra.mxu0 %v3324
          %3344 = vmatprep.subr.bf16.mxu0 0
          %3345 = vmatpush1.bf16.msra.mxu0 %v3325
          %3346 = vmatprep.subr.bf16.mxu0 0
          %3347 = vmatpush1.bf16.msra.mxu0 %v3326
          %3348 = vmatprep.subr.bf16.mxu0 0
          %3349 = vmatpush1.bf16.msra.mxu0 %v3327
          %3350 = vmatprep.subr.bf16.mxu0 0
          %3351 = vmatpush1.bf16.msra.mxu0 %v3328
          %3352 = vmatprep.subr.bf16.mxu0 0
          %3353 = vmatpush1.bf16.msra.mxu0 %v3329
          %3354 = vmatprep.subr.bf16.mxu0 0
          %3355 = vmatpush1.bf16.msra.mxu0 0
          %3356 = vmatprep.subr.bf16.mxu0 0
          %3357 = vmatpush1.bf16.msra.mxu0 0
          %3358 = vmatprep.subr.bf16.mxu0 0
          %3359 = vmatpush1.bf16.msra.mxu0 0
          %3360 = vmatprep.subr.bf16.mxu0 0
          %3361 = vmatpush1.bf16.msra.mxu0 0
          %3362 = vmatprep.subr.bf16.mxu0 0
          %3363 = vmatpush1.bf16.msra.mxu0 0
          %3364 = vmatprep.subr.bf16.mxu0 0
          %3365 = vmatpush1.bf16.msra.mxu0 0
          %3366 = vmatprep.subr.bf16.mxu0 0
          %3367 = vmatpush1.bf16.msra.mxu0 0
          %3368 = vmatprep.subr.bf16.mxu0 0
          %3369 = vmatpush1.bf16.msra.mxu0 0
          %3370 = vmatprep.mubr.bf16.mxu0 0
          %3371 = vmatmul.mubr.bf16.gmra.mrb[0].mxu0 %v3260
          %v3372 = vpop.f32.mrb[0].mxu0
          %v3373 = vadd.f32 %v3289, %v3372
          %v3374 = vpop.f32.mrb[0].mxu0
          %v3375 = vpop.f32.mrb[0].mxu0
          %v3376 = vadd.f32 %v3289, %v3375
          %v3377 = vpop.f32.mrb[0].mxu0
          %3378 = vmatprep.mubr.bf16.mxu0 0
          %3379 = vmatmul.mubr.bf16.gmra.mrb[0].mxu0 %v3261
          %v3380 = vpop.f32.mrb[0].mxu0
          %v3381 = vadd.f32 %v3289, %v3380
          %v3382 = vpop.f32.mrb[0].mxu0
          %v3383 = vpop.f32.mrb[0].mxu0
          %v3384 = vadd.f32 %v3289, %v3383
          %v3385 = vpop.f32.mrb[0].mxu0
          %3386 = vmatprep.mubr.bf16.mxu0 0
          %3387 = vmatmul.mubr.bf16.gmra.mrb[0].mxu0 %v3262
          %v3388 = vpop.f32.mrb[0].mxu0
          %v3389 = vadd.f32 %v3289, %v3388
          %v3390 = vpop.f32.mrb[0].mxu0
          %v3391 = vpop.f32.mrb[0].mxu0
          %v3392 = vadd.f32 %v3289, %v3391
          %v3393 = vpop.f32.mrb[0].mxu0
          %3394 = vmatprep.mubr.bf16.mxu0 0
          %3395 = vmatmul.mubr.bf16.gmra.mrb[0].mxu0 %v3263
          %v3396 = vpop.f32.mrb[0].mxu0
          %v3397 = vadd.f32 %v3289, %v3396
          %v3398 = vpop.f32.mrb[0].mxu0
          %v3399 = vpop.f32.mrb[0].mxu0
          %v3400 = vadd.f32 %v3289, %v3399
          %v3401 = vpop.f32.mrb[0].mxu0
          %3402 = vmatprep.mubr.bf16.mxu0 0
          %3403 = vmatmul.mubr.bf16.gmra.mrb[0].mxu0 %v3264
          %v3404 = vpop.f32.mrb[0].mxu0
          %v3405 = vadd.f32 %v3289, %v3404
          %v3406 = vpop.f32.mrb[0].mxu0
          %v3407 = vpop.f32.mrb[0].mxu0
          %v3408 = vadd.f32 %v3289, %v3407
          %v3409 = vpop.f32.mrb[0].mxu0
          %3410 = vmatprep.mubr.bf16.mxu0 0
          %3411 = vmatmul.mubr.bf16.gmra.mrb[0].mxu0 %v3265
          %v3412 = vpop.f32.mrb[0].mxu0
          %v3413 = vadd.f32 %v3289, %v3412
          %v3414 = vpop.f32.mrb[0].mxu0
          %v3415 = vpop.f32.mrb[0].mxu0
          %v3416 = vadd.f32 %v3289, %v3415
          %v3417 = vpop.f32.mrb[0].mxu0
          %3418 = vmatprep.mubr.bf16.mxu0 0
          %3419 = vmatmul.mubr.bf16.gmra.mrb[0].mxu0 %v3266
          %v3420 = vpop.f32.mrb[0].mxu0
          %v3421 = vadd.f32 %v3289, %v3420
          %v3422 = vpop.f32.mrb[0].mxu0
          %v3423 = vpop.f32.mrb[0].mxu0
          %v3424 = vadd.f32 %v3289, %v3423
          %v3425 = vpop.f32.mrb[0].mxu0
          %3426 = vmatprep.mubr.bf16.mxu0 0
          %3427 = vmatmul.mubr.bf16.gmra.mrb[0].mxu0 %v3267
          %v3428 = vpop.f32.mrb[0].mxu0
          %v3429 = vadd.f32 %v3289, %v3428
          %v3430 = vpop.f32.mrb[0].mxu0
          %v3431 = vpop.f32.mrb[0].mxu0
          %v3432 = vadd.f32 %v3289, %v3431
          %v3433 = vpop.f32.mrb[0].mxu0
          %3434 = vdwg.mxu0
          %v3435 = vadd.f32 %v3373, %v3244
          %v3436 = vadd.f32 %v3376, %v3245
          %v3437 = vadd.f32 %v3381, %v3246
          %v3438 = vadd.f32 %v3384, %v3247
          %v3439 = vadd.f32 %v3389, %v3248
          %v3440 = vadd.f32 %v3392, %v3249
          %v3441 = vadd.f32 %v3397, %v3250
          %v3442 = vadd.f32 %v3400, %v3251
          %v3443 = vadd.f32 %v3405, %v3252
          %v3444 = vadd.f32 %v3408, %v3253
          %v3445 = vadd.f32 %v3413, %v3254
          %v3446 = vadd.f32 %v3416, %v3255
          %v3447 = vadd.f32 %v3421, %v3256
          %v3448 = vadd.f32 %v3424, %v3257
          %v3449 = vadd.f32 %v3429, %v3258
          %v3450 = vadd.f32 %v3432, %v3259
          %v3451 = vmul.f32 %v3435, 0.5
          %v3452 = vmul.f32 %v3436, 0.5
          %v3453 = vmul.f32 %v3437, 0.5
          %v3454 = vmul.f32 %v3438, 0.5
          %v3455 = vmul.f32 %v3439, 0.5
          %v3456 = vmul.f32 %v3440, 0.5
          %v3457 = vmul.f32 %v3441, 0.5
          %v3458 = vmul.f32 %v3442, 0.5
          %v3459 = vmul.f32 %v3443, 0.5
          %v3460 = vmul.f32 %v3444, 0.5
          %v3461 = vmul.f32 %v3445, 0.5
          %v3462 = vmul.f32 %v3446, 0.5
          %v3463 = vmul.f32 %v3447, 0.5
          %v3464 = vmul.f32 %v3448, 0.5
          %v3465 = vmul.f32 %v3449, 0.5
          %v3466 = vmul.f32 %v3450, 0.5
          %v3467 = vtanh.pop %v3451
          %v3468 = vtanh.pop %v3452
          %v3469 = vtanh.pop %v3453
          %v3470 = vtanh.pop %v3454
          %v3471 = vtanh.pop %v3455
          %v3472 = vtanh.pop %v3456
          %v3473 = vtanh.pop %v3457
          %v3474 = vtanh.pop %v3458
          %v3475 = vtanh.pop %v3459
          %v3476 = vtanh.pop %v3460
          %v3477 = vtanh.pop %v3461
          %v3478 = vtanh.pop %v3462
          %v3479 = vtanh.pop %v3463
          %v3480 = vtanh.pop %v3464
          %v3481 = vtanh.pop %v3465
          %v3482 = vtanh.pop %v3466
          %v3483 = vadd.f32 %v3467, 1.0
          %v3484 = vadd.f32 %v3468, 1.0
          %v3485 = vadd.f32 %v3469, 1.0
          %v3486 = vadd.f32 %v3470, 1.0
          %v3487 = vadd.f32 %v3471, 1.0
          %v3488 = vadd.f32 %v3472, 1.0
          %v3489 = vadd.f32 %v3473, 1.0
          %v3490 = vadd.f32 %v3474, 1.0
          %v3491 = vadd.f32 %v3475, 1.0
          %v3492 = vadd.f32 %v3476, 1.0
          %v3493 = vadd.f32 %v3477, 1.0
          %v3494 = vadd.f32 %v3478, 1.0
          %v3495 = vadd.f32 %v3479, 1.0
          %v3496 = vadd.f32 %v3480, 1.0
          %v3497 = vadd.f32 %v3481, 1.0
          %v3498 = vadd.f32 %v3482, 1.0
          %v3499 = vmul.f32 %v3483, 0.5
          %v3500 = vmul.f32 %v3484, 0.5
          %v3501 = vmul.f32 %v3485, 0.5
          %v3502 = vmul.f32 %v3486, 0.5
          %v3503 = vmul.f32 %v3487, 0.5
          %v3504 = vmul.f32 %v3488, 0.5
          %v3505 = vmul.f32 %v3489, 0.5
          %v3506 = vmul.f32 %v3490, 0.5
          %v3507 = vmul.f32 %v3491, 0.5
          %v3508 = vmul.f32 %v3492, 0.5
          %v3509 = vmul.f32 %v3493, 0.5
          %v3510 = vmul.f32 %v3494, 0.5
          %v3511 = vmul.f32 %v3495, 0.5
          %v3512 = vmul.f32 %v3496, 0.5
          %v3513 = vmul.f32 %v3497, 0.5
          %v3514 = vmul.f32 %v3498, 0.5
          %v3515 = vmul.f32 %v3435, %v3499
          %v3516 = vmul.f32 %v3436, %v3500
          %v3517 = vmul.f32 %v3437, %v3501
          %v3518 = vmul.f32 %v3438, %v3502
          %v3519 = vmul.f32 %v3439, %v3503
          %v3520 = vmul.f32 %v3440, %v3504
          %v3521 = vmul.f32 %v3441, %v3505
          %v3522 = vmul.f32 %v3442, %v3506
          %v3523 = vmul.f32 %v3443, %v3507
          %v3524 = vmul.f32 %v3444, %v3508
          %v3525 = vmul.f32 %v3445, %v3509
          %v3526 = vmul.f32 %v3446, %v3510
          %v3527 = vmul.f32 %v3447, %v3511
          %v3528 = vmul.f32 %v3448, %v3512
          %v3529 = vmul.f32 %v3449, %v3513
          %v3530 = vmul.f32 %v3450, %v3514
          %v3531 = vld [vmem:[#allocation9 + $0x9] sm:$0x1]
          %v3532 = vld [vmem:[#allocation9 + $0xe] sm:$0x1]
          %3533 = vadd.xlane.f32.xlu0 %v3515
          %v3534 = vpop.xlane.xlu0 %3533
          %3535 = vadd.xlane.f32.xlu0 %v3516
          %v3536 = vpop.xlane.xlu0 %3535
          %3537 = vadd.xlane.f32.xlu0 %v3517
          %v3538 = vpop.xlane.xlu0 %3537
          %3539 = vadd.xlane.f32.xlu0 %v3518
          %v3540 = vpop.xlane.xlu0 %3539
          %3541 = vadd.xlane.f32.xlu0 %v3519
          %v3542 = vpop.xlane.xlu0 %3541
          %3543 = vadd.xlane.f32.xlu0 %v3520
          %v3544 = vpop.xlane.xlu0 %3543
          %3545 = vadd.xlane.f32.xlu0 %v3521
          %v3546 = vpop.xlane.xlu0 %3545
          %3547 = vadd.xlane.f32.xlu0 %v3522
          %v3548 = vpop.xlane.xlu0 %3547
          %3549 = vadd.xlane.f32.xlu0 %v3523
          %v3550 = vpop.xlane.xlu0 %3549
          %3551 = vadd.xlane.f32.xlu0 %v3524
          %v3552 = vpop.xlane.xlu0 %3551
          %3553 = vadd.xlane.f32.xlu0 %v3525
          %v3554 = vpop.xlane.xlu0 %3553
          %3555 = vadd.xlane.f32.xlu0 %v3526
          %v3556 = vpop.xlane.xlu0 %3555
          %3557 = vadd.xlane.f32.xlu0 %v3527
          %v3558 = vpop.xlane.xlu0 %3557
          %3559 = vadd.xlane.f32.xlu0 %v3528
          %v3560 = vpop.xlane.xlu0 %3559
          %3561 = vadd.xlane.f32.xlu0 %v3529
          %v3562 = vpop.xlane.xlu0 %3561
          %3563 = vadd.xlane.f32.xlu0 %v3530
          %v3564 = vpop.xlane.xlu0 %3563
          %v3565 = vmul.f32 %v3515, %v3515
          %v3566 = vmul.f32 %v3516, %v3516
          %v3567 = vmul.f32 %v3517, %v3517
          %v3568 = vmul.f32 %v3518, %v3518
          %v3569 = vmul.f32 %v3519, %v3519
          %v3570 = vmul.f32 %v3520, %v3520
          %v3571 = vmul.f32 %v3521, %v3521
          %v3572 = vmul.f32 %v3522, %v3522
          %v3573 = vmul.f32 %v3523, %v3523
          %v3574 = vmul.f32 %v3524, %v3524
          %v3575 = vmul.f32 %v3525, %v3525
          %v3576 = vmul.f32 %v3526, %v3526
          %v3577 = vmul.f32 %v3527, %v3527
          %v3578 = vmul.f32 %v3528, %v3528
          %v3579 = vmul.f32 %v3529, %v3529
          %v3580 = vmul.f32 %v3530, %v3530
          %3581 = vadd.xlane.f32.xlu0 %v3565
          %v3582 = vpop.xlane.xlu0 %3581
          %3583 = vadd.xlane.f32.xlu0 %v3566
          %v3584 = vpop.xlane.xlu0 %3583
          %3585 = vadd.xlane.f32.xlu0 %v3567
          %v3586 = vpop.xlane.xlu0 %3585
          %3587 = vadd.xlane.f32.xlu0 %v3568
          %v3588 = vpop.xlane.xlu0 %3587
          %3589 = vadd.xlane.f32.xlu0 %v3569
          %v3590 = vpop.xlane.xlu0 %3589
          %3591 = vadd.xlane.f32.xlu0 %v3570
          %v3592 = vpop.xlane.xlu0 %3591
          %3593 = vadd.xlane.f32.xlu0 %v3571
          %v3594 = vpop.xlane.xlu0 %3593
          %3595 = vadd.xlane.f32.xlu0 %v3572
          %v3596 = vpop.xlane.xlu0 %3595
          %3597 = vadd.xlane.f32.xlu0 %v3573
          %v3598 = vpop.xlane.xlu0 %3597
          %3599 = vadd.xlane.f32.xlu0 %v3574
          %v3600 = vpop.xlane.xlu0 %3599
          %3601 = vadd.xlane.f32.xlu0 %v3575
          %v3602 = vpop.xlane.xlu0 %3601
          %3603 = vadd.xlane.f32.xlu0 %v3576
          %v3604 = vpop.xlane.xlu0 %3603
          %3605 = vadd.xlane.f32.xlu0 %v3577
          %v3606 = vpop.xlane.xlu0 %3605
          %3607 = vadd.xlane.f32.xlu0 %v3578
          %v3608 = vpop.xlane.xlu0 %3607
          %3609 = vadd.xlane.f32.xlu0 %v3579
          %v3610 = vpop.xlane.xlu0 %3609
          %3611 = vadd.xlane.f32.xlu0 %v3580
          %v3612 = vpop.xlane.xlu0 %3611
          %v3613 = vmul.f32 %v3534, 0.0078125
          %v3614 = vmul.f32 %v3536, 0.0078125
          %v3615 = vmul.f32 %v3538, 0.0078125
          %v3616 = vmul.f32 %v3540, 0.0078125
          %v3617 = vmul.f32 %v3542, 0.0078125
          %v3618 = vmul.f32 %v3544, 0.0078125
          %v3619 = vmul.f32 %v3546, 0.0078125
          %v3620 = vmul.f32 %v3548, 0.0078125
          %v3621 = vmul.f32 %v3550, 0.0078125
          %v3622 = vmul.f32 %v3552, 0.0078125
          %v3623 = vmul.f32 %v3554, 0.0078125
          %v3624 = vmul.f32 %v3556, 0.0078125
          %v3625 = vmul.f32 %v3558, 0.0078125
          %v3626 = vmul.f32 %v3560, 0.0078125
          %v3627 = vmul.f32 %v3562, 0.0078125
          %v3628 = vmul.f32 %v3564, 0.0078125
          %v3629 = vmul.f32 %v3582, 0.0078125
          %v3630 = vmul.f32 %v3584, 0.0078125
          %v3631 = vmul.f32 %v3586, 0.0078125
          %v3632 = vmul.f32 %v3588, 0.0078125
          %v3633 = vmul.f32 %v3590, 0.0078125
          %v3634 = vmul.f32 %v3592, 0.0078125
          %v3635 = vmul.f32 %v3594, 0.0078125
          %v3636 = vmul.f32 %v3596, 0.0078125
          %v3637 = vmul.f32 %v3598, 0.0078125
          %v3638 = vmul.f32 %v3600, 0.0078125
          %v3639 = vmul.f32 %v3602, 0.0078125
          %v3640 = vmul.f32 %v3604, 0.0078125
          %v3641 = vmul.f32 %v3606, 0.0078125
          %v3642 = vmul.f32 %v3608, 0.0078125
          %v3643 = vmul.f32 %v3610, 0.0078125
          %v3644 = vmul.f32 %v3612, 0.0078125
          %v3645 = vmul.f32 %v3613, %v3613
          %v3646 = vmul.f32 %v3614, %v3614
          %v3647 = vmul.f32 %v3615, %v3615
          %v3648 = vmul.f32 %v3616, %v3616
          %v3649 = vmul.f32 %v3617, %v3617
          %v3650 = vmul.f32 %v3618, %v3618
          %v3651 = vmul.f32 %v3619, %v3619
          %v3652 = vmul.f32 %v3620, %v3620
          %v3653 = vmul.f32 %v3621, %v3621
          %v3654 = vmul.f32 %v3622, %v3622
          %v3655 = vmul.f32 %v3623, %v3623
          %v3656 = vmul.f32 %v3624, %v3624
          %v3657 = vmul.f32 %v3625, %v3625
          %v3658 = vmul.f32 %v3626, %v3626
          %v3659 = vmul.f32 %v3627, %v3627
          %v3660 = vmul.f32 %v3628, %v3628
          %v3661 = vsub.f32 %v3629, %v3645
          %v3662 = vsub.f32 %v3630, %v3646
          %v3663 = vsub.f32 %v3631, %v3647
          %v3664 = vsub.f32 %v3632, %v3648
          %v3665 = vsub.f32 %v3633, %v3649
          %v3666 = vsub.f32 %v3634, %v3650
          %v3667 = vsub.f32 %v3635, %v3651
          %v3668 = vsub.f32 %v3636, %v3652
          %v3669 = vsub.f32 %v3637, %v3653
          %v3670 = vsub.f32 %v3638, %v3654
          %v3671 = vsub.f32 %v3639, %v3655
          %v3672 = vsub.f32 %v3640, %v3656
          %v3673 = vsub.f32 %v3641, %v3657
          %v3674 = vsub.f32 %v3642, %v3658
          %v3675 = vsub.f32 %v3643, %v3659
          %v3676 = vsub.f32 %v3644, %v3660
          %v3677 = vadd.f32 %v3661, 0.1
          %v3678 = vadd.f32 %v3662, 0.1
          %v3679 = vadd.f32 %v3663, 0.1
          %v3680 = vadd.f32 %v3664, 0.1
          %v3681 = vadd.f32 %v3665, 0.1
          %v3682 = vadd.f32 %v3666, 0.1
          %v3683 = vadd.f32 %v3667, 0.1
          %v3684 = vadd.f32 %v3668, 0.1
          %v3685 = vadd.f32 %v3669, 0.1
          %v3686 = vadd.f32 %v3670, 0.1
          %v3687 = vadd.f32 %v3671, 0.1
          %v3688 = vadd.f32 %v3672, 0.1
          %v3689 = vadd.f32 %v3673, 0.1
          %v3690 = vadd.f32 %v3674, 0.1
          %v3691 = vadd.f32 %v3675, 0.1
          %v3692 = vadd.f32 %v3676, 0.1
          %v3693 = vrsqrt.pop %v3677
          %v3694 = vrsqrt.pop %v3678
          %v3695 = vrsqrt.pop %v3679
          %v3696 = vrsqrt.pop %v3680
          %v3697 = vrsqrt.pop %v3681
          %v3698 = vrsqrt.pop %v3682
          %v3699 = vrsqrt.pop %v3683
          %v3700 = vrsqrt.pop %v3684
          %v3701 = vrsqrt.pop %v3685
          %v3702 = vrsqrt.pop %v3686
          %v3703 = vrsqrt.pop %v3687
          %v3704 = vrsqrt.pop %v3688
          %v3705 = vrsqrt.pop %v3689
          %v3706 = vrsqrt.pop %v3690
          %v3707 = vrsqrt.pop %v3691
          %v3708 = vrsqrt.pop %v3692
          %v3709 = vlaneseq
          %v3710 = vshrl.u32 %v3709, 7
          %v3711 = vsub.s32 0, %v3710
          %v3712 = vrot.slane %v3531, %v3711
          %v3713 = vmul.f32 %v3712, %v3693
          %v3714 = vmul.f32 %v3712, %v3694
          %v3715 = vmul.f32 %v3712, %v3695
          %v3716 = vmul.f32 %v3712, %v3696
          %v3717 = vmul.f32 %v3712, %v3697
          %v3718 = vmul.f32 %v3712, %v3698
          %v3719 = vmul.f32 %v3712, %v3699
          %v3720 = vmul.f32 %v3712, %v3700
          %v3721 = vmul.f32 %v3712, %v3701
          %v3722 = vmul.f32 %v3712, %v3702
          %v3723 = vmul.f32 %v3712, %v3703
          %v3724 = vmul.f32 %v3712, %v3704
          %v3725 = vmul.f32 %v3712, %v3705
          %v3726 = vmul.f32 %v3712, %v3706
          %v3727 = vmul.f32 %v3712, %v3707
          %v3728 = vmul.f32 %v3712, %v3708
          %v3729 = vsub.f32 %v3515, %v3613
          %v3730 = vsub.f32 %v3516, %v3614
          %v3731 = vsub.f32 %v3517, %v3615
          %v3732 = vsub.f32 %v3518, %v3616
          %v3733 = vsub.f32 %v3519, %v3617
          %v3734 = vsub.f32 %v3520, %v3618
          %v3735 = vsub.f32 %v3521, %v3619
          %v3736 = vsub.f32 %v3522, %v3620
          %v3737 = vsub.f32 %v3523, %v3621
          %v3738 = vsub.f32 %v3524, %v3622
          %v3739 = vsub.f32 %v3525, %v3623
          %v3740 = vsub.f32 %v3526, %v3624
          %v3741 = vsub.f32 %v3527, %v3625
          %v3742 = vsub.f32 %v3528, %v3626
          %v3743 = vsub.f32 %v3529, %v3627
          %v3744 = vsub.f32 %v3530, %v3628
          %v3745 = vmul.f32 %v3729, %v3713
          %v3746 = vmul.f32 %v3730, %v3714
          %v3747 = vmul.f32 %v3731, %v3715
          %v3748 = vmul.f32 %v3732, %v3716
          %v3749 = vmul.f32 %v3733, %v3717
          %v3750 = vmul.f32 %v3734, %v3718
          %v3751 = vmul.f32 %v3735, %v3719
          %v3752 = vmul.f32 %v3736, %v3720
          %v3753 = vmul.f32 %v3737, %v3721
          %v3754 = vmul.f32 %v3738, %v3722
          %v3755 = vmul.f32 %v3739, %v3723
          %v3756 = vmul.f32 %v3740, %v3724
          %v3757 = vmul.f32 %v3741, %v3725
          %v3758 = vmul.f32 %v3742, %v3726
          %v3759 = vmul.f32 %v3743, %v3727
          %v3760 = vmul.f32 %v3744, %v3728
          %v3761 = vlaneseq
          %v3762 = vshrl.u32 %v3761, 7
          %v3763 = vsub.s32 0, %v3762
          %v3764 = vrot.slane %v3532, %v3763
          %v3765 = vadd.f32 %v3745, %v3764
          %v3766 = vadd.f32 %v3746, %v3764
          %v3767 = vadd.f32 %v3747, %v3764
          %v3768 = vadd.f32 %v3748, %v3764
          %v3769 = vadd.f32 %v3749, %v3764
          %v3770 = vadd.f32 %v3750, %v3764
          %v3771 = vadd.f32 %v3751, %v3764
          %v3772 = vadd.f32 %v3752, %v3764
          %v3773 = vadd.f32 %v3753, %v3764
          %v3774 = vadd.f32 %v3754, %v3764
          %v3775 = vadd.f32 %v3755, %v3764
          %v3776 = vadd.f32 %v3756, %v3764
          %v3777 = vadd.f32 %v3757, %v3764
          %v3778 = vadd.f32 %v3758, %v3764
          %v3779 = vadd.f32 %v3759, %v3764
          %v3780 = vadd.f32 %v3760, %v3764
          %v3781 = vpack.c.bf16 %v3766, %v3765
          %v3782 = vpack.c.bf16 %v3768, %v3767
          %v3783 = vpack.c.bf16 %v3770, %v3769
          %v3784 = vpack.c.bf16 %v3772, %v3771
          %v3785 = vpack.c.bf16 %v3774, %v3773
          %v3786 = vpack.c.bf16 %v3776, %v3775
          %v3787 = vpack.c.bf16 %v3778, %v3777
          %v3788 = vpack.c.bf16 %v3780, %v3779
          %v3789 = vld [vmem:[#allocation11] sm:$0xf]
          %v3790 = vld [vmem:[#allocation11 + $0x4] sm:$0xf]
          %v3791 = vld [vmem:[#allocation11 + $0x8] sm:$0xf]
          %v3792 = vld [vmem:[#allocation11 + $0xc] sm:$0xf]
          %v3793 = vld [vmem:[#allocation11 + $0x10] sm:$0xf]
          %v3794 = vld [vmem:[#allocation11 + $0x14] sm:$0xf]
          %v3795 = vld [vmem:[#allocation11 + $0x18] sm:$0xf]
          %v3796 = vld [vmem:[#allocation11 + $0x1c] sm:$0xf]
          %v3797 = vld [vmem:[#allocation11 + $0x20] sm:$0xf]
          %v3798 = vld [vmem:[#allocation11 + $0x24] sm:$0xf]
          %v3799 = vld [vmem:[#allocation11 + $0x28] sm:$0xf]
          %v3800 = vld [vmem:[#allocation11 + $0x2c] sm:$0xf]
          %v3801 = vld [vmem:[#allocation11 + $0x30] sm:$0xf]
          %v3802 = vld [vmem:[#allocation11 + $0x34] sm:$0xf]
          %v3803 = vld [vmem:[#allocation11 + $0x38] sm:$0xf]
          %v3804 = vld [vmem:[#allocation11 + $0x3c] sm:$0xf]
          %v3805 = vld [vmem:[%s5] sm:$0x1]
          %v3807 = vlaneseq
          %v3808 = vshrl.u32 %v3807, 7
          %v3809 = vsub.s32 0, %v3808
          %v3810 = vrot.slane %v3805, %v3809
          %v3828 = vunpack.c.l.b16 %v3789
          %v3829 = vunpack.c.l.b16 %v3790
          %v3830 = vunpack.c.l.b16 %v3791
          %v3831 = vunpack.c.l.b16 %v3792
          %v3832 = vunpack.c.l.b16 %v3793
          %v3833 = vunpack.c.l.b16 %v3794
          %v3834 = vunpack.c.l.b16 %v3795
          %v3835 = vunpack.c.l.b16 %v3796
          %v3836 = vunpack.c.l.b16 %v3797
          %v3837 = vunpack.c.l.b16 %v3798
          %v3838 = vunpack.c.l.b16 %v3799
          %v3839 = vunpack.c.l.b16 %v3800
          %v3840 = vunpack.c.l.b16 %v3801
          %v3841 = vunpack.c.l.b16 %v3802
          %v3842 = vunpack.c.l.b16 %v3803
          %v3843 = vunpack.c.l.b16 %v3804
          %v3844 = vpack.c.b16 %v3829, %v3828
          %v3845 = vpack.c.b16 %v3831, %v3830
          %v3846 = vpack.c.b16 %v3833, %v3832
          %v3847 = vpack.c.b16 %v3835, %v3834
          %v3848 = vpack.c.b16 %v3837, %v3836
          %v3849 = vpack.c.b16 %v3839, %v3838
          %v3850 = vpack.c.b16 %v3841, %v3840
          %v3851 = vpack.c.b16 %v3843, %v3842
          %3860 = vmatprep.subr.bf16.mxu0 0
          %3861 = vmatpush1.bf16.msra.mxu0 %v3844
          %3862 = vmatprep.subr.bf16.mxu0 0
          %3863 = vmatpush1.bf16.msra.mxu0 %v3845
          %3864 = vmatprep.subr.bf16.mxu0 0
          %3865 = vmatpush1.bf16.msra.mxu0 %v3846
          %3866 = vmatprep.subr.bf16.mxu0 0
          %3867 = vmatpush1.bf16.msra.mxu0 %v3847
          %3868 = vmatprep.subr.bf16.mxu0 0
          %3869 = vmatpush1.bf16.msra.mxu0 %v3848
          %3870 = vmatprep.subr.bf16.mxu0 0
          %3871 = vmatpush1.bf16.msra.mxu0 %v3849
          %3872 = vmatprep.subr.bf16.mxu0 0
          %3873 = vmatpush1.bf16.msra.mxu0 %v3850
          %3874 = vmatprep.subr.bf16.mxu0 0
          %3875 = vmatpush1.bf16.msra.mxu0 %v3851
          %3876 = vmatprep.subr.bf16.mxu0 0
          %3877 = vmatpush1.bf16.msra.mxu0 0
          %3878 = vmatprep.subr.bf16.mxu0 0
          %3879 = vmatpush1.bf16.msra.mxu0 0
          %3880 = vmatprep.subr.bf16.mxu0 0
          %3881 = vmatpush1.bf16.msra.mxu0 0
          %3882 = vmatprep.subr.bf16.mxu0 0
          %3883 = vmatpush1.bf16.msra.mxu0 0
          %3884 = vmatprep.subr.bf16.mxu0 0
          %3885 = vmatpush1.bf16.msra.mxu0 0
          %3886 = vmatprep.subr.bf16.mxu0 0
          %3887 = vmatpush1.bf16.msra.mxu0 0
          %3888 = vmatprep.subr.bf16.mxu0 0
          %3889 = vmatpush1.bf16.msra.mxu0 0
          %3890 = vmatprep.subr.bf16.mxu0 0
          %3891 = vmatpush1.bf16.msra.mxu0 0
          %3892 = vmatprep.mubr.bf16.mxu0 0
          %3893 = vmatmul.mubr.bf16.gmra.mrb[0].mxu0 %v3781
          %v3894 = vpop.f32.mrb[0].mxu0
          %v3895 = vadd.f32 %v3810, %v3894
          %v3896 = vpop.f32.mrb[0].mxu0
          %v3897 = vpop.f32.mrb[0].mxu0
          %v3898 = vadd.f32 %v3810, %v3897
          %v3899 = vpop.f32.mrb[0].mxu0
          %3900 = vmatprep.mubr.bf16.mxu0 0
          %3901 = vmatmul.mubr.bf16.gmra.mrb[0].mxu0 %v3782
          %v3902 = vpop.f32.mrb[0].mxu0
          %v3903 = vadd.f32 %v3810, %v3902
          %v3904 = vpop.f32.mrb[0].mxu0
          %v3905 = vpop.f32.mrb[0].mxu0
          %v3906 = vadd.f32 %v3810, %v3905
          %v3907 = vpop.f32.mrb[0].mxu0
          %3908 = vmatprep.mubr.bf16.mxu0 0
          %3909 = vmatmul.mubr.bf16.gmra.mrb[0].mxu0 %v3783
          %v3910 = vpop.f32.mrb[0].mxu0
          %v3911 = vadd.f32 %v3810, %v3910
          %v3912 = vpop.f32.mrb[0].mxu0
          %v3913 = vpop.f32.mrb[0].mxu0
          %v3914 = vadd.f32 %v3810, %v3913
          %v3915 = vpop.f32.mrb[0].mxu0
          %3916 = vmatprep.mubr.bf16.mxu0 0
          %3917 = vmatmul.mubr.bf16.gmra.mrb[0].mxu0 %v3784
          %v3918 = vpop.f32.mrb[0].mxu0
          %v3919 = vadd.f32 %v3810, %v3918
          %v3920 = vpop.f32.mrb[0].mxu0
          %v3921 = vpop.f32.mrb[0].mxu0
          %v3922 = vadd.f32 %v3810, %v3921
          %v3923 = vpop.f32.mrb[0].mxu0
          %3924 = vmatprep.mubr.bf16.mxu0 0
          %3925 = vmatmul.mubr.bf16.gmra.mrb[0].mxu0 %v3785
          %v3926 = vpop.f32.mrb[0].mxu0
          %v3927 = vadd.f32 %v3810, %v3926
          %v3928 = vpop.f32.mrb[0].mxu0
          %v3929 = vpop.f32.mrb[0].mxu0
          %v3930 = vadd.f32 %v3810, %v3929
          %v3931 = vpop.f32.mrb[0].mxu0
          %3932 = vmatprep.mubr.bf16.mxu0 0
          %3933 = vmatmul.mubr.bf16.gmra.mrb[0].mxu0 %v3786
          %v3934 = vpop.f32.mrb[0].mxu0
          %v3935 = vadd.f32 %v3810, %v3934
          %v3936 = vpop.f32.mrb[0].mxu0
          %v3937 = vpop.f32.mrb[0].mxu0
          %v3938 = vadd.f32 %v3810, %v3937
          %v3939 = vpop.f32.mrb[0].mxu0
          %3940 = vmatprep.mubr.bf16.mxu0 0
          %3941 = vmatmul.mubr.bf16.gmra.mrb[0].mxu0 %v3787
          %v3942 = vpop.f32.mrb[0].mxu0
          %v3943 = vadd.f32 %v3810, %v3942
          %v3944 = vpop.f32.mrb[0].mxu0
          %v3945 = vpop.f32.mrb[0].mxu0
          %v3946 = vadd.f32 %v3810, %v3945
          %v3947 = vpop.f32.mrb[0].mxu0
          %3948 = vmatprep.mubr.bf16.mxu0 0
          %3949 = vmatmul.mubr.bf16.gmra.mrb[0].mxu0 %v3788
          %v3950 = vpop.f32.mrb[0].mxu0
          %v3951 = vadd.f32 %v3810, %v3950
          %v3952 = vpop.f32.mrb[0].mxu0
          %v3953 = vpop.f32.mrb[0].mxu0
          %v3954 = vadd.f32 %v3810, %v3953
          %v3955 = vpop.f32.mrb[0].mxu0
          %3956 = vdwg.mxu0
          %3957 = vst [vmem:[%s374] sm:$0xff] %v3895
          %3958 = vst [vmem:[%s374 + $0x8] sm:$0xff] %v3898
          %3959 = vst [vmem:[%s374 + $0x10] sm:$0xff] %v3903
          %3960 = vst [vmem:[%s374 + $0x18] sm:$0xff] %v3906
          %3961 = vst [vmem:[%s374 + $0x20] sm:$0xff] %v3911
          %3962 = vst [vmem:[%s374 + $0x28] sm:$0xff] %v3914
          %3963 = vst [vmem:[%s374 + $0x30] sm:$0xff] %v3919
          %3964 = vst [vmem:[%s374 + $0x38] sm:$0xff] %v3922
          %3965 = vst [vmem:[%s374 + $0x40] sm:$0xff] %v3927
          %3966 = vst [vmem:[%s374 + $0x48] sm:$0xff] %v3930
          %3967 = vst [vmem:[%s374 + $0x50] sm:$0xff] %v3935
          %3968 = vst [vmem:[%s374 + $0x58] sm:$0xff] %v3938
          %3969 = vst [vmem:[%s374 + $0x60] sm:$0xff] %v3943
          %3970 = vst [vmem:[%s374 + $0x68] sm:$0xff] %v3946
          %3971 = vst [vmem:[%s374 + $0x70] sm:$0xff] %v3951
          %3972 = vst [vmem:[%s374 + $0x78] sm:$0xff] %v3954
        $region72: #{encoder_forward.1} parent=43 // pred_fallthru
          _
        %s3973 = smul.u32 16, %s28
        %p3974 = scmp.lt.s32.totalorder %s3973, 31
        %s3975 = scalar_select %p3974, %s3973, 31
        %s3976 = smul.addr %s3975, 8
        %s3977 = scalar_lea.vmem %s6, %s3976
        // Predicated region
        $region73: #{encoder_forward.1} parent=43 // pred_check
          %p3978 = pneg %p192
        $region74: #{encoder_forward.1} parent=43 // pred_check_branch
          %3980 = sbr.rel (%p3978) target = $region76
        $region75: #{encoder_forward.1} parent=43 // pred_region
          %s3981 = smul.u32 16, %s28
        $region76: #{encoder_forward.1} parent=43 // pred_fallthru
          _
      $region44: #{encoder_forward.1} parent=5 // pred_fallthru
        _
      %p3982 = scmp.le.s32.totalorder 2, %s19
      // Predicated region
      $region77: #{encoder_forward.1} parent=5 // pred_check
        %p3983 = pneg %p3982
      $region78: #{encoder_forward.1} parent=5 // pred_check_branch
        %3985 = sbr.rel (%p3983) target = $region80
      $region79: #{encoder_forward.1} parent=5 // pred_region
        %s3986 = ssub.s32 %s19, 2
        // Predicated region
        $region81: #{encoder_forward.1} parent=79 // pred_check
          %p3987 = pneg %p198
        $region82: #{encoder_forward.1} parent=79 // pred_check_branch
          %3989 = sbr.rel (%p3987) target = $region84
        $region83: #{encoder_forward.1} parent=79 // pred_region
          %s3990 = smul.u32 16, %s30
          %p3991 = scmp.lt.s32.totalorder %s3990, 31
          %s3992 = scalar_select %p3991, %s3990, 31
          %s3993 = smul.addr %s3992, 8
          %s3994 = scalar_lea.vmem %s6, %s3993
        $region84: #{encoder_forward.1} parent=79 // pred_fallthru
          _
      $region80: #{encoder_forward.1} parent=5 // pred_fallthru
        _
    $region6: #{encoder_forward.1} parent=1 // loop_footer
      %s23 = sadd.s32 1, %s19
    $region7: #{encoder_forward.1} parent=1 // loop_footer_branch
      %18 = sbr.rel target = $region3
    $region8: #{encoder_forward.1} parent=1 // loop_exit
      _
    %3995 = vsyncpa [#allocation5], 1
    %s3996 = scalar_lea.sflag [#allocation5], 1
    %3997 = vsyncpa %s3996, 1
    %3998 = vsyncpa [#allocation7], 1
    %s3999 = scalar_lea.sflag [#allocation7], 1
    %4000 = vsyncpa %s3999, 1
    %4001 = vsyncpa [#allocation10], 1

</llo_original>
